<compile_context>
chip_gen: v7x
topology: tpu7x:2x2x1
jax: 0.10.0
libtpu: 0.0.40
codegen_flags: <defaults>
</compile_context>

<pallas_src>
import functools

import jax
import jax.numpy as jnp
from jax.experimental import pallas as pl
from jax.experimental.pallas import tpu as pltpu

BN_EPS = 1e-5


def _unet_block_kernel(up_ref, x_ref, wu_ref, wx_ref, bias_ref, gb_ref,
                       out_ref, act_ref, sum_ref, ssq_ref, scale_ref, shift_ref,
                       *, inv_count, eps):
    phase = pl.program_id(0)       # 0: conv + ReLU + stats, 1: BN apply
    i = pl.program_id(1)           # row-tile index
    n_tiles = pl.num_programs(1)
    _, tm, cx = x_ref.shape        # static block dims
    ch = wx_ref.shape[1]

    @pl.when(phase == 0)
    def _conv_relu_stats():
        @pl.when(i == 0)
        def _init():
            sum_ref[...] = jnp.zeros_like(sum_ref)
            ssq_ref[...] = jnp.zeros_like(ssq_ref)

        up = up_ref[...]                               # (tm, Cup)
        bias = bias_ref[...]                           # (1, n_out) = [bt | bx]

        # 1x1 conv: shared weight across the four sub-positions -> one matmul.
        # (4, tm, Cx) -> (4*tm, Cx) is a free sublane merge (tm % 8 == 0).
        x_all = x_ref[...].reshape(4 * tm, cx)
        xc = jnp.dot(x_all, wx_ref[...],
                     preferred_element_type=jnp.float32).reshape(4, tm, ch)

        s = jnp.zeros_like(sum_ref)
        q = jnp.zeros_like(ssq_ref)
        for k in range(4):                             # static 2x2 sub-positions
            tr_k = jnp.dot(up, wu_ref[k], preferred_element_type=jnp.float32)
            a = jnp.concatenate([tr_k, xc[k]], axis=1) + bias
            a = jnp.maximum(a, 0.0)
            act_ref[i, k, :, :] = a                    # VMEM-resident activation
            s = s + jnp.sum(a, axis=0, keepdims=True)
            q = q + jnp.sum(a * a, axis=0, keepdims=True)
        sum_ref[...] += s
        ssq_ref[...] += q

        # Finalize training-mode BN statistics once, on the last row tile, so
        # the BN-apply phase below is uniform and branch-free.
        @pl.when(i == n_tiles - 1)
        def _finalize_stats():
            mean = sum_ref[...] * inv_count
            var = ssq_ref[...] * inv_count - mean * mean   # f32 accumulators
            inv = jax.lax.rsqrt(var + eps)
            scale_ref[...] = gb_ref[0:1, :] * inv
            shift_ref[...] = gb_ref[1:2, :] - mean * scale_ref[...]

    @pl.when(phase == 1)
    def _bn_apply():
        scale = scale_ref[...].reshape(1, 1, -1)
        shift = shift_ref[...].reshape(1, 1, -1)
        out_ref[...] = act_ref[i] * scale + shift      # single load/fma/store


def _pick_tile_rows(m, tm_max):
    """Largest multiple of 8 that divides m and is <= tm_max (0 if none)."""
    best, t = 0, 8
    while t <= min(tm_max, m):
        if m % t == 0:
            best = t
        t += 8
    return best


def unet_block_forward(up_p, x_p, params, tm_max=512):
    wt, bt = params["wt"], params["bt"]     # ConvTranspose2d: (Cup, ch, 2, 2), (ch,)
    wx, bx = params["wx"], params["bx"]     # Conv2d 1x1:      (ch, Cx, 1, 1), (ch,)
    gamma, beta = params["gamma"], params["beta"]

    N, Cup, H, W = up_p.shape
    Nx, Cx, H2, W2 = x_p.shape
    assert Nx == N and H2 == 2 * H and W2 == 2 * W
    ch = wt.shape[1]
    n_out = 2 * ch
    M = N * H * W

    tm = _pick_tile_rows(M, tm_max)
    assert tm > 0, "N*H*W needs a multiple-of-8 divisor <= tm_max"
    # TODO(synk): mask a ragged last tile instead of requiring tm | M.

    act_bytes = 4 * M * n_out * 4
    if act_bytes > 40 * 2 ** 20:
        # TODO(synk): spill the activation to HBM (two-pass variant) when it
        # exceeds the VMEM budget.
        raise NotImplementedError("activation too large to keep VMEM-resident")

    f32 = jnp.float32
    # ---- glue: repack inputs / weights into the row layout ----
    up_flat = jnp.transpose(up_p, (0, 2, 3, 1)).reshape(M, Cup).astype(f32)
    x_sub = (jnp.transpose(x_p, (0, 2, 3, 1))
             .reshape(N, H, 2, W, 2, Cx)
             .transpose(2, 4, 0, 1, 3, 5)
             .reshape(4, M, Cx).astype(f32))
    # TODO(synk): fold the NCHW <-> row-layout transposes (here and on the
    # output) into BlockSpec index_maps to save the XLA-side HBM passes.
    wu4 = jnp.transpose(wt, (2, 3, 0, 1)).reshape(4, Cup, ch).astype(f32)  # k-major
    wx2 = jnp.transpose(wx.reshape(ch, Cx), (1, 0)).astype(f32)            # (Cx, ch)
    bias = jnp.concatenate([bt, bx]).reshape(1, n_out).astype(f32)
    gb = jnp.stack([gamma, beta]).astype(f32)                              # (2, n_out)

    n_tiles = M // tm
    grid = (2, n_tiles)

    # explicit VMEM budget: double-buffered row tiles + single-copy-ish weights
    # + resident activation scratch (generous 2x margin, 8 MiB floor).
    est = 4 * (2 * (tm * Cup + 4 * tm * Cx + 4 * tm * n_out)
               + 2 * (4 * Cup * ch + Cx * ch + 3 * n_out)
               + 4 * M * n_out + 4 * 8 * 128)
    vmem_limit = int(min(max(2 * est, 8 * 2 ** 20), 100 * 2 ** 20))

    kernel = functools.partial(_unet_block_kernel,
                               inv_count=1.0 / float(4 * M), eps=BN_EPS)

    out3 = pl.pallas_call(
        kernel,
        out_shape=jax.ShapeDtypeStruct((4, M, n_out), f32),
        grid_spec=pltpu.PrefetchScalarGridSpec(
            num_scalar_prefetch=0, grid=grid,
            in_specs=[
                # row-tiled inputs: stream in phase 0, park on block 0 in phase 1
                pl.BlockSpec((tm, Cup), lambda p, i: (i * (1 - p), 0)),
                pl.BlockSpec((4, tm, Cx), lambda p, i: (0, i * (1 - p), 0)),
                # weights / bias / bn params: constant blocks, fetched once
                pl.BlockSpec((4, Cup, ch), lambda p, i: (0, 0, 0)),
                pl.BlockSpec((Cx, ch), lambda p, i: (0, 0)),
                pl.BlockSpec((1, n_out), lambda p, i: (0, 0)),
                pl.BlockSpec((2, n_out), lambda p, i: (0, 0)),
            ],
            # output only advances during phase 1 -> single HBM write per tile
            out_specs=pl.BlockSpec((4, tm, n_out), lambda p, i: (0, i * p, 0)),
            scratch_shapes=[
                pltpu.VMEM((n_tiles, 4, tm, n_out), f32),  # resident activation
                pltpu.VMEM((1, n_out), f32),               # sum
                pltpu.VMEM((1, n_out), f32),               # sum of squares
                pltpu.VMEM((1, n_out), f32),               # BN scale
                pltpu.VMEM((1, n_out), f32),               # BN shift
            ]),
        compiler_params=pltpu.CompilerParams(
            dimension_semantics=("arbitrary", "arbitrary"),
            vmem_limit_bytes=vmem_limit),
    )(up_flat, x_sub, wu4, wx2, bias, gb)

    # ---- glue: unpack (k, m, c) back to NCHW ----
    out = (out3.reshape(2, 2, N, H, W, n_out)
           .transpose(2, 5, 3, 0, 4, 1)
           .reshape(N, n_out, 2 * H, 2 * W))
    return out


def unet_block_reference(up_p, x_p, params):
    """Pure-JAX reference reproducing the PyTorch forward (training-mode BN)."""
    wt, bt, wx, bx = params["wt"], params["bt"], params["wx"], params["bx"]
    gamma, beta = params["gamma"], params["beta"]
    N, Cup, H, W = up_p.shape
    ch = wt.shape[1]
    up = jnp.einsum("nchw,coab->nohawb", up_p, wt).reshape(N, ch, 2 * H, 2 * W)
    up = up + bt[None, :, None, None]
    xo = jnp.einsum("nchw,oc->nohw", x_p, wx.reshape(ch, -1)) + bx[None, :, None, None]
    cat = jnp.concatenate([up, xo], axis=1)
    act = jnp.maximum(cat, 0.0)
    mean = jnp.mean(act, axis=(0, 2, 3), keepdims=True)
    var = jnp.var(act, axis=(0, 2, 3), keepdims=True)
    norm = (act - mean) * jax.lax.rsqrt(var + BN_EPS)
    return norm * gamma[None, :, None, None] + beta[None, :, None, None]


if __name__ == "__main__":
    key = jax.random.PRNGKey(0)
    ks = jax.random.split(key, 8)
    N, H, W = 2, 8, 8
    up_in, x_in, n_out = 8, 4, 8
    ch = n_out // 2

    up_p = jax.random.normal(ks[0], (N, up_in, H, W), jnp.float32)
    x_p = jax.random.normal(ks[1], (N, x_in, 2 * H, 2 * W), jnp.float32)

    params = dict(
        wt=0.1 * jax.random.normal(ks[2], (up_in, ch, 2, 2), jnp.float32),
        bt=0.1 * jax.random.normal(ks[3], (ch,), jnp.float32),
        wx=0.1 * jax.random.normal(ks[4], (ch, x_in, 1, 1), jnp.float32),
        bx=0.1 * jax.random.normal(ks[5], (ch,), jnp.float32),
        gamma=1.0 + 0.1 * jax.random.normal(ks[6], (n_out,), jnp.float32),
        beta=0.1 * jax.random.normal(ks[7], (n_out,), jnp.float32),
    )

    ref = unet_block_reference(up_p, x_p, params)

    # exercise both the single-tile grid (tm = M) and a multi-tile grid
    for tmx in (512, 32):
        out = jax.block_until_ready(unet_block_forward(up_p, x_p, params, tm_max=tmx))
        assert out.shape == (N, n_out, 2 * H, 2 * W)
        err = float(jnp.max(jnp.abs(out - ref)))
        assert jnp.allclose(out, ref, atol=1e-4, rtol=1e-4), \
            f"tm_max={tmx} max err {err}"

    print("KERNEL_OK")
</pallas_src>

<mosaic_0001>
module attributes {stable_mosaic.version = 11 : i64} {
  func.func @_unet_block_kernel(%arg0: i32, %arg1: i32, %arg2: memref<128x8xf32, #tpu.memory_space<vmem>>, %arg3: memref<4x128x4xf32, #tpu.memory_space<vmem>>, %arg4: memref<4x8x4xf32, #tpu.memory_space<vmem>>, %arg5: memref<4x4xf32, #tpu.memory_space<vmem>>, %arg6: memref<1x8xf32, #tpu.memory_space<vmem>>, %arg7: memref<2x8xf32, #tpu.memory_space<vmem>>, %arg8: memref<4x128x8xf32, #tpu.memory_space<vmem>>, %arg9: memref<1x4x128x8xf32, #tpu.memory_space<vmem>>, %arg10: memref<1x8xf32, #tpu.memory_space<vmem>>, %arg11: memref<1x8xf32, #tpu.memory_space<vmem>>, %arg12: memref<1x8xf32, #tpu.memory_space<vmem>>, %arg13: memref<1x8xf32, #tpu.memory_space<vmem>>) attributes {dimension_semantics = [#tpu.dimension_semantics<arbitrary>, #tpu.dimension_semantics<arbitrary>], iteration_bounds = array<i64: 2, 1>, scalar_prefetch = 0 : i64, scratch_operands = 5 : i64, tpu.core_type = #tpu.core_type<tc>, window_params = [{transform_indices = @transform_0, window_bounds = array<i64: 128, 8>}, {transform_indices = @transform_1, window_bounds = array<i64: 4, 128, 4>}, {pipeline_mode = #tpu.pipeline_mode<synchronous>, transform_indices = @transform_2, window_bounds = array<i64: 4, 8, 4>}, {pipeline_mode = #tpu.pipeline_mode<synchronous>, transform_indices = @transform_3, window_bounds = array<i64: 4, 4>}, {pipeline_mode = #tpu.pipeline_mode<synchronous>, transform_indices = @transform_4, window_bounds = array<i64: 1, 8>}, {pipeline_mode = #tpu.pipeline_mode<synchronous>, transform_indices = @transform_5, window_bounds = array<i64: 2, 8>}, {transform_indices = @transform_6, window_bounds = array<i64: 4, 128, 8>}]} {
    %c0_i32 = arith.constant 0 : i32
    %0 = arith.cmpi eq, %arg0, %c0_i32 : i32
    %1 = arith.extui %0 : i1 to i32
    %c0_i32_0 = arith.constant 0 : i32
    %2 = arith.cmpi ne, %1, %c0_i32_0 : i32
    scf.if %2 {
      %c0_i32_2 = arith.constant 0 : i32
      %6 = arith.cmpi eq, %arg1, %c0_i32_2 : i32
      %7 = arith.extui %6 : i1 to i32
      %c0_i32_3 = arith.constant 0 : i32
      %8 = arith.cmpi ne, %7, %c0_i32_3 : i32
      scf.if %8 {
        %cst_61 = arith.constant 0.000000e+00 : f32
        %111 = vector.broadcast %cst_61 : f32 to vector<1x8xf32>
        %c0_62 = arith.constant 0 : index
        %c0_63 = arith.constant 0 : index
        %112 = vector.load %arg10[%c0_62, %c0_63] : memref<1x8xf32, #tpu.memory_space<vmem>>, vector<1x8xf32>
        tpu.vector_store %arg10[%c0_62, %c0_63], %111 {strides = array<i32>} : memref<1x8xf32, #tpu.memory_space<vmem>>, vector<1x8xf32>,
        %cst_64 = arith.constant 0.000000e+00 : f32
        %113 = vector.broadcast %cst_64 : f32 to vector<1x8xf32>
        %c0_65 = arith.constant 0 : index
        %c0_66 = arith.constant 0 : index
        %114 = vector.load %arg11[%c0_65, %c0_66] : memref<1x8xf32, #tpu.memory_space<vmem>>, vector<1x8xf32>
        tpu.vector_store %arg11[%c0_65, %c0_66], %113 {strides = array<i32>} : memref<1x8xf32, #tpu.memory_space<vmem>>, vector<1x8xf32>,
      } else {
      }
      %c0 = arith.constant 0 : index
      %c0_4 = arith.constant 0 : index
      %9 = vector.load %arg2[%c0, %c0_4] : memref<128x8xf32, #tpu.memory_space<vmem>>, vector<128x8xf32>
      %c0_5 = arith.constant 0 : index
      %c0_6 = arith.constant 0 : index
      %10 = vector.load %arg6[%c0_5, %c0_6] : memref<1x8xf32, #tpu.memory_space<vmem>>, vector<1x8xf32>
      %c0_7 = arith.constant 0 : index
      %c0_8 = arith.constant 0 : index
      %c0_9 = arith.constant 0 : index
      %11 = vector.load %arg3[%c0_7, %c0_8, %c0_9] : memref<4x128x4xf32, #tpu.memory_space<vmem>>, vector<4x128x4xf32>
      %12 = vector.shape_cast %11 : vector<4x128x4xf32> to vector<512x4xf32>
      %c0_10 = arith.constant 0 : index
      %c0_11 = arith.constant 0 : index
      %13 = vector.load %arg5[%c0_10, %c0_11] : memref<4x4xf32, #tpu.memory_space<vmem>>, vector<4x4xf32>
      %cst = arith.constant dense<0.000000e+00> : vector<512x4xf32>
      %14 = tpu.matmul %12, %13, %cst {dimension_numbers = #tpu.dot_dimension_numbers<[1], [0], [0], [1], [0, 0, 1, 1], [], []>} : vector<512x4xf32>, vector<4x4xf32>, vector<512x4xf32> -> vector<512x4xf32>
      %15 = vector.shape_cast %14 : vector<512x4xf32> to vector<4x128x4xf32>
      %cst_12 = arith.constant 0.000000e+00 : f32
      %16 = vector.broadcast %cst_12 : f32 to vector<1x8xf32>
      %cst_13 = arith.constant 0.000000e+00 : f32
      %17 = vector.broadcast %cst_13 : f32 to vector<1x8xf32>
      %c0_14 = arith.constant 0 : index
      %c0_15 = arith.constant 0 : index
      %c0_16 = arith.constant 0 : index
      %18 = vector.load %arg4[%c0_14, %c0_15, %c0_16] : memref<4x8x4xf32, #tpu.memory_space<vmem>>, vector<1x8x4xf32>
      %19 = vector.shape_cast %18 : vector<1x8x4xf32> to vector<8x4xf32>
      %cst_17 = arith.constant dense<0.000000e+00> : vector<128x4xf32>
      %20 = tpu.matmul %9, %19, %cst_17 {dimension_numbers = #tpu.dot_dimension_numbers<[1], [0], [0], [1], [0, 0, 1, 1], [], []>} : vector<128x8xf32>, vector<8x4xf32>, vector<128x4xf32> -> vector<128x4xf32>
      %21 = vector.extract_strided_slice %15 {offsets = [0, 0, 0], sizes = [1, 128, 4], strides = [1, 1, 1]} : vector<4x128x4xf32> to vector<1x128x4xf32>
      %22 = vector.shape_cast %21 : vector<1x128x4xf32> to vector<128x4xf32>
      %23 = tpu.concatenate %20, %22 in 1 : vector<128x4xf32>, vector<128x4xf32> -> vector<128x8xf32>
      %24 = vector.broadcast %10 : vector<1x8xf32> to vector<128x8xf32>
      %25 = arith.addf %23, %24 : vector<128x8xf32>
      %cst_18 = arith.constant 0.000000e+00 : f32
      %26 = vector.broadcast %cst_18 : f32 to vector<128x8xf32>
      %27 = arith.maximumf %25, %26 : vector<128x8xf32>
      %28 = arith.index_cast %arg1 : i32 to index
      %c0_19 = arith.constant 0 : index
      %c0_20 = arith.constant 0 : index
      %c0_21 = arith.constant 0 : index
      %29 = vector.load %arg9[%28, %c0_19, %c0_20, %c0_21] : memref<1x4x128x8xf32, #tpu.memory_space<vmem>>, vector<1x1x128x8xf32>
      %30 = vector.shape_cast %29 : vector<1x1x128x8xf32> to vector<128x8xf32>
      %31 = vector.shape_cast %27 : vector<128x8xf32> to vector<1x1x128x8xf32>
      tpu.vector_store %arg9[%28, %c0_19, %c0_20, %c0_21], %31 {strides = array<i32>} : memref<1x4x128x8xf32, #tpu.memory_space<vmem>>, vector<1x1x128x8xf32>,
      %cst_22 = arith.constant dense<0.000000e+00> : vector<8xf32>
      %32 = vector.multi_reduction <add>, %27, %cst_22 [0] : vector<128x8xf32> to vector<8xf32>
      %33 = vector.shape_cast %32 : vector<8xf32> to vector<1x8xf32>
      %34 = arith.addf %16, %33 : vector<1x8xf32>
      %35 = arith.mulf %27, %27 : vector<128x8xf32>
      %cst_23 = arith.constant dense<0.000000e+00> : vector<8xf32>
      %36 = vector.multi_reduction <add>, %35, %cst_23 [0] : vector<128x8xf32> to vector<8xf32>
      %37 = vector.shape_cast %36 : vector<8xf32> to vector<1x8xf32>
      %38 = arith.addf %17, %37 : vector<1x8xf32>
      %c1 = arith.constant 1 : index
      %c0_24 = arith.constant 0 : index
      %c0_25 = arith.constant 0 : index
      %39 = vector.load %arg4[%c1, %c0_24, %c0_25] : memref<4x8x4xf32, #tpu.memory_space<vmem>>, vector<1x8x4xf32>
      %40 = vector.shape_cast %39 : vector<1x8x4xf32> to vector<8x4xf32>
      %cst_26 = arith.constant dense<0.000000e+00> : vector<128x4xf32>
      %41 = tpu.matmul %9, %40, %cst_26 {dimension_numbers = #tpu.dot_dimension_numbers<[1], [0], [0], [1], [0, 0, 1, 1], [], []>} : vector<128x8xf32>, vector<8x4xf32>, vector<128x4xf32> -> vector<128x4xf32>
      %42 = vector.extract_strided_slice %15 {offsets = [1, 0, 0], sizes = [1, 128, 4], strides = [1, 1, 1]} : vector<4x128x4xf32> to vector<1x128x4xf32>
      %43 = vector.shape_cast %42 : vector<1x128x4xf32> to vector<128x4xf32>
      %44 = tpu.concatenate %41, %43 in 1 : vector<128x4xf32>, vector<128x4xf32> -> vector<128x8xf32>
      %45 = vector.broadcast %10 : vector<1x8xf32> to vector<128x8xf32>
      %46 = arith.addf %44, %45 : vector<128x8xf32>
      %cst_27 = arith.constant 0.000000e+00 : f32
      %47 = vector.broadcast %cst_27 : f32 to vector<128x8xf32>
      %48 = arith.maximumf %46, %47 : vector<128x8xf32>
      %49 = arith.index_cast %arg1 : i32 to index
      %c1_28 = arith.constant 1 : index
      %c0_29 = arith.constant 0 : index
      %c0_30 = arith.constant 0 : index
      %50 = vector.load %arg9[%49, %c1_28, %c0_29, %c0_30] : memref<1x4x128x8xf32, #tpu.memory_space<vmem>>, vector<1x1x128x8xf32>
      %51 = vector.shape_cast %50 : vector<1x1x128x8xf32> to vector<128x8xf32>
      %52 = vector.shape_cast %48 : vector<128x8xf32> to vector<1x1x128x8xf32>
      tpu.vector_store %arg9[%49, %c1_28, %c0_29, %c0_30], %52 {strides = array<i32>} : memref<1x4x128x8xf32, #tpu.memory_space<vmem>>, vector<1x1x128x8xf32>,
      %cst_31 = arith.constant dense<0.000000e+00> : vector<8xf32>
      %53 = vector.multi_reduction <add>, %48, %cst_31 [0] : vector<128x8xf32> to vector<8xf32>
      %54 = vector.shape_cast %53 : vector<8xf32> to vector<1x8xf32>
      %55 = arith.addf %34, %54 : vector<1x8xf32>
      %56 = arith.mulf %48, %48 : vector<128x8xf32>
      %cst_32 = arith.constant dense<0.000000e+00> : vector<8xf32>
      %57 = vector.multi_reduction <add>, %56, %cst_32 [0] : vector<128x8xf32> to vector<8xf32>
      %58 = vector.shape_cast %57 : vector<8xf32> to vector<1x8xf32>
      %59 = arith.addf %38, %58 : vector<1x8xf32>
      %c2 = arith.constant 2 : index
      %c0_33 = arith.constant 0 : index
      %c0_34 = arith.constant 0 : index
      %60 = vector.load %arg4[%c2, %c0_33, %c0_34] : memref<4x8x4xf32, #tpu.memory_space<vmem>>, vector<1x8x4xf32>
      %61 = vector.shape_cast %60 : vector<1x8x4xf32> to vector<8x4xf32>
      %cst_35 = arith.constant dense<0.000000e+00> : vector<128x4xf32>
      %62 = tpu.matmul %9, %61, %cst_35 {dimension_numbers = #tpu.dot_dimension_numbers<[1], [0], [0], [1], [0, 0, 1, 1], [], []>} : vector<128x8xf32>, vector<8x4xf32>, vector<128x4xf32> -> vector<128x4xf32>
      %63 = vector.extract_strided_slice %15 {offsets = [2, 0, 0], sizes = [1, 128, 4], strides = [1, 1, 1]} : vector<4x128x4xf32> to vector<1x128x4xf32>
      %64 = vector.shape_cast %63 : vector<1x128x4xf32> to vector<128x4xf32>
      %65 = tpu.concatenate %62, %64 in 1 : vector<128x4xf32>, vector<128x4xf32> -> vector<128x8xf32>
      %66 = vector.broadcast %10 : vector<1x8xf32> to vector<128x8xf32>
      %67 = arith.addf %65, %66 : vector<128x8xf32>
      %cst_36 = arith.constant 0.000000e+00 : f32
      %68 = vector.broadcast %cst_36 : f32 to vector<128x8xf32>
      %69 = arith.maximumf %67, %68 : vector<128x8xf32>
      %70 = arith.index_cast %arg1 : i32 to index
      %c2_37 = arith.constant 2 : index
      %c0_38 = arith.constant 0 : index
      %c0_39 = arith.constant 0 : index
      %71 = vector.load %arg9[%70, %c2_37, %c0_38, %c0_39] : memref<1x4x128x8xf32, #tpu.memory_space<vmem>>, vector<1x1x128x8xf32>
      %72 = vector.shape_cast %71 : vector<1x1x128x8xf32> to vector<128x8xf32>
      %73 = vector.shape_cast %69 : vector<128x8xf32> to vector<1x1x128x8xf32>
      tpu.vector_store %arg9[%70, %c2_37, %c0_38, %c0_39], %73 {strides = array<i32>} : memref<1x4x128x8xf32, #tpu.memory_space<vmem>>, vector<1x1x128x8xf32>,
      %cst_40 = arith.constant dense<0.000000e+00> : vector<8xf32>
      %74 = vector.multi_reduction <add>, %69, %cst_40 [0] : vector<128x8xf32> to vector<8xf32>
      %75 = vector.shape_cast %74 : vector<8xf32> to vector<1x8xf32>
      %76 = arith.addf %55, %75 : vector<1x8xf32>
      %77 = arith.mulf %69, %69 : vector<128x8xf32>
      %cst_41 = arith.constant dense<0.000000e+00> : vector<8xf32>
      %78 = vector.multi_reduction <add>, %77, %cst_41 [0] : vector<128x8xf32> to vector<8xf32>
      %79 = vector.shape_cast %78 : vector<8xf32> to vector<1x8xf32>
      %80 = arith.addf %59, %79 : vector<1x8xf32>
      %c3 = arith.constant 3 : index
      %c0_42 = arith.constant 0 : index
      %c0_43 = arith.constant 0 : index
      %81 = vector.load %arg4[%c3, %c0_42, %c0_43] : memref<4x8x4xf32, #tpu.memory_space<vmem>>, vector<1x8x4xf32>
      %82 = vector.shape_cast %81 : vector<1x8x4xf32> to vector<8x4xf32>
      %cst_44 = arith.constant dense<0.000000e+00> : vector<128x4xf32>
      %83 = tpu.matmul %9, %82, %cst_44 {dimension_numbers = #tpu.dot_dimension_numbers<[1], [0], [0], [1], [0, 0, 1, 1], [], []>} : vector<128x8xf32>, vector<8x4xf32>, vector<128x4xf32> -> vector<128x4xf32>
      %84 = vector.extract_strided_slice %15 {offsets = [3, 0, 0], sizes = [1, 128, 4], strides = [1, 1, 1]} : vector<4x128x4xf32> to vector<1x128x4xf32>
      %85 = vector.shape_cast %84 : vector<1x128x4xf32> to vector<128x4xf32>
      %86 = tpu.concatenate %83, %85 in 1 : vector<128x4xf32>, vector<128x4xf32> -> vector<128x8xf32>
      %87 = vector.broadcast %10 : vector<1x8xf32> to vector<128x8xf32>
      %88 = arith.addf %86, %87 : vector<128x8xf32>
      %cst_45 = arith.constant 0.000000e+00 : f32
      %89 = vector.broadcast %cst_45 : f32 to vector<128x8xf32>
      %90 = arith.maximumf %88, %89 : vector<128x8xf32>
      %91 = arith.index_cast %arg1 : i32 to index
      %c3_46 = arith.constant 3 : index
      %c0_47 = arith.constant 0 : index
      %c0_48 = arith.constant 0 : index
      %92 = vector.load %arg9[%91, %c3_46, %c0_47, %c0_48] : memref<1x4x128x8xf32, #tpu.memory_space<vmem>>, vector<1x1x128x8xf32>
      %93 = vector.shape_cast %92 : vector<1x1x128x8xf32> to vector<128x8xf32>
      %94 = vector.shape_cast %90 : vector<128x8xf32> to vector<1x1x128x8xf32>
      tpu.vector_store %arg9[%91, %c3_46, %c0_47, %c0_48], %94 {strides = array<i32>} : memref<1x4x128x8xf32, #tpu.memory_space<vmem>>, vector<1x1x128x8xf32>,
      %cst_49 = arith.constant dense<0.000000e+00> : vector<8xf32>
      %95 = vector.multi_reduction <add>, %90, %cst_49 [0] : vector<128x8xf32> to vector<8xf32>
      %96 = vector.shape_cast %95 : vector<8xf32> to vector<1x8xf32>
      %97 = arith.addf %76, %96 : vector<1x8xf32>
      %98 = arith.mulf %90, %90 : vector<128x8xf32>
      %cst_50 = arith.constant dense<0.000000e+00> : vector<8xf32>
      %99 = vector.multi_reduction <add>, %98, %cst_50 [0] : vector<128x8xf32> to vector<8xf32>
      %100 = vector.shape_cast %99 : vector<8xf32> to vector<1x8xf32>
      %101 = arith.addf %80, %100 : vector<1x8xf32>
      %c0_51 = arith.constant 0 : index
      %c0_52 = arith.constant 0 : index
      %102 = vector.load %arg10[%c0_51, %c0_52] : memref<1x8xf32, #tpu.memory_space<vmem>>, vector<1x8xf32>
      %103 = arith.addf %102, %97 : vector<1x8xf32>
      %c0_53 = arith.constant 0 : index
      %c0_54 = arith.constant 0 : index
      %104 = vector.load %arg10[%c0_53, %c0_54] : memref<1x8xf32, #tpu.memory_space<vmem>>, vector<1x8xf32>
      tpu.vector_store %arg10[%c0_53, %c0_54], %103 {strides = array<i32>} : memref<1x8xf32, #tpu.memory_space<vmem>>, vector<1x8xf32>,
      %c0_55 = arith.constant 0 : index
      %c0_56 = arith.constant 0 : index
      %105 = vector.load %arg11[%c0_55, %c0_56] : memref<1x8xf32, #tpu.memory_space<vmem>>, vector<1x8xf32>
      %106 = arith.addf %105, %101 : vector<1x8xf32>
      %c0_57 = arith.constant 0 : index
      %c0_58 = arith.constant 0 : index
      %107 = vector.load %arg11[%c0_57, %c0_58] : memref<1x8xf32, #tpu.memory_space<vmem>>, vector<1x8xf32>
      tpu.vector_store %arg11[%c0_57, %c0_58], %106 {strides = array<i32>} : memref<1x8xf32, #tpu.memory_space<vmem>>, vector<1x8xf32>,
      %c0_i32_59 = arith.constant 0 : i32
      %108 = arith.cmpi eq, %arg1, %c0_i32_59 : i32
      %109 = arith.extui %108 : i1 to i32
      %c0_i32_60 = arith.constant 0 : i32
      %110 = arith.cmpi ne, %109, %c0_i32_60 : i32
      scf.if %110 {
        %c0_61 = arith.constant 0 : index
        %c0_62 = arith.constant 0 : index
        %111 = vector.load %arg10[%c0_61, %c0_62] : memref<1x8xf32, #tpu.memory_space<vmem>>, vector<1x8xf32>
        %cst_63 = arith.constant 0.001953125 : f32
        %112 = vector.broadcast %cst_63 : f32 to vector<1x8xf32>
        %113 = arith.mulf %111, %112 : vector<1x8xf32>
        %c0_64 = arith.constant 0 : index
        %c0_65 = arith.constant 0 : index
        %114 = vector.load %arg11[%c0_64, %c0_65] : memref<1x8xf32, #tpu.memory_space<vmem>>, vector<1x8xf32>
        %cst_66 = arith.constant 0.001953125 : f32
        %115 = vector.broadcast %cst_66 : f32 to vector<1x8xf32>
        %116 = arith.mulf %114, %115 : vector<1x8xf32>
        %117 = arith.mulf %113, %113 : vector<1x8xf32>
        %118 = arith.subf %116, %117 : vector<1x8xf32>
        %cst_67 = arith.constant 9.99999974E-6 : f32
        %119 = vector.broadcast %cst_67 : f32 to vector<1x8xf32>
        %120 = arith.addf %118, %119 : vector<1x8xf32>
        %121 = math.rsqrt %120 : vector<1x8xf32>
        %c0_68 = arith.constant 0 : index
        %c0_69 = arith.constant 0 : index
        %122 = vector.load %arg7[%c0_68, %c0_69] : memref<2x8xf32, #tpu.memory_space<vmem>>, vector<1x8xf32>
        %123 = arith.mulf %122, %121 : vector<1x8xf32>
        %c0_70 = arith.constant 0 : index
        %c0_71 = arith.constant 0 : index
        %124 = vector.load %arg12[%c0_70, %c0_71] : memref<1x8xf32, #tpu.memory_space<vmem>>, vector<1x8xf32>
        tpu.vector_store %arg12[%c0_70, %c0_71], %123 {strides = array<i32>} : memref<1x8xf32, #tpu.memory_space<vmem>>, vector<1x8xf32>,
        %c1_72 = arith.constant 1 : index
        %c0_73 = arith.constant 0 : index
        %125 = vector.load %arg7[%c1_72, %c0_73] : memref<2x8xf32, #tpu.memory_space<vmem>>, vector<1x8xf32>
        %c0_74 = arith.constant 0 : index
        %c0_75 = arith.constant 0 : index
        %126 = vector.load %arg12[%c0_74, %c0_75] : memref<1x8xf32, #tpu.memory_space<vmem>>, vector<1x8xf32>
        %127 = arith.mulf %113, %126 : vector<1x8xf32>
        %128 = arith.subf %125, %127 : vector<1x8xf32>
        %c0_76 = arith.constant 0 : index
        %c0_77 = arith.constant 0 : index
        %129 = vector.load %arg13[%c0_76, %c0_77] : memref<1x8xf32, #tpu.memory_space<vmem>>, vector<1x8xf32>
        tpu.vector_store %arg13[%c0_76, %c0_77], %128 {strides = array<i32>} : memref<1x8xf32, #tpu.memory_space<vmem>>, vector<1x8xf32>,
      } else {
      }
    } else {
    }
    %c1_i32 = arith.constant 1 : i32
    %3 = arith.cmpi eq, %arg0, %c1_i32 : i32
    %4 = arith.extui %3 : i1 to i32
    %c0_i32_1 = arith.constant 0 : i32
    %5 = arith.cmpi ne, %4, %c0_i32_1 : i32
    scf.if %5 {
      %c0 = arith.constant 0 : index
      %c0_2 = arith.constant 0 : index
      %6 = vector.load %arg12[%c0, %c0_2] : memref<1x8xf32, #tpu.memory_space<vmem>>, vector<1x8xf32>
      %7 = vector.shape_cast %6 : vector<1x8xf32> to vector<1x1x8xf32>
      %c0_3 = arith.constant 0 : index
      %c0_4 = arith.constant 0 : index
      %8 = vector.load %arg13[%c0_3, %c0_4] : memref<1x8xf32, #tpu.memory_space<vmem>>, vector<1x8xf32>
      %9 = vector.shape_cast %8 : vector<1x8xf32> to vector<1x1x8xf32>
      %10 = arith.index_cast %arg1 : i32 to index
      %c0_5 = arith.constant 0 : index
      %c0_6 = arith.constant 0 : index
      %c0_7 = arith.constant 0 : index
      %11 = vector.load %arg9[%10, %c0_5, %c0_6, %c0_7] : memref<1x4x128x8xf32, #tpu.memory_space<vmem>>, vector<1x4x128x8xf32>
      %12 = vector.shape_cast %11 : vector<1x4x128x8xf32> to vector<4x128x8xf32>
      %13 = vector.broadcast %7 : vector<1x1x8xf32> to vector<4x128x8xf32>
      %14 = arith.mulf %12, %13 : vector<4x128x8xf32>
      %15 = vector.broadcast %9 : vector<1x1x8xf32> to vector<4x128x8xf32>
      %16 = arith.addf %14, %15 : vector<4x128x8xf32>
      %c0_8 = arith.constant 0 : index
      %c0_9 = arith.constant 0 : index
      %c0_10 = arith.constant 0 : index
      %17 = vector.load %arg8[%c0_8, %c0_9, %c0_10] : memref<4x128x8xf32, #tpu.memory_space<vmem>>, vector<4x128x8xf32>
      tpu.vector_store %arg8[%c0_8, %c0_9, %c0_10], %16 {strides = array<i32>} : memref<4x128x8xf32, #tpu.memory_space<vmem>>, vector<4x128x8xf32>,
    } else {
    }
    return
  }
  func.func @transform_0(%arg0: i32, %arg1: i32) -> (i32, i32) {
    %c1_i32 = arith.constant 1 : i32
    %0 = arith.subi %c1_i32, %arg0 : i32
    %1 = arith.muli %arg1, %0 : i32
    %c0_i32 = arith.constant 0 : i32
    %c0_i32_0 = arith.constant 0 : i32
    return %1, %c0_i32 : i32, i32
  }
  func.func @transform_1(%arg0: i32, %arg1: i32) -> (i32, i32, i32) {
    %c1_i32 = arith.constant 1 : i32
    %0 = arith.subi %c1_i32, %arg0 : i32
    %1 = arith.muli %arg1, %0 : i32
    %c0_i32 = arith.constant 0 : i32
    %c0_i32_0 = arith.constant 0 : i32
    %c0_i32_1 = arith.constant 0 : i32
    return %c0_i32, %1, %c0_i32_0 : i32, i32, i32
  }
  func.func @transform_2(%arg0: i32, %arg1: i32) -> (i32, i32, i32) {
    %c0_i32 = arith.constant 0 : i32
    %c0_i32_0 = arith.constant 0 : i32
    %c0_i32_1 = arith.constant 0 : i32
    %c0_i32_2 = arith.constant 0 : i32
    return %c0_i32, %c0_i32_0, %c0_i32_1 : i32, i32, i32
  }
  func.func @transform_3(%arg0: i32, %arg1: i32) -> (i32, i32) {
    %c0_i32 = arith.constant 0 : i32
    %c0_i32_0 = arith.constant 0 : i32
    %c0_i32_1 = arith.constant 0 : i32
    return %c0_i32, %c0_i32_0 : i32, i32
  }
  func.func @transform_4(%arg0: i32, %arg1: i32) -> (i32, i32) {
    %c0_i32 = arith.constant 0 : i32
    %c0_i32_0 = arith.constant 0 : i32
    %c0_i32_1 = arith.constant 0 : i32
    return %c0_i32, %c0_i32_0 : i32, i32
  }
  func.func @transform_5(%arg0: i32, %arg1: i32) -> (i32, i32) {
    %c0_i32 = arith.constant 0 : i32
    %c0_i32_0 = arith.constant 0 : i32
    %c0_i32_1 = arith.constant 0 : i32
    return %c0_i32, %c0_i32_0 : i32, i32
  }
  func.func @transform_6(%arg0: i32, %arg1: i32) -> (i32, i32, i32) {
    %0 = arith.muli %arg1, %arg0 : i32
    %c0_i32 = arith.constant 0 : i32
    %c0_i32_0 = arith.constant 0 : i32
    %c0_i32_1 = arith.constant 0 : i32
    return %c0_i32, %0, %c0_i32_0 : i32, i32, i32
  }
}

</mosaic_0001>

<llo_original>
// kernel: tpu_custom_call.1
$region0: #{tpu_custom_call.1}
  #allocation0 [shape = 'u32[]', space=smem, size = 0x4, offset = 0x4, fixed_abs, tag = 'smem constant byte address 0x4 - core index']
  #allocation1 [shape = 'u32[144,128]{1,0:T(1,128)}', space=vmem, size = 0x12000, scoped, tag = 'internal scratch']
  #allocation2 [shape = 'f32[1,4,128,8]{3,2,1,0:T(8,128)}', space=vmem, size = 0x40000, scoped, tag = 'scratch operand']
  #allocation3 [shape = 'f32[1,8]{1,0:T(1,128)}', space=vmem, size = 0x200, scoped, tag = 'scratch operand']
  #allocation4 [shape = 'f32[1,8]{1,0:T(1,128)}', space=vmem, size = 0x200, scoped, tag = 'scratch operand']
  #allocation5 [shape = 'f32[1,8]{1,0:T(1,128)}', space=vmem, size = 0x200, scoped, tag = 'scratch operand']
  #allocation6 [shape = 'f32[1,8]{1,0:T(1,128)}', space=vmem, size = 0x200, scoped, tag = 'scratch operand']
  %s0 = inlined_call_operand.vmem [shape: f32[128,8], index: 0, kind: input, shape index: {}]
  %s1 = inlined_call_operand.vmem [shape: f32[4,128,4], index: 1, kind: input, shape index: {}]
  %s2 = inlined_call_operand.vmem [shape: f32[4,8,4], index: 2, kind: input, shape index: {}]
  %s3 = inlined_call_operand.vmem [shape: f32[4,4], index: 3, kind: input, shape index: {}]
  %s4 = inlined_call_operand.vmem [shape: f32[1,8], index: 4, kind: input, shape index: {}]
  %s5 = inlined_call_operand.vmem [shape: f32[2,8], index: 5, kind: input, shape index: {}]
  %s6 = inlined_call_operand.vmem [shape: f32[4,128,8], index: 6, kind: output, shape index: {}]
  %s7 = sld [smem:[#allocation0]]
  $region73: #{tpu_custom_call.1} parent=0
    _
  %s9 = ssub.s32 1, %s7
  %s10 = scalar_select 0, %s9, %s7
  loop: start=0, step=1, limit=4
  $region2: #{tpu_custom_call.1} parent=0 // loop_pre_header
    _
  $region3: #{tpu_custom_call.1} parent=0 // loop_header
    %s12 = sphi 0, %s16
    %p13 = scmp.ge.s32.totalorder %s12, 4
    %s19 = sphi 0, %s31
    %s20 = sphi 0, %s27
    %s21 = sphi 0, %s19
    %s22 = sphi 0, %s20
    %s23 = sphi 0, %s21
    %s24 = sphi 0, %s22
    %s38 = sphi 0, %s40
    %s41 = sphi 0, %s38
    %s42 = sphi 0, %s41
    %s58 = sphi 0, %s42
    %s68 = sphi 0, %s70
    %s71 = sphi 0, %s68
    %s72 = sphi 0, %s71
    %s88 = sphi 0, %s72
    %s92 = sphi 0, %s92
    %s94 = sphi 0, %s92
    %s95 = sphi 0, %s94
    %s109 = sphi 0, %s95
    %s113 = sphi 0, %s113
    %s115 = sphi 0, %s113
    %s116 = sphi 0, %s115
    %s130 = sphi 0, %s116
    %s134 = sphi 0, %s134
    %s136 = sphi 0, %s134
    %s137 = sphi 0, %s136
    %s151 = sphi 0, %s137
    %s155 = sphi 0, %s155
    %s157 = sphi 0, %s155
    %s158 = sphi 0, %s157
    %s172 = sphi 0, %s158
    %s180 = sphi 0, %s182
    %s183 = sphi 0, %s180
    %s184 = sphi 0, %s183
    %s200 = sphi 0, %s184
  $region4: #{tpu_custom_call.1} parent=0 // loop_header_branch
    %15 = sbr.rel (%p13) target = $region8
  $region5: #{tpu_custom_call.1} parent=0 // loop_body
    %s17 = ssub.s32 %s12, 1
    %s18 = ssub.s32 %s12, 2
    %s25 = sadd.s32 1, %s20
    %p26 = scmp.ge.s32.totalorder %s25, 1
    %s27 = scalar_select %p26, 0, %s25
    %s28 = sadd.s32 1, %s19
    %s29 = scalar_select %p26, %s28, %s19
    %p30 = scmp.ge.s32.totalorder %s29, 2
    %s31 = scalar_select %p30, 0, %s29
    %s32 = ssub.s32 1, %s19
    %s33 = smul.u32 %s20, %s32
    %s34 = ssub.s32 1, %s31
    %s35 = smul.u32 %s27, %s34
    %s36 = ssub.s32 %s33, %s35
    %p37 = scmp.eq.s32.totalorder %s36, 0
    %s39 = sadd.s32 %s38, 1
    %s40 = scalar_select %p37, %s38, %s39
    %p43 = pneg %p37
    %p44 = scmp.eq.s32.totalorder %s12, 1
    %p45 = por %p43, %p44
    %p46 = scmp.ne.s32.totalorder %s38, %s41
    %p47 = scmp.eq.s32.totalorder %s12, 0
    %p48 = por %p46, %p47
    %p49 = scmp.ne.s32.totalorder %s38, %s41
    %p50 = scmp.eq.s32.totalorder %s17, 1
    %p51 = por %p49, %p50
    %p52 = scmp.ne.s32.totalorder %s41, %s42
    %p53 = scmp.eq.s32.totalorder %s17, 0
    %p54 = por %p52, %p53
    %p55 = scmp.ne.s32.totalorder %s41, %s42
    %p56 = scmp.eq.s32.totalorder %s18, 1
    %p57 = por %p55, %p56
    %p59 = scmp.ne.s32.totalorder %s42, %s58
    %p60 = scmp.eq.s32.totalorder %s18, 0
    %p61 = por %p59, %p60
    %s62 = ssub.s32 1, %s19
    %s63 = smul.u32 %s20, %s62
    %s64 = ssub.s32 1, %s31
    %s65 = smul.u32 %s27, %s64
    %s66 = ssub.s32 %s63, %s65
    %p67 = scmp.eq.s32.totalorder %s66, 0
    %s69 = sadd.s32 %s68, 1
    %s70 = scalar_select %p67, %s68, %s69
    %p73 = pneg %p67
    %p74 = scmp.eq.s32.totalorder %s12, 1
    %p75 = por %p73, %p74
    %p76 = scmp.ne.s32.totalorder %s68, %s71
    %p77 = scmp.eq.s32.totalorder %s12, 0
    %p78 = por %p76, %p77
    %p79 = scmp.ne.s32.totalorder %s68, %s71
    %p80 = scmp.eq.s32.totalorder %s17, 1
    %p81 = por %p79, %p80
    %p82 = scmp.ne.s32.totalorder %s71, %s72
    %p83 = scmp.eq.s32.totalorder %s17, 0
    %p84 = por %p82, %p83
    %p85 = scmp.ne.s32.totalorder %s71, %s72
    %p86 = scmp.eq.s32.totalorder %s18, 1
    %p87 = por %p85, %p86
    %p89 = scmp.ne.s32.totalorder %s72, %s88
    %p90 = scmp.eq.s32.totalorder %s18, 0
    %p91 = por %p89, %p90
    %s93 = sadd.s32 %s92, 1
    %p96 = scmp.eq.s32.totalorder %s12, 1
    %p97 = scmp.ne.s32.totalorder %s92, %s94
    %p98 = scmp.eq.s32.totalorder %s12, 0
    %p99 = por %p97, %p98
    %p100 = scmp.ne.s32.totalorder %s92, %s94
    %p101 = scmp.eq.s32.totalorder %s17, 1
    %p102 = por %p100, %p101
    %p103 = scmp.ne.s32.totalorder %s94, %s95
    %p104 = scmp.eq.s32.totalorder %s17, 0
    %p105 = por %p103, %p104
    %p106 = scmp.ne.s32.totalorder %s94, %s95
    %p107 = scmp.eq.s32.totalorder %s18, 1
    %p108 = por %p106, %p107
    %p110 = scmp.ne.s32.totalorder %s95, %s109
    %p111 = scmp.eq.s32.totalorder %s18, 0
    %p112 = por %p110, %p111
    %s114 = sadd.s32 %s113, 1
    %p117 = scmp.eq.s32.totalorder %s12, 1
    %p118 = scmp.ne.s32.totalorder %s113, %s115
    %p119 = scmp.eq.s32.totalorder %s12, 0
    %p120 = por %p118, %p119
    %p121 = scmp.ne.s32.totalorder %s113, %s115
    %p122 = scmp.eq.s32.totalorder %s17, 1
    %p123 = por %p121, %p122
    %p124 = scmp.ne.s32.totalorder %s115, %s116
    %p125 = scmp.eq.s32.totalorder %s17, 0
    %p126 = por %p124, %p125
    %p127 = scmp.ne.s32.totalorder %s115, %s116
    %p128 = scmp.eq.s32.totalorder %s18, 1
    %p129 = por %p127, %p128
    %p131 = scmp.ne.s32.totalorder %s116, %s130
    %p132 = scmp.eq.s32.totalorder %s18, 0
    %p133 = por %p131, %p132
    %s135 = sadd.s32 %s134, 1
    %p138 = scmp.eq.s32.totalorder %s12, 1
    %p139 = scmp.ne.s32.totalorder %s134, %s136
    %p140 = scmp.eq.s32.totalorder %s12, 0
    %p141 = por %p139, %p140
    %p142 = scmp.ne.s32.totalorder %s134, %s136
    %p143 = scmp.eq.s32.totalorder %s17, 1
    %p144 = por %p142, %p143
    %p145 = scmp.ne.s32.totalorder %s136, %s137
    %p146 = scmp.eq.s32.totalorder %s17, 0
    %p147 = por %p145, %p146
    %p148 = scmp.ne.s32.totalorder %s136, %s137
    %p149 = scmp.eq.s32.totalorder %s18, 1
    %p150 = por %p148, %p149
    %p152 = scmp.ne.s32.totalorder %s137, %s151
    %p153 = scmp.eq.s32.totalorder %s18, 0
    %p154 = por %p152, %p153
    %s156 = sadd.s32 %s155, 1
    %p159 = scmp.eq.s32.totalorder %s12, 1
    %p160 = scmp.ne.s32.totalorder %s155, %s157
    %p161 = scmp.eq.s32.totalorder %s12, 0
    %p162 = por %p160, %p161
    %p163 = scmp.ne.s32.totalorder %s155, %s157
    %p164 = scmp.eq.s32.totalorder %s17, 1
    %p165 = por %p163, %p164
    %p166 = scmp.ne.s32.totalorder %s157, %s158
    %p167 = scmp.eq.s32.totalorder %s17, 0
    %p168 = por %p166, %p167
    %p169 = scmp.ne.s32.totalorder %s157, %s158
    %p170 = scmp.eq.s32.totalorder %s18, 1
    %p171 = por %p169, %p170
    %p173 = scmp.ne.s32.totalorder %s158, %s172
    %p174 = scmp.eq.s32.totalorder %s18, 0
    %p175 = por %p173, %p174
    %s176 = smul.u32 %s20, %s19
    %s177 = smul.u32 %s27, %s31
    %s178 = ssub.s32 %s176, %s177
    %p179 = scmp.eq.s32.totalorder %s178, 0
    %s181 = sadd.s32 %s180, 1
    %s182 = scalar_select %p179, %s180, %s181
    %p185 = pneg %p179
    %p186 = scmp.eq.s32.totalorder %s12, 1
    %p187 = por %p185, %p186
    %p188 = scmp.ne.s32.totalorder %s180, %s183
    %p189 = scmp.eq.s32.totalorder %s12, 0
    %p190 = por %p188, %p189
    %p191 = scmp.ne.s32.totalorder %s180, %s183
    %p192 = scmp.eq.s32.totalorder %s17, 1
    %p193 = por %p191, %p192
    %p194 = scmp.ne.s32.totalorder %s183, %s184
    %p195 = scmp.eq.s32.totalorder %s17, 0
    %p196 = por %p194, %p195
    %p197 = scmp.ne.s32.totalorder %s183, %s184
    %p198 = scmp.eq.s32.totalorder %s18, 1
    %p199 = por %p197, %p198
    %p201 = scmp.ne.s32.totalorder %s184, %s200
    %p202 = scmp.eq.s32.totalorder %s18, 0
    %p203 = por %p201, %p202
    %p204 = scmp.le.s32.totalorder 1, %s12
    %p205 = scmp.lt.s32.totalorder %s12, 3
    %p206 = pnand %p204, %p205
    %p207 = pneg %p206
    // Predicated region
    $region9: #{tpu_custom_call.1} parent=5 // pred_check
      _
    $region10: #{tpu_custom_call.1} parent=5 // pred_check_branch
      %209 = sbr.rel (%p206) target = $region12
    $region11: #{tpu_custom_call.1} parent=5 // pred_region
      %s210 = ssub.s32 %s12, 1
      // Predicated region
      $region13: #{tpu_custom_call.1} parent=11 // pred_check
        %p211 = pneg %p105
      $region14: #{tpu_custom_call.1} parent=11 // pred_check_branch
        %213 = sbr.rel (%p211) target = $region16
      $region15: #{tpu_custom_call.1} parent=11 // pred_region
        _
      $region16: #{tpu_custom_call.1} parent=11 // pred_fallthru
        _
      // Predicated region
      $region17: #{tpu_custom_call.1} parent=11 // pred_check
        %p214 = pneg %p126
      $region18: #{tpu_custom_call.1} parent=11 // pred_check_branch
        %216 = sbr.rel (%p214) target = $region20
      $region19: #{tpu_custom_call.1} parent=11 // pred_region
        _
      $region20: #{tpu_custom_call.1} parent=11 // pred_fallthru
        _
      // Predicated region
      $region21: #{tpu_custom_call.1} parent=11 // pred_check
        %p217 = pneg %p147
      $region22: #{tpu_custom_call.1} parent=11 // pred_check_branch
        %219 = sbr.rel (%p217) target = $region24
      $region23: #{tpu_custom_call.1} parent=11 // pred_region
        _
      $region24: #{tpu_custom_call.1} parent=11 // pred_fallthru
        _
      // Predicated region
      $region25: #{tpu_custom_call.1} parent=11 // pred_check
        %p220 = pneg %p168
      $region26: #{tpu_custom_call.1} parent=11 // pred_check_branch
        %222 = sbr.rel (%p220) target = $region28
      $region27: #{tpu_custom_call.1} parent=11 // pred_region
        _
      $region28: #{tpu_custom_call.1} parent=11 // pred_fallthru
        _
    $region12: #{tpu_custom_call.1} parent=5 // pred_fallthru
      _
    %p223 = scmp.lt.s32.totalorder %s12, 2
    // Predicated region
    $region29: #{tpu_custom_call.1} parent=5 // pred_check
      %p224 = pneg %p223
    $region30: #{tpu_custom_call.1} parent=5 // pred_check_branch
      %226 = sbr.rel (%p224) target = $region32
    $region31: #{tpu_custom_call.1} parent=5 // pred_region
      // Predicated region
      $region33: #{tpu_custom_call.1} parent=31 // pred_check
        %p227 = pneg %p48
      $region34: #{tpu_custom_call.1} parent=31 // pred_check_branch
        %229 = sbr.rel (%p227) target = $region36
      $region35: #{tpu_custom_call.1} parent=31 // pred_region
        %s230 = ssub.s32 1, %s19
        %s231 = smul.u32 %s20, %s230
        %s232 = smul.u32 16, %s231
        %p233 = scmp.lt.s32.totalorder %s232, 15
        %s234 = scalar_select %p233, %s232, 15
        %s235 = smul.addr %s234, 8
        %s236 = scalar_lea.vmem %s0, %s235
        %s237 = ssub.s32 1, %s19
        %s238 = smul.u32 %s20, %s237
        %s239 = smul.u32 16, %s238
      $region36: #{tpu_custom_call.1} parent=31 // pred_fallthru
        _
      // Predicated region
      $region37: #{tpu_custom_call.1} parent=31 // pred_check
        %p240 = pneg %p78
      $region38: #{tpu_custom_call.1} parent=31 // pred_check_branch
        %242 = sbr.rel (%p240) target = $region40
      $region39: #{tpu_custom_call.1} parent=31 // pred_region
        %s243 = ssub.s32 1, %s19
        %s244 = smul.u32 %s20, %s243
        %s245 = smul.u32 16, %s244
        %p246 = scmp.lt.s32.totalorder %s245, 15
        %s247 = scalar_select %p246, %s245, 15
        %s248 = smul.addr %s247, 8
        %s249 = scalar_lea.vmem %s1, %s248
        %s250 = ssub.s32 1, %s19
        %s251 = smul.u32 %s20, %s250
        %s252 = smul.u32 16, %s251
      $region40: #{tpu_custom_call.1} parent=31 // pred_fallthru
        _
    $region32: #{tpu_custom_call.1} parent=5 // pred_fallthru
      _
    %p253 = scmp.le.s32.totalorder 1, %s12
    %p254 = scmp.lt.s32.totalorder %s12, 3
    %p255 = pnand %p253, %p254
    %p256 = pneg %p255
    // Predicated region
    $region41: #{tpu_custom_call.1} parent=5 // pred_check
      _
    $region42: #{tpu_custom_call.1} parent=5 // pred_check_branch
      %258 = sbr.rel (%p255) target = $region44
    $region43: #{tpu_custom_call.1} parent=5 // pred_region
      %s259 = ssub.s32 %s12, 1
      %s260 = ssub.s32 1, %s21
      %s261 = smul.u32 %s22, %s260
      %s262 = smul.u32 16, %s261
      %p263 = scmp.lt.s32.totalorder %s262, 15
      %s264 = scalar_select %p263, %s262, 15
      %s265 = smul.addr %s264, 8
      %s266 = scalar_lea.vmem %s0, %s265
      %p267 = pneg %p54
      %p268 = pneg %p51
      %s269 = ssub.s32 1, %s21
      %s270 = smul.u32 %s22, %s269
      %s271 = smul.u32 16, %s270
      %p272 = scmp.lt.s32.totalorder %s271, 15
      %s273 = scalar_select %p272, %s271, 15
      %s274 = smul.addr %s273, 8
      %s275 = scalar_lea.vmem %s1, %s274
      %p276 = pneg %p84
      %p277 = pneg %p81
      %p278 = pneg %p105
      %p279 = pneg %p102
      %p280 = pneg %p126
      %p281 = pneg %p123
      %p282 = pneg %p147
      %p283 = pneg %p144
      %p284 = pneg %p168
      %p285 = pneg %p165
      %p286 = pneg %p196
      %p287 = pneg %p193
      %s288 = smul.u32 %s22, %s21
      %s289 = smul.u32 16, %s288
      %p290 = scmp.lt.s32.totalorder %s289, 15
      %s291 = scalar_select %p290, %s289, 15
      %s292 = smul.addr %s291, 8
      %s293 = scalar_lea.vmem %s6, %s292
      %s294 = ssub.s32 1, %s21
      %s295 = smul.u32 %s22, %s294
      %s296 = smul.u32 16, %s295
      %p297 = scmp.lt.s32.totalorder %s296, 15
      %s298 = scalar_select %p297, %s296, 15
      %s299 = smul.addr %s298, 8
      %s300 = scalar_lea.vmem %s0, %s299
      %s301 = ssub.s32 1, %s21
      %s302 = smul.u32 %s22, %s301
      %s303 = smul.u32 16, %s302
      %s304 = ssub.s32 1, %s21
      %s305 = smul.u32 %s22, %s304
      %s306 = smul.u32 16, %s305
      %p307 = scmp.lt.s32.totalorder %s306, 15
      %s308 = scalar_select %p307, %s306, 15
      %s309 = smul.addr %s308, 8
      %s310 = scalar_lea.vmem %s1, %s309
      %s311 = ssub.s32 1, %s21
      %s312 = smul.u32 %s22, %s311
      %s313 = smul.u32 16, %s312
      %s314 = smul.u32 %s22, %s21
      %s315 = smul.u32 16, %s314
      %p316 = scmp.lt.s32.totalorder %s315, 15
      %s317 = scalar_select %p316, %s315, 15
      %s318 = smul.addr %s317, 8
      %s319 = scalar_lea.vmem %s6, %s318
      %s320 = smul.u32 %s22, %s21
      %s321 = smul.u32 16, %s320
      %p322 = scmp.eq.s32.totalorder %s21, 0
      // Predicated region
      $region45: #{tpu_custom_call.1} parent=43 // pred_check
        %p323 = pneg %p322
      $region46: #{tpu_custom_call.1} parent=43 // pred_check_branch
        %325 = sbr.rel (%p323) target = $region48
      $region47: #{tpu_custom_call.1} parent=43 // pred_region
        %p326 = scmp.eq.s32.totalorder %s22, 0
        // Predicated region
        $region49: #{tpu_custom_call.1} parent=47 // pred_check
          %p327 = pneg %p326
        $region50: #{tpu_custom_call.1} parent=47 // pred_check_branch
          %329 = sbr.rel (%p327) target = $region52
        $region51: #{tpu_custom_call.1} parent=47 // pred_region
          %vm330 = vcmask 57344
          %331 = vst.msk [vmem:[#allocation3] sm:$0x1] %vm330, 0.0
          %332 = vst.msk [vmem:[#allocation4] sm:$0x1] %vm330, 0.0
        $region52: #{tpu_custom_call.1} parent=47 // pred_fallthru
          _
        %v333 = vld [vmem:[%s300] sm:$0xff]
        %v334 = vld [vmem:[%s300 + $0x8] sm:$0xff]
        %v335 = vld [vmem:[%s300 + $0x10] sm:$0xff]
        %v336 = vld [vmem:[%s300 + $0x18] sm:$0xff]
        %v337 = vld [vmem:[%s300 + $0x20] sm:$0xff]
        %v338 = vld [vmem:[%s300 + $0x28] sm:$0xff]
        %v339 = vld [vmem:[%s300 + $0x30] sm:$0xff]
        %v340 = vld [vmem:[%s300 + $0x38] sm:$0xff]
        %v341 = vld [vmem:[%s300 + $0x40] sm:$0xff]
        %v342 = vld [vmem:[%s300 + $0x48] sm:$0xff]
        %v343 = vld [vmem:[%s300 + $0x50] sm:$0xff]
        %v344 = vld [vmem:[%s300 + $0x58] sm:$0xff]
        %v345 = vld [vmem:[%s300 + $0x60] sm:$0xff]
        %v346 = vld [vmem:[%s300 + $0x68] sm:$0xff]
        %v347 = vld [vmem:[%s300 + $0x70] sm:$0xff]
        %v348 = vld [vmem:[%s300 + $0x78] sm:$0xff]
        %v349 = vld [vmem:[%s4] sm:$0x1]
        %v350 = vld [vmem:[%s310] sm:$0xff]
        %v351 = vld [vmem:[%s310 + $0x8] sm:$0xff]
        %v352 = vld [vmem:[%s310 + $0x10] sm:$0xff]
        %v353 = vld [vmem:[%s310 + $0x18] sm:$0xff]
        %v354 = vld [vmem:[%s310 + $0x20] sm:$0xff]
        %v355 = vld [vmem:[%s310 + $0x28] sm:$0xff]
        %v356 = vld [vmem:[%s310 + $0x30] sm:$0xff]
        %v357 = vld [vmem:[%s310 + $0x38] sm:$0xff]
        %v358 = vld [vmem:[%s310 + $0x40] sm:$0xff]
        %v359 = vld [vmem:[%s310 + $0x48] sm:$0xff]
        %v360 = vld [vmem:[%s310 + $0x50] sm:$0xff]
        %v361 = vld [vmem:[%s310 + $0x58] sm:$0xff]
        %v362 = vld [vmem:[%s310 + $0x60] sm:$0xff]
        %v363 = vld [vmem:[%s310 + $0x68] sm:$0xff]
        %v364 = vld [vmem:[%s310 + $0x70] sm:$0xff]
        %v365 = vld [vmem:[%s310 + $0x78] sm:$0xff]
        %v366 = vld [vmem:[%s310 + $0x80] sm:$0xff]
        %v367 = vld [vmem:[%s310 + $0x88] sm:$0xff]
        %v368 = vld [vmem:[%s310 + $0x90] sm:$0xff]
        %v369 = vld [vmem:[%s310 + $0x98] sm:$0xff]
        %v370 = vld [vmem:[%s310 + $0xa0] sm:$0xff]
        %v371 = vld [vmem:[%s310 + $0xa8] sm:$0xff]
        %v372 = vld [vmem:[%s310 + $0xb0] sm:$0xff]
        %v373 = vld [vmem:[%s310 + $0xb8] sm:$0xff]
        %v374 = vld [vmem:[%s310 + $0xc0] sm:$0xff]
        %v375 = vld [vmem:[%s310 + $0xc8] sm:$0xff]
        %v376 = vld [vmem:[%s310 + $0xd0] sm:$0xff]
        %v377 = vld [vmem:[%s310 + $0xd8] sm:$0xff]
        %v378 = vld [vmem:[%s310 + $0xe0] sm:$0xff]
        %v379 = vld [vmem:[%s310 + $0xe8] sm:$0xff]
        %v380 = vld [vmem:[%s310 + $0xf0] sm:$0xff]
        %v381 = vld [vmem:[%s310 + $0xf8] sm:$0xff]
        %v382 = vld [vmem:[%s310 + $0x100] sm:$0xff]
        %v383 = vld [vmem:[%s310 + $0x108] sm:$0xff]
        %v384 = vld [vmem:[%s310 + $0x110] sm:$0xff]
        %v385 = vld [vmem:[%s310 + $0x118] sm:$0xff]
        %v386 = vld [vmem:[%s310 + $0x120] sm:$0xff]
        %v387 = vld [vmem:[%s310 + $0x128] sm:$0xff]
        %v388 = vld [vmem:[%s310 + $0x130] sm:$0xff]
        %v389 = vld [vmem:[%s310 + $0x138] sm:$0xff]
        %v390 = vld [vmem:[%s310 + $0x140] sm:$0xff]
        %v391 = vld [vmem:[%s310 + $0x148] sm:$0xff]
        %v392 = vld [vmem:[%s310 + $0x150] sm:$0xff]
        %v393 = vld [vmem:[%s310 + $0x158] sm:$0xff]
        %v394 = vld [vmem:[%s310 + $0x160] sm:$0xff]
        %v395 = vld [vmem:[%s310 + $0x168] sm:$0xff]
        %v396 = vld [vmem:[%s310 + $0x170] sm:$0xff]
        %v397 = vld [vmem:[%s310 + $0x178] sm:$0xff]
        %v398 = vld [vmem:[%s310 + $0x180] sm:$0xff]
        %v399 = vld [vmem:[%s310 + $0x188] sm:$0xff]
        %v400 = vld [vmem:[%s310 + $0x190] sm:$0xff]
        %v401 = vld [vmem:[%s310 + $0x198] sm:$0xff]
        %v402 = vld [vmem:[%s310 + $0x1a0] sm:$0xff]
        %v403 = vld [vmem:[%s310 + $0x1a8] sm:$0xff]
        %v404 = vld [vmem:[%s310 + $0x1b0] sm:$0xff]
        %v405 = vld [vmem:[%s310 + $0x1b8] sm:$0xff]
        %v406 = vld [vmem:[%s310 + $0x1c0] sm:$0xff]
        %v407 = vld [vmem:[%s310 + $0x1c8] sm:$0xff]
        %v408 = vld [vmem:[%s310 + $0x1d0] sm:$0xff]
        %v409 = vld [vmem:[%s310 + $0x1d8] sm:$0xff]
        %v410 = vld [vmem:[%s310 + $0x1e0] sm:$0xff]
        %v411 = vld [vmem:[%s310 + $0x1e8] sm:$0xff]
        %v412 = vld [vmem:[%s310 + $0x1f0] sm:$0xff]
        %v413 = vld [vmem:[%s310 + $0x1f8] sm:$0xff]
        %v414 = vld [vmem:[%s3] sm:$0xf]
        %vm415 = vcmask 31744
        %v417 = vsel %vm415, %v350, 0
        %v420 = vsel %vm415, %v351, 0
        %v423 = vsel %vm415, %v352, 0
        %v426 = vsel %vm415, %v353, 0
        %v429 = vsel %vm415, %v354, 0
        %v432 = vsel %vm415, %v355, 0
        %v435 = vsel %vm415, %v356, 0
        %v438 = vsel %vm415, %v357, 0
        %v441 = vsel %vm415, %v358, 0
        %v444 = vsel %vm415, %v359, 0
        %v447 = vsel %vm415, %v360, 0
        %v450 = vsel %vm415, %v361, 0
        %v453 = vsel %vm415, %v362, 0
        %v456 = vsel %vm415, %v363, 0
        %v459 = vsel %vm415, %v364, 0
        %v462 = vsel %vm415, %v365, 0
        %v465 = vsel %vm415, %v366, 0
        %v468 = vsel %vm415, %v367, 0
        %v471 = vsel %vm415, %v368, 0
        %v474 = vsel %vm415, %v369, 0
        %v477 = vsel %vm415, %v370, 0
        %v480 = vsel %vm415, %v371, 0
        %v483 = vsel %vm415, %v372, 0
        %v486 = vsel %vm415, %v373, 0
        %v489 = vsel %vm415, %v374, 0
        %v492 = vsel %vm415, %v375, 0
        %v495 = vsel %vm415, %v376, 0
        %v498 = vsel %vm415, %v377, 0
        %v501 = vsel %vm415, %v378, 0
        %v504 = vsel %vm415, %v379, 0
        %v507 = vsel %vm415, %v380, 0
        %v510 = vsel %vm415, %v381, 0
        %v513 = vsel %vm415, %v382, 0
        %v516 = vsel %vm415, %v383, 0
        %v519 = vsel %vm415, %v384, 0
        %v522 = vsel %vm415, %v385, 0
        %v525 = vsel %vm415, %v386, 0
        %v528 = vsel %vm415, %v387, 0
        %v531 = vsel %vm415, %v388, 0
        %v534 = vsel %vm415, %v389, 0
        %v537 = vsel %vm415, %v390, 0
        %v540 = vsel %vm415, %v391, 0
        %v543 = vsel %vm415, %v392, 0
        %v546 = vsel %vm415, %v393, 0
        %v549 = vsel %vm415, %v394, 0
        %v552 = vsel %vm415, %v395, 0
        %v555 = vsel %vm415, %v396, 0
        %v558 = vsel %vm415, %v397, 0
        %v561 = vsel %vm415, %v398, 0
        %v564 = vsel %vm415, %v399, 0
        %v567 = vsel %vm415, %v400, 0
        %v570 = vsel %vm415, %v401, 0
        %v573 = vsel %vm415, %v402, 0
        %v576 = vsel %vm415, %v403, 0
        %v579 = vsel %vm415, %v404, 0
        %v582 = vsel %vm415, %v405, 0
        %v585 = vsel %vm415, %v406, 0
        %v588 = vsel %vm415, %v407, 0
        %v591 = vsel %vm415, %v408, 0
        %v594 = vsel %vm415, %v409, 0
        %v597 = vsel %vm415, %v410, 0
        %v600 = vsel %vm415, %v411, 0
        %v603 = vsel %vm415, %v412, 0
        %v606 = vsel %vm415, %v413, 0
        %vm608 = vcmask 1043456
        %v610 = vsel %vm608, %v414, 0
        %612 = vmatprep.subr.mxu0 0.0
        %613 = vmatpush1.msra.mxu0 %v610
        %614 = vmatprep.subr.mxu0 0.0
        %615 = vmatpush1.msra.mxu0 0.0
        %616 = vmatprep.subr.mxu0 0.0
        %617 = vmatpush1.msra.mxu0 0.0
        %618 = vmatprep.subr.mxu0 0.0
        %619 = vmatpush1.msra.mxu0 0.0
        %620 = vmatprep.subr.mxu0 0.0
        %621 = vmatpush1.msra.mxu0 0.0
        %622 = vmatprep.subr.mxu0 0.0
        %623 = vmatpush1.msra.mxu0 0.0
        %624 = vmatprep.subr.mxu0 0.0
        %625 = vmatpush1.msra.mxu0 0.0
        %626 = vmatprep.subr.mxu0 0.0
        %627 = vmatpush1.msra.mxu0 0.0
        %628 = vmatprep.subr.mxu0 0.0
        %629 = vmatpush1.msra.mxu0 0.0
        %630 = vmatprep.subr.mxu0 0.0
        %631 = vmatpush1.msra.mxu0 0.0
        %632 = vmatprep.subr.mxu0 0.0
        %633 = vmatpush1.msra.mxu0 0.0
        %634 = vmatprep.subr.mxu0 0.0
        %635 = vmatpush1.msra.mxu0 0.0
        %636 = vmatprep.subr.mxu0 0.0
        %637 = vmatpush1.msra.mxu0 0.0
        %638 = vmatprep.subr.mxu0 0.0
        %639 = vmatpush1.msra.mxu0 0.0
        %640 = vmatprep.subr.mxu0 0.0
        %641 = vmatpush1.msra.mxu0 0.0
        %642 = vmatprep.subr.mxu0 0.0
        %643 = vmatpush1.msra.mxu0 0.0
        %644 = vmatprep.subr.mxu0 0.0
        %645 = vmatpush1.msra.mxu0 0.0
        %646 = vmatprep.subr.mxu0 0.0
        %647 = vmatpush1.msra.mxu0 0.0
        %648 = vmatprep.subr.mxu0 0.0
        %649 = vmatpush1.msra.mxu0 0.0
        %650 = vmatprep.subr.mxu0 0.0
        %651 = vmatpush1.msra.mxu0 0.0
        %652 = vmatprep.subr.mxu0 0.0
        %653 = vmatpush1.msra.mxu0 0.0
        %654 = vmatprep.subr.mxu0 0.0
        %655 = vmatpush1.msra.mxu0 0.0
        %656 = vmatprep.subr.mxu0 0.0
        %657 = vmatpush1.msra.mxu0 0.0
        %658 = vmatprep.subr.mxu0 0.0
        %659 = vmatpush1.msra.mxu0 0.0
        %660 = vmatprep.subr.mxu0 0.0
        %661 = vmatpush1.msra.mxu0 0.0
        %662 = vmatprep.subr.mxu0 0.0
        %663 = vmatpush1.msra.mxu0 0.0
        %664 = vmatprep.subr.mxu0 0.0
        %665 = vmatpush1.msra.mxu0 0.0
        %666 = vmatprep.subr.mxu0 0.0
        %667 = vmatpush1.msra.mxu0 0.0
        %668 = vmatprep.subr.mxu0 0.0
        %669 = vmatpush1.msra.mxu0 0.0
        %670 = vmatprep.subr.mxu0 0.0
        %671 = vmatpush1.msra.mxu0 0.0
        %672 = vmatprep.subr.mxu0 0.0
        %673 = vmatpush1.msra.mxu0 0.0
        %674 = vmatprep.subr.mxu0 0.0
        %675 = vmatpush1.msra.mxu0 0.0
        %676 = vmatprep.mubr.f32.mxu0 0.0
        %677 = vmatmul.mubr.f32.gmra.mrb[0].mxu0 %v417
        %v678 = vpop.f32.mrb[0].mxu0
        %v679 = vadd.f32 0.0, %v678
        %v680 = vpop.f32.mrb[0].mxu0
        %681 = vmatprep.mubr.f32.mxu0 0.0
        %682 = vmatmul.mubr.f32.gmra.mrb[0].mxu0 %v420
        %v683 = vpop.f32.mrb[0].mxu0
        %v684 = vadd.f32 0.0, %v683
        %v685 = vpop.f32.mrb[0].mxu0
        %686 = vmatprep.mubr.f32.mxu0 0.0
        %687 = vmatmul.mubr.f32.gmra.mrb[0].mxu0 %v423
        %v688 = vpop.f32.mrb[0].mxu0
        %v689 = vadd.f32 0.0, %v688
        %v690 = vpop.f32.mrb[0].mxu0
        %691 = vmatprep.mubr.f32.mxu0 0.0
        %692 = vmatmul.mubr.f32.gmra.mrb[0].mxu0 %v426
        %v693 = vpop.f32.mrb[0].mxu0
        %v694 = vadd.f32 0.0, %v693
        %v695 = vpop.f32.mrb[0].mxu0
        %696 = vmatprep.mubr.f32.mxu0 0.0
        %697 = vmatmul.mubr.f32.gmra.mrb[0].mxu0 %v429
        %v698 = vpop.f32.mrb[0].mxu0
        %v699 = vadd.f32 0.0, %v698
        %v700 = vpop.f32.mrb[0].mxu0
        %701 = vmatprep.mubr.f32.mxu0 0.0
        %702 = vmatmul.mubr.f32.gmra.mrb[0].mxu0 %v432
        %v703 = vpop.f32.mrb[0].mxu0
        %v704 = vadd.f32 0.0, %v703
        %v705 = vpop.f32.mrb[0].mxu0
        %706 = vmatprep.mubr.f32.mxu0 0.0
        %707 = vmatmul.mubr.f32.gmra.mrb[0].mxu0 %v435
        %v708 = vpop.f32.mrb[0].mxu0
        %v709 = vadd.f32 0.0, %v708
        %v710 = vpop.f32.mrb[0].mxu0
        %711 = vmatprep.mubr.f32.mxu0 0.0
        %712 = vmatmul.mubr.f32.gmra.mrb[0].mxu0 %v438
        %v713 = vpop.f32.mrb[0].mxu0
        %v714 = vadd.f32 0.0, %v713
        %v715 = vpop.f32.mrb[0].mxu0
        %716 = vmatprep.mubr.f32.mxu0 0.0
        %717 = vmatmul.mubr.f32.gmra.mrb[0].mxu0 %v441
        %v718 = vpop.f32.mrb[0].mxu0
        %v719 = vadd.f32 0.0, %v718
        %v720 = vpop.f32.mrb[0].mxu0
        %721 = vmatprep.mubr.f32.mxu0 0.0
        %722 = vmatmul.mubr.f32.gmra.mrb[0].mxu0 %v444
        %v723 = vpop.f32.mrb[0].mxu0
        %v724 = vadd.f32 0.0, %v723
        %v725 = vpop.f32.mrb[0].mxu0
        %726 = vmatprep.mubr.f32.mxu0 0.0
        %727 = vmatmul.mubr.f32.gmra.mrb[0].mxu0 %v447
        %v728 = vpop.f32.mrb[0].mxu0
        %v729 = vadd.f32 0.0, %v728
        %v730 = vpop.f32.mrb[0].mxu0
        %731 = vmatprep.mubr.f32.mxu0 0.0
        %732 = vmatmul.mubr.f32.gmra.mrb[0].mxu0 %v450
        %v733 = vpop.f32.mrb[0].mxu0
        %v734 = vadd.f32 0.0, %v733
        %v735 = vpop.f32.mrb[0].mxu0
        %736 = vmatprep.mubr.f32.mxu0 0.0
        %737 = vmatmul.mubr.f32.gmra.mrb[0].mxu0 %v453
        %v738 = vpop.f32.mrb[0].mxu0
        %v739 = vadd.f32 0.0, %v738
        %v740 = vpop.f32.mrb[0].mxu0
        %741 = vmatprep.mubr.f32.mxu0 0.0
        %742 = vmatmul.mubr.f32.gmra.mrb[0].mxu0 %v456
        %v743 = vpop.f32.mrb[0].mxu0
        %v744 = vadd.f32 0.0, %v743
        %v745 = vpop.f32.mrb[0].mxu0
        %746 = vmatprep.mubr.f32.mxu0 0.0
        %747 = vmatmul.mubr.f32.gmra.mrb[0].mxu0 %v459
        %v748 = vpop.f32.mrb[0].mxu0
        %v749 = vadd.f32 0.0, %v748
        %v750 = vpop.f32.mrb[0].mxu0
        %751 = vmatprep.mubr.f32.mxu0 0.0
        %752 = vmatmul.mubr.f32.gmra.mrb[0].mxu0 %v462
        %v753 = vpop.f32.mrb[0].mxu0
        %v754 = vadd.f32 0.0, %v753
        %v755 = vpop.f32.mrb[0].mxu0
        %756 = vmatprep.mubr.f32.mxu0 0.0
        %757 = vmatmul.mubr.f32.gmra.mrb[0].mxu0 %v465
        %v758 = vpop.f32.mrb[0].mxu0
        %v759 = vadd.f32 0.0, %v758
        %v760 = vpop.f32.mrb[0].mxu0
        %761 = vmatprep.mubr.f32.mxu0 0.0
        %762 = vmatmul.mubr.f32.gmra.mrb[0].mxu0 %v468
        %v763 = vpop.f32.mrb[0].mxu0
        %v764 = vadd.f32 0.0, %v763
        %v765 = vpop.f32.mrb[0].mxu0
        %766 = vmatprep.mubr.f32.mxu0 0.0
        %767 = vmatmul.mubr.f32.gmra.mrb[0].mxu0 %v471
        %v768 = vpop.f32.mrb[0].mxu0
        %v769 = vadd.f32 0.0, %v768
        %v770 = vpop.f32.mrb[0].mxu0
        %771 = vmatprep.mubr.f32.mxu0 0.0
        %772 = vmatmul.mubr.f32.gmra.mrb[0].mxu0 %v474
        %v773 = vpop.f32.mrb[0].mxu0
        %v774 = vadd.f32 0.0, %v773
        %v775 = vpop.f32.mrb[0].mxu0
        %776 = vmatprep.mubr.f32.mxu0 0.0
        %777 = vmatmul.mubr.f32.gmra.mrb[0].mxu0 %v477
        %v778 = vpop.f32.mrb[0].mxu0
        %v779 = vadd.f32 0.0, %v778
        %v780 = vpop.f32.mrb[0].mxu0
        %781 = vmatprep.mubr.f32.mxu0 0.0
        %782 = vmatmul.mubr.f32.gmra.mrb[0].mxu0 %v480
        %v783 = vpop.f32.mrb[0].mxu0
        %v784 = vadd.f32 0.0, %v783
        %v785 = vpop.f32.mrb[0].mxu0
        %786 = vmatprep.mubr.f32.mxu0 0.0
        %787 = vmatmul.mubr.f32.gmra.mrb[0].mxu0 %v483
        %v788 = vpop.f32.mrb[0].mxu0
        %v789 = vadd.f32 0.0, %v788
        %v790 = vpop.f32.mrb[0].mxu0
        %791 = vmatprep.mubr.f32.mxu0 0.0
        %792 = vmatmul.mubr.f32.gmra.mrb[0].mxu0 %v486
        %v793 = vpop.f32.mrb[0].mxu0
        %v794 = vadd.f32 0.0, %v793
        %v795 = vpop.f32.mrb[0].mxu0
        %796 = vmatprep.mubr.f32.mxu0 0.0
        %797 = vmatmul.mubr.f32.gmra.mrb[0].mxu0 %v489
        %v798 = vpop.f32.mrb[0].mxu0
        %v799 = vadd.f32 0.0, %v798
        %v800 = vpop.f32.mrb[0].mxu0
        %801 = vmatprep.mubr.f32.mxu0 0.0
        %802 = vmatmul.mubr.f32.gmra.mrb[0].mxu0 %v492
        %v803 = vpop.f32.mrb[0].mxu0
        %v804 = vadd.f32 0.0, %v803
        %v805 = vpop.f32.mrb[0].mxu0
        %806 = vmatprep.mubr.f32.mxu0 0.0
        %807 = vmatmul.mubr.f32.gmra.mrb[0].mxu0 %v495
        %v808 = vpop.f32.mrb[0].mxu0
        %v809 = vadd.f32 0.0, %v808
        %v810 = vpop.f32.mrb[0].mxu0
        %811 = vmatprep.mubr.f32.mxu0 0.0
        %812 = vmatmul.mubr.f32.gmra.mrb[0].mxu0 %v498
        %v813 = vpop.f32.mrb[0].mxu0
        %v814 = vadd.f32 0.0, %v813
        %v815 = vpop.f32.mrb[0].mxu0
        %816 = vmatprep.mubr.f32.mxu0 0.0
        %817 = vmatmul.mubr.f32.gmra.mrb[0].mxu0 %v501
        %v818 = vpop.f32.mrb[0].mxu0
        %v819 = vadd.f32 0.0, %v818
        %v820 = vpop.f32.mrb[0].mxu0
        %821 = vmatprep.mubr.f32.mxu0 0.0
        %822 = vmatmul.mubr.f32.gmra.mrb[0].mxu0 %v504
        %v823 = vpop.f32.mrb[0].mxu0
        %v824 = vadd.f32 0.0, %v823
        %v825 = vpop.f32.mrb[0].mxu0
        %826 = vmatprep.mubr.f32.mxu0 0.0
        %827 = vmatmul.mubr.f32.gmra.mrb[0].mxu0 %v507
        %v828 = vpop.f32.mrb[0].mxu0
        %v829 = vadd.f32 0.0, %v828
        %v830 = vpop.f32.mrb[0].mxu0
        %831 = vmatprep.mubr.f32.mxu0 0.0
        %832 = vmatmul.mubr.f32.gmra.mrb[0].mxu0 %v510
        %v833 = vpop.f32.mrb[0].mxu0
        %v834 = vadd.f32 0.0, %v833
        %v835 = vpop.f32.mrb[0].mxu0
        %836 = vmatprep.mubr.f32.mxu0 0.0
        %837 = vmatmul.mubr.f32.gmra.mrb[0].mxu0 %v513
        %v838 = vpop.f32.mrb[0].mxu0
        %v839 = vadd.f32 0.0, %v838
        %v840 = vpop.f32.mrb[0].mxu0
        %841 = vmatprep.mubr.f32.mxu0 0.0
        %842 = vmatmul.mubr.f32.gmra.mrb[0].mxu0 %v516
        %v843 = vpop.f32.mrb[0].mxu0
        %v844 = vadd.f32 0.0, %v843
        %v845 = vpop.f32.mrb[0].mxu0
        %846 = vmatprep.mubr.f32.mxu0 0.0
        %847 = vmatmul.mubr.f32.gmra.mrb[0].mxu0 %v519
        %v848 = vpop.f32.mrb[0].mxu0
        %v849 = vadd.f32 0.0, %v848
        %v850 = vpop.f32.mrb[0].mxu0
        %851 = vmatprep.mubr.f32.mxu0 0.0
        %852 = vmatmul.mubr.f32.gmra.mrb[0].mxu0 %v522
        %v853 = vpop.f32.mrb[0].mxu0
        %v854 = vadd.f32 0.0, %v853
        %v855 = vpop.f32.mrb[0].mxu0
        %856 = vmatprep.mubr.f32.mxu0 0.0
        %857 = vmatmul.mubr.f32.gmra.mrb[0].mxu0 %v525
        %v858 = vpop.f32.mrb[0].mxu0
        %v859 = vadd.f32 0.0, %v858
        %v860 = vpop.f32.mrb[0].mxu0
        %861 = vmatprep.mubr.f32.mxu0 0.0
        %862 = vmatmul.mubr.f32.gmra.mrb[0].mxu0 %v528
        %v863 = vpop.f32.mrb[0].mxu0
        %v864 = vadd.f32 0.0, %v863
        %v865 = vpop.f32.mrb[0].mxu0
        %866 = vmatprep.mubr.f32.mxu0 0.0
        %867 = vmatmul.mubr.f32.gmra.mrb[0].mxu0 %v531
        %v868 = vpop.f32.mrb[0].mxu0
        %v869 = vadd.f32 0.0, %v868
        %v870 = vpop.f32.mrb[0].mxu0
        %871 = vmatprep.mubr.f32.mxu0 0.0
        %872 = vmatmul.mubr.f32.gmra.mrb[0].mxu0 %v534
        %v873 = vpop.f32.mrb[0].mxu0
        %v874 = vadd.f32 0.0, %v873
        %v875 = vpop.f32.mrb[0].mxu0
        %876 = vmatprep.mubr.f32.mxu0 0.0
        %877 = vmatmul.mubr.f32.gmra.mrb[0].mxu0 %v537
        %v878 = vpop.f32.mrb[0].mxu0
        %v879 = vadd.f32 0.0, %v878
        %v880 = vpop.f32.mrb[0].mxu0
        %881 = vmatprep.mubr.f32.mxu0 0.0
        %882 = vmatmul.mubr.f32.gmra.mrb[0].mxu0 %v540
        %v883 = vpop.f32.mrb[0].mxu0
        %v884 = vadd.f32 0.0, %v883
        %v885 = vpop.f32.mrb[0].mxu0
        %886 = vmatprep.mubr.f32.mxu0 0.0
        %887 = vmatmul.mubr.f32.gmra.mrb[0].mxu0 %v543
        %v888 = vpop.f32.mrb[0].mxu0
        %v889 = vadd.f32 0.0, %v888
        %v890 = vpop.f32.mrb[0].mxu0
        %891 = vmatprep.mubr.f32.mxu0 0.0
        %892 = vmatmul.mubr.f32.gmra.mrb[0].mxu0 %v546
        %v893 = vpop.f32.mrb[0].mxu0
        %v894 = vadd.f32 0.0, %v893
        %v895 = vpop.f32.mrb[0].mxu0
        %896 = vmatprep.mubr.f32.mxu0 0.0
        %897 = vmatmul.mubr.f32.gmra.mrb[0].mxu0 %v549
        %v898 = vpop.f32.mrb[0].mxu0
        %v899 = vadd.f32 0.0, %v898
        %v900 = vpop.f32.mrb[0].mxu0
        %901 = vmatprep.mubr.f32.mxu0 0.0
        %902 = vmatmul.mubr.f32.gmra.mrb[0].mxu0 %v552
        %v903 = vpop.f32.mrb[0].mxu0
        %v904 = vadd.f32 0.0, %v903
        %v905 = vpop.f32.mrb[0].mxu0
        %906 = vmatprep.mubr.f32.mxu0 0.0
        %907 = vmatmul.mubr.f32.gmra.mrb[0].mxu0 %v555
        %v908 = vpop.f32.mrb[0].mxu0
        %v909 = vadd.f32 0.0, %v908
        %v910 = vpop.f32.mrb[0].mxu0
        %911 = vmatprep.mubr.f32.mxu0 0.0
        %912 = vmatmul.mubr.f32.gmra.mrb[0].mxu0 %v558
        %v913 = vpop.f32.mrb[0].mxu0
        %v914 = vadd.f32 0.0, %v913
        %v915 = vpop.f32.mrb[0].mxu0
        %916 = vmatprep.mubr.f32.mxu0 0.0
        %917 = vmatmul.mubr.f32.gmra.mrb[0].mxu0 %v561
        %v918 = vpop.f32.mrb[0].mxu0
        %v919 = vadd.f32 0.0, %v918
        %v920 = vpop.f32.mrb[0].mxu0
        %921 = vmatprep.mubr.f32.mxu0 0.0
        %922 = vmatmul.mubr.f32.gmra.mrb[0].mxu0 %v564
        %v923 = vpop.f32.mrb[0].mxu0
        %v924 = vadd.f32 0.0, %v923
        %v925 = vpop.f32.mrb[0].mxu0
        %926 = vmatprep.mubr.f32.mxu0 0.0
        %927 = vmatmul.mubr.f32.gmra.mrb[0].mxu0 %v567
        %v928 = vpop.f32.mrb[0].mxu0
        %v929 = vadd.f32 0.0, %v928
        %v930 = vpop.f32.mrb[0].mxu0
        %931 = vmatprep.mubr.f32.mxu0 0.0
        %932 = vmatmul.mubr.f32.gmra.mrb[0].mxu0 %v570
        %v933 = vpop.f32.mrb[0].mxu0
        %v934 = vadd.f32 0.0, %v933
        %v935 = vpop.f32.mrb[0].mxu0
        %936 = vmatprep.mubr.f32.mxu0 0.0
        %937 = vmatmul.mubr.f32.gmra.mrb[0].mxu0 %v573
        %v938 = vpop.f32.mrb[0].mxu0
        %v939 = vadd.f32 0.0, %v938
        %v940 = vpop.f32.mrb[0].mxu0
        %941 = vmatprep.mubr.f32.mxu0 0.0
        %942 = vmatmul.mubr.f32.gmra.mrb[0].mxu0 %v576
        %v943 = vpop.f32.mrb[0].mxu0
        %v944 = vadd.f32 0.0, %v943
        %v945 = vpop.f32.mrb[0].mxu0
        %946 = vmatprep.mubr.f32.mxu0 0.0
        %947 = vmatmul.mubr.f32.gmra.mrb[0].mxu0 %v579
        %v948 = vpop.f32.mrb[0].mxu0
        %v949 = vadd.f32 0.0, %v948
        %v950 = vpop.f32.mrb[0].mxu0
        %951 = vmatprep.mubr.f32.mxu0 0.0
        %952 = vmatmul.mubr.f32.gmra.mrb[0].mxu0 %v582
        %v953 = vpop.f32.mrb[0].mxu0
        %v954 = vadd.f32 0.0, %v953
        %v955 = vpop.f32.mrb[0].mxu0
        %956 = vmatprep.mubr.f32.mxu0 0.0
        %957 = vmatmul.mubr.f32.gmra.mrb[0].mxu0 %v585
        %v958 = vpop.f32.mrb[0].mxu0
        %v959 = vadd.f32 0.0, %v958
        %v960 = vpop.f32.mrb[0].mxu0
        %961 = vmatprep.mubr.f32.mxu0 0.0
        %962 = vmatmul.mubr.f32.gmra.mrb[0].mxu0 %v588
        %v963 = vpop.f32.mrb[0].mxu0
        %v964 = vadd.f32 0.0, %v963
        %v965 = vpop.f32.mrb[0].mxu0
        %966 = vmatprep.mubr.f32.mxu0 0.0
        %967 = vmatmul.mubr.f32.gmra.mrb[0].mxu0 %v591
        %v968 = vpop.f32.mrb[0].mxu0
        %v969 = vadd.f32 0.0, %v968
        %v970 = vpop.f32.mrb[0].mxu0
        %971 = vmatprep.mubr.f32.mxu0 0.0
        %972 = vmatmul.mubr.f32.gmra.mrb[0].mxu0 %v594
        %v973 = vpop.f32.mrb[0].mxu0
        %v974 = vadd.f32 0.0, %v973
        %v975 = vpop.f32.mrb[0].mxu0
        %976 = vmatprep.mubr.f32.mxu0 0.0
        %977 = vmatmul.mubr.f32.gmra.mrb[0].mxu0 %v597
        %v978 = vpop.f32.mrb[0].mxu0
        %v979 = vadd.f32 0.0, %v978
        %v980 = vpop.f32.mrb[0].mxu0
        %981 = vmatprep.mubr.f32.mxu0 0.0
        %982 = vmatmul.mubr.f32.gmra.mrb[0].mxu0 %v600
        %v983 = vpop.f32.mrb[0].mxu0
        %v984 = vadd.f32 0.0, %v983
        %v985 = vpop.f32.mrb[0].mxu0
        %986 = vmatprep.mubr.f32.mxu0 0.0
        %987 = vmatmul.mubr.f32.gmra.mrb[0].mxu0 %v603
        %v988 = vpop.f32.mrb[0].mxu0
        %v989 = vadd.f32 0.0, %v988
        %v990 = vpop.f32.mrb[0].mxu0
        %991 = vmatprep.mubr.f32.mxu0 0.0
        %992 = vmatmul.mubr.f32.gmra.mrb[0].mxu0 %v606
        %v993 = vpop.f32.mrb[0].mxu0
        %v994 = vadd.f32 0.0, %v993
        %v995 = vpop.f32.mrb[0].mxu0
        %996 = vdwg.mxu0
        %v997 = vld [vmem:[%s2] sm:$0xff]
        %vm998 = vcmask 64512
        %v1000 = vsel %vm998, %v333, 0
        %v1003 = vsel %vm998, %v334, 0
        %v1006 = vsel %vm998, %v335, 0
        %v1009 = vsel %vm998, %v336, 0
        %v1012 = vsel %vm998, %v337, 0
        %v1015 = vsel %vm998, %v338, 0
        %v1018 = vsel %vm998, %v339, 0
        %v1021 = vsel %vm998, %v340, 0
        %v1024 = vsel %vm998, %v341, 0
        %v1027 = vsel %vm998, %v342, 0
        %v1030 = vsel %vm998, %v343, 0
        %v1033 = vsel %vm998, %v344, 0
        %v1036 = vsel %vm998, %v345, 0
        %v1039 = vsel %vm998, %v346, 0
        %v1042 = vsel %vm998, %v347, 0
        %v1045 = vsel %vm998, %v348, 0
        %1047 = vmatprep.subr.mxu0 0.0
        %1048 = vmatpush1.msra.mxu0 %v997
        %1049 = vmatprep.subr.mxu0 0.0
        %1050 = vmatpush1.msra.mxu0 0.0
        %1051 = vmatprep.subr.mxu0 0.0
        %1052 = vmatpush1.msra.mxu0 0.0
        %1053 = vmatprep.subr.mxu0 0.0
        %1054 = vmatpush1.msra.mxu0 0.0
        %1055 = vmatprep.subr.mxu0 0.0
        %1056 = vmatpush1.msra.mxu0 0.0
        %1057 = vmatprep.subr.mxu0 0.0
        %1058 = vmatpush1.msra.mxu0 0.0
        %1059 = vmatprep.subr.mxu0 0.0
        %1060 = vmatpush1.msra.mxu0 0.0
        %1061 = vmatprep.subr.mxu0 0.0
        %1062 = vmatpush1.msra.mxu0 0.0
        %1063 = vmatprep.subr.mxu0 0.0
        %1064 = vmatpush1.msra.mxu0 0.0
        %1065 = vmatprep.subr.mxu0 0.0
        %1066 = vmatpush1.msra.mxu0 0.0
        %1067 = vmatprep.subr.mxu0 0.0
        %1068 = vmatpush1.msra.mxu0 0.0
        %1069 = vmatprep.subr.mxu0 0.0
        %1070 = vmatpush1.msra.mxu0 0.0
        %1071 = vmatprep.subr.mxu0 0.0
        %1072 = vmatpush1.msra.mxu0 0.0
        %1073 = vmatprep.subr.mxu0 0.0
        %1074 = vmatpush1.msra.mxu0 0.0
        %1075 = vmatprep.subr.mxu0 0.0
        %1076 = vmatpush1.msra.mxu0 0.0
        %1077 = vmatprep.subr.mxu0 0.0
        %1078 = vmatpush1.msra.mxu0 0.0
        %1079 = vmatprep.subr.mxu0 0.0
        %1080 = vmatpush1.msra.mxu0 0.0
        %1081 = vmatprep.subr.mxu0 0.0
        %1082 = vmatpush1.msra.mxu0 0.0
        %1083 = vmatprep.subr.mxu0 0.0
        %1084 = vmatpush1.msra.mxu0 0.0
        %1085 = vmatprep.subr.mxu0 0.0
        %1086 = vmatpush1.msra.mxu0 0.0
        %1087 = vmatprep.subr.mxu0 0.0
        %1088 = vmatpush1.msra.mxu0 0.0
        %1089 = vmatprep.subr.mxu0 0.0
        %1090 = vmatpush1.msra.mxu0 0.0
        %1091 = vmatprep.subr.mxu0 0.0
        %1092 = vmatpush1.msra.mxu0 0.0
        %1093 = vmatprep.subr.mxu0 0.0
        %1094 = vmatpush1.msra.mxu0 0.0
        %1095 = vmatprep.subr.mxu0 0.0
        %1096 = vmatpush1.msra.mxu0 0.0
        %1097 = vmatprep.subr.mxu0 0.0
        %1098 = vmatpush1.msra.mxu0 0.0
        %1099 = vmatprep.subr.mxu0 0.0
        %1100 = vmatpush1.msra.mxu0 0.0
        %1101 = vmatprep.subr.mxu0 0.0
        %1102 = vmatpush1.msra.mxu0 0.0
        %1103 = vmatprep.subr.mxu0 0.0
        %1104 = vmatpush1.msra.mxu0 0.0
        %1105 = vmatprep.subr.mxu0 0.0
        %1106 = vmatpush1.msra.mxu0 0.0
        %1107 = vmatprep.subr.mxu0 0.0
        %1108 = vmatpush1.msra.mxu0 0.0
        %1109 = vmatprep.subr.mxu0 0.0
        %1110 = vmatpush1.msra.mxu0 0.0
        %1111 = vmatprep.mubr.f32.mxu0 0.0
        %1112 = vmatmul.mubr.f32.gmra.mrb[0].mxu0 %v1000
        %v1113 = vpop.f32.mrb[0].mxu0
        %v1114 = vadd.f32 0.0, %v1113
        %v1115 = vpop.f32.mrb[0].mxu0
        %1116 = vmatprep.mubr.f32.mxu0 0.0
        %1117 = vmatmul.mubr.f32.gmra.mrb[0].mxu0 %v1003
        %v1118 = vpop.f32.mrb[0].mxu0
        %v1119 = vadd.f32 0.0, %v1118
        %v1120 = vpop.f32.mrb[0].mxu0
        %1121 = vmatprep.mubr.f32.mxu0 0.0
        %1122 = vmatmul.mubr.f32.gmra.mrb[0].mxu0 %v1006
        %v1123 = vpop.f32.mrb[0].mxu0
        %v1124 = vadd.f32 0.0, %v1123
        %v1125 = vpop.f32.mrb[0].mxu0
        %1126 = vmatprep.mubr.f32.mxu0 0.0
        %1127 = vmatmul.mubr.f32.gmra.mrb[0].mxu0 %v1009
        %v1128 = vpop.f32.mrb[0].mxu0
        %v1129 = vadd.f32 0.0, %v1128
        %v1130 = vpop.f32.mrb[0].mxu0
        %1131 = vmatprep.mubr.f32.mxu0 0.0
        %1132 = vmatmul.mubr.f32.gmra.mrb[0].mxu0 %v1012
        %v1133 = vpop.f32.mrb[0].mxu0
        %v1134 = vadd.f32 0.0, %v1133
        %v1135 = vpop.f32.mrb[0].mxu0
        %1136 = vmatprep.mubr.f32.mxu0 0.0
        %1137 = vmatmul.mubr.f32.gmra.mrb[0].mxu0 %v1015
        %v1138 = vpop.f32.mrb[0].mxu0
        %v1139 = vadd.f32 0.0, %v1138
        %v1140 = vpop.f32.mrb[0].mxu0
        %1141 = vmatprep.mubr.f32.mxu0 0.0
        %1142 = vmatmul.mubr.f32.gmra.mrb[0].mxu0 %v1018
        %v1143 = vpop.f32.mrb[0].mxu0
        %v1144 = vadd.f32 0.0, %v1143
        %v1145 = vpop.f32.mrb[0].mxu0
        %1146 = vmatprep.mubr.f32.mxu0 0.0
        %1147 = vmatmul.mubr.f32.gmra.mrb[0].mxu0 %v1021
        %v1148 = vpop.f32.mrb[0].mxu0
        %v1149 = vadd.f32 0.0, %v1148
        %v1150 = vpop.f32.mrb[0].mxu0
        %1151 = vmatprep.mubr.f32.mxu0 0.0
        %1152 = vmatmul.mubr.f32.gmra.mrb[0].mxu0 %v1024
        %v1153 = vpop.f32.mrb[0].mxu0
        %v1154 = vadd.f32 0.0, %v1153
        %v1155 = vpop.f32.mrb[0].mxu0
        %1156 = vmatprep.mubr.f32.mxu0 0.0
        %1157 = vmatmul.mubr.f32.gmra.mrb[0].mxu0 %v1027
        %v1158 = vpop.f32.mrb[0].mxu0
        %v1159 = vadd.f32 0.0, %v1158
        %v1160 = vpop.f32.mrb[0].mxu0
        %1161 = vmatprep.mubr.f32.mxu0 0.0
        %1162 = vmatmul.mubr.f32.gmra.mrb[0].mxu0 %v1030
        %v1163 = vpop.f32.mrb[0].mxu0
        %v1164 = vadd.f32 0.0, %v1163
        %v1165 = vpop.f32.mrb[0].mxu0
        %1166 = vmatprep.mubr.f32.mxu0 0.0
        %1167 = vmatmul.mubr.f32.gmra.mrb[0].mxu0 %v1033
        %v1168 = vpop.f32.mrb[0].mxu0
        %v1169 = vadd.f32 0.0, %v1168
        %v1170 = vpop.f32.mrb[0].mxu0
        %1171 = vmatprep.mubr.f32.mxu0 0.0
        %1172 = vmatmul.mubr.f32.gmra.mrb[0].mxu0 %v1036
        %v1173 = vpop.f32.mrb[0].mxu0
        %v1174 = vadd.f32 0.0, %v1173
        %v1175 = vpop.f32.mrb[0].mxu0
        %1176 = vmatprep.mubr.f32.mxu0 0.0
        %1177 = vmatmul.mubr.f32.gmra.mrb[0].mxu0 %v1039
        %v1178 = vpop.f32.mrb[0].mxu0
        %v1179 = vadd.f32 0.0, %v1178
        %v1180 = vpop.f32.mrb[0].mxu0
        %1181 = vmatprep.mubr.f32.mxu0 0.0
        %1182 = vmatmul.mubr.f32.gmra.mrb[0].mxu0 %v1042
        %v1183 = vpop.f32.mrb[0].mxu0
        %v1184 = vadd.f32 0.0, %v1183
        %v1185 = vpop.f32.mrb[0].mxu0
        %1186 = vmatprep.mubr.f32.mxu0 0.0
        %1187 = vmatmul.mubr.f32.gmra.mrb[0].mxu0 %v1045
        %v1188 = vpop.f32.mrb[0].mxu0
        %v1189 = vadd.f32 0.0, %v1188
        %v1190 = vpop.f32.mrb[0].mxu0
        %1191 = vdwg.mxu0
        %1208 = vrot.lane.b32.xlu0 %v679, 4
        %v1209 = vpop.permute.xlu0 %1208
        %1210 = vrot.lane.b32.xlu0 %v684, 4
        %v1211 = vpop.permute.xlu0 %1210
        %1212 = vrot.lane.b32.xlu0 %v689, 4
        %v1213 = vpop.permute.xlu0 %1212
        %1214 = vrot.lane.b32.xlu0 %v694, 4
        %v1215 = vpop.permute.xlu0 %1214
        %1216 = vrot.lane.b32.xlu0 %v699, 4
        %v1217 = vpop.permute.xlu0 %1216
        %1218 = vrot.lane.b32.xlu0 %v704, 4
        %v1219 = vpop.permute.xlu0 %1218
        %1220 = vrot.lane.b32.xlu0 %v709, 4
        %v1221 = vpop.permute.xlu0 %1220
        %1222 = vrot.lane.b32.xlu0 %v714, 4
        %v1223 = vpop.permute.xlu0 %1222
        %1224 = vrot.lane.b32.xlu0 %v719, 4
        %v1225 = vpop.permute.xlu0 %1224
        %1226 = vrot.lane.b32.xlu0 %v724, 4
        %v1227 = vpop.permute.xlu0 %1226
        %1228 = vrot.lane.b32.xlu0 %v729, 4
        %v1229 = vpop.permute.xlu0 %1228
        %1230 = vrot.lane.b32.xlu0 %v734, 4
        %v1231 = vpop.permute.xlu0 %1230
        %1232 = vrot.lane.b32.xlu0 %v739, 4
        %v1233 = vpop.permute.xlu0 %1232
        %1234 = vrot.lane.b32.xlu0 %v744, 4
        %v1235 = vpop.permute.xlu0 %1234
        %1236 = vrot.lane.b32.xlu0 %v749, 4
        %v1237 = vpop.permute.xlu0 %1236
        %1238 = vrot.lane.b32.xlu0 %v754, 4
        %v1239 = vpop.permute.xlu0 %1238
        %v1256 = vsel %vm415, %v1114, %v1209
        %v1257 = vsel %vm415, %v1119, %v1211
        %v1258 = vsel %vm415, %v1124, %v1213
        %v1259 = vsel %vm415, %v1129, %v1215
        %v1260 = vsel %vm415, %v1134, %v1217
        %v1261 = vsel %vm415, %v1139, %v1219
        %v1262 = vsel %vm415, %v1144, %v1221
        %v1263 = vsel %vm415, %v1149, %v1223
        %v1264 = vsel %vm415, %v1154, %v1225
        %v1265 = vsel %vm415, %v1159, %v1227
        %v1266 = vsel %vm415, %v1164, %v1229
        %v1267 = vsel %vm415, %v1169, %v1231
        %v1268 = vsel %vm415, %v1174, %v1233
        %v1269 = vsel %vm415, %v1179, %v1235
        %v1270 = vsel %vm415, %v1184, %v1237
        %v1271 = vsel %vm415, %v1189, %v1239
        %v1273 = vlaneseq
        %v1274 = vshrl.u32 %v1273, 7
        %v1275 = vsub.s32 0, %v1274
        %v1276 = vrot.slane %v349, %v1275
        %v1278 = vadd.f32 %v1256, %v1276
        %v1279 = vadd.f32 %v1257, %v1276
        %v1280 = vadd.f32 %v1258, %v1276
        %v1281 = vadd.f32 %v1259, %v1276
        %v1282 = vadd.f32 %v1260, %v1276
        %v1283 = vadd.f32 %v1261, %v1276
        %v1284 = vadd.f32 %v1262, %v1276
        %v1285 = vadd.f32 %v1263, %v1276
        %v1286 = vadd.f32 %v1264, %v1276
        %v1287 = vadd.f32 %v1265, %v1276
        %v1288 = vadd.f32 %v1266, %v1276
        %v1289 = vadd.f32 %v1267, %v1276
        %v1290 = vadd.f32 %v1268, %v1276
        %v1291 = vadd.f32 %v1269, %v1276
        %v1292 = vadd.f32 %v1270, %v1276
        %v1293 = vadd.f32 %v1271, %v1276
        %v1294 = vmax.f32 %v1278, 0.0
        %v1295 = vmax.f32 %v1279, 0.0
        %v1296 = vmax.f32 %v1280, 0.0
        %v1297 = vmax.f32 %v1281, 0.0
        %v1298 = vmax.f32 %v1282, 0.0
        %v1299 = vmax.f32 %v1283, 0.0
        %v1300 = vmax.f32 %v1284, 0.0
        %v1301 = vmax.f32 %v1285, 0.0
        %v1302 = vmax.f32 %v1286, 0.0
        %v1303 = vmax.f32 %v1287, 0.0
        %v1304 = vmax.f32 %v1288, 0.0
        %v1305 = vmax.f32 %v1289, 0.0
        %v1306 = vmax.f32 %v1290, 0.0
        %v1307 = vmax.f32 %v1291, 0.0
        %v1308 = vmax.f32 %v1292, 0.0
        %v1309 = vmax.f32 %v1293, 0.0
        %s1310 = smul.u32 %s22, 512
        %s1311 = scalar_lea.vmem [#allocation2], %s1310
        %1312 = vst.msk [vmem:[%s1311] sm:$0xff] %vm998, %v1294
        %1313 = vst.msk [vmem:[%s1311 + $0x8] sm:$0xff] %vm998, %v1295
        %1314 = vst.msk [vmem:[%s1311 + $0x10] sm:$0xff] %vm998, %v1296
        %1315 = vst.msk [vmem:[%s1311 + $0x18] sm:$0xff] %vm998, %v1297
        %1316 = vst.msk [vmem:[%s1311 + $0x20] sm:$0xff] %vm998, %v1298
        %1317 = vst.msk [vmem:[%s1311 + $0x28] sm:$0xff] %vm998, %v1299
        %1318 = vst.msk [vmem:[%s1311 + $0x30] sm:$0xff] %vm998, %v1300
        %1319 = vst.msk [vmem:[%s1311 + $0x38] sm:$0xff] %vm998, %v1301
        %1320 = vst.msk [vmem:[%s1311 + $0x40] sm:$0xff] %vm998, %v1302
        %1321 = vst.msk [vmem:[%s1311 + $0x48] sm:$0xff] %vm998, %v1303
        %1322 = vst.msk [vmem:[%s1311 + $0x50] sm:$0xff] %vm998, %v1304
        %1323 = vst.msk [vmem:[%s1311 + $0x58] sm:$0xff] %vm998, %v1305
        %1324 = vst.msk [vmem:[%s1311 + $0x60] sm:$0xff] %vm998, %v1306
        %1325 = vst.msk [vmem:[%s1311 + $0x68] sm:$0xff] %vm998, %v1307
        %1326 = vst.msk [vmem:[%s1311 + $0x70] sm:$0xff] %vm998, %v1308
        %1327 = vst.msk [vmem:[%s1311 + $0x78] sm:$0xff] %vm998, %v1309
        %v1328 = vsel %vm998, %v1294, 0.0
        %v1329 = vsel %vm998, %v1295, 0.0
        %v1330 = vadd.f32 %v1328, %v1329
        %v1331 = vsel %vm998, %v1296, 0.0
        %v1332 = vadd.f32 %v1330, %v1331
        %v1333 = vsel %vm998, %v1297, 0.0
        %v1334 = vadd.f32 %v1332, %v1333
        %v1335 = vsel %vm998, %v1298, 0.0
        %v1336 = vadd.f32 %v1334, %v1335
        %v1337 = vsel %vm998, %v1299, 0.0
        %v1338 = vadd.f32 %v1336, %v1337
        %v1339 = vsel %vm998, %v1300, 0.0
        %v1340 = vadd.f32 %v1338, %v1339
        %v1341 = vsel %vm998, %v1301, 0.0
        %v1342 = vadd.f32 %v1340, %v1341
        %v1343 = vsel %vm998, %v1302, 0.0
        %v1344 = vadd.f32 %v1342, %v1343
        %v1345 = vsel %vm998, %v1303, 0.0
        %v1346 = vadd.f32 %v1344, %v1345
        %v1347 = vsel %vm998, %v1304, 0.0
        %v1348 = vadd.f32 %v1346, %v1347
        %v1349 = vsel %vm998, %v1305, 0.0
        %v1350 = vadd.f32 %v1348, %v1349
        %v1351 = vsel %vm998, %v1306, 0.0
        %v1352 = vadd.f32 %v1350, %v1351
        %v1353 = vsel %vm998, %v1307, 0.0
        %v1354 = vadd.f32 %v1352, %v1353
        %v1355 = vsel %vm998, %v1308, 0.0
        %v1356 = vadd.f32 %v1354, %v1355
        %v1357 = vsel %vm998, %v1309, 0.0
        %v1358 = vadd.f32 %v1356, %v1357
        %v1359 = vrot.slane %v1358, 4
        %v1360 = vadd.f32 %v1358, %v1359
        %v1361 = vrot.slane %v1360, 2
        %v1362 = vadd.f32 %v1360, %v1361
        %v1363 = vrot.slane %v1362, 1
        %v1364 = vadd.f32 %v1362, %v1363
        %v1365 = vadd.f32 %v1364, 0.0
        %v1366 = vmul.f32 %v1294, %v1294
        %v1367 = vmul.f32 %v1295, %v1295
        %v1368 = vmul.f32 %v1296, %v1296
        %v1369 = vmul.f32 %v1297, %v1297
        %v1370 = vmul.f32 %v1298, %v1298
        %v1371 = vmul.f32 %v1299, %v1299
        %v1372 = vmul.f32 %v1300, %v1300
        %v1373 = vmul.f32 %v1301, %v1301
        %v1374 = vmul.f32 %v1302, %v1302
        %v1375 = vmul.f32 %v1303, %v1303
        %v1376 = vmul.f32 %v1304, %v1304
        %v1377 = vmul.f32 %v1305, %v1305
        %v1378 = vmul.f32 %v1306, %v1306
        %v1379 = vmul.f32 %v1307, %v1307
        %v1380 = vmul.f32 %v1308, %v1308
        %v1381 = vmul.f32 %v1309, %v1309
        %v1382 = vsel %vm998, %v1366, 0.0
        %v1383 = vsel %vm998, %v1367, 0.0
        %v1384 = vadd.f32 %v1382, %v1383
        %v1385 = vsel %vm998, %v1368, 0.0
        %v1386 = vadd.f32 %v1384, %v1385
        %v1387 = vsel %vm998, %v1369, 0.0
        %v1388 = vadd.f32 %v1386, %v1387
        %v1389 = vsel %vm998, %v1370, 0.0
        %v1390 = vadd.f32 %v1388, %v1389
        %v1391 = vsel %vm998, %v1371, 0.0
        %v1392 = vadd.f32 %v1390, %v1391
        %v1393 = vsel %vm998, %v1372, 0.0
        %v1394 = vadd.f32 %v1392, %v1393
        %v1395 = vsel %vm998, %v1373, 0.0
        %v1396 = vadd.f32 %v1394, %v1395
        %v1397 = vsel %vm998, %v1374, 0.0
        %v1398 = vadd.f32 %v1396, %v1397
        %v1399 = vsel %vm998, %v1375, 0.0
        %v1400 = vadd.f32 %v1398, %v1399
        %v1401 = vsel %vm998, %v1376, 0.0
        %v1402 = vadd.f32 %v1400, %v1401
        %v1403 = vsel %vm998, %v1377, 0.0
        %v1404 = vadd.f32 %v1402, %v1403
        %v1405 = vsel %vm998, %v1378, 0.0
        %v1406 = vadd.f32 %v1404, %v1405
        %v1407 = vsel %vm998, %v1379, 0.0
        %v1408 = vadd.f32 %v1406, %v1407
        %v1409 = vsel %vm998, %v1380, 0.0
        %v1410 = vadd.f32 %v1408, %v1409
        %v1411 = vsel %vm998, %v1381, 0.0
        %v1412 = vadd.f32 %v1410, %v1411
        %v1413 = vrot.slane %v1412, 4
        %v1414 = vadd.f32 %v1412, %v1413
        %v1415 = vrot.slane %v1414, 2
        %v1416 = vadd.f32 %v1414, %v1415
        %v1417 = vrot.slane %v1416, 1
        %v1418 = vadd.f32 %v1416, %v1417
        %v1419 = vadd.f32 %v1418, 0.0
        %s1420 = scalar_lea.vmem %s2, 8
        %v1421 = vld [vmem:[%s1420] sm:$0xff]
        %1422 = vmatprep.subr.mxu0 0.0
        %1423 = vmatpush1.msra.mxu0 %v1421
        %1424 = vmatprep.subr.mxu0 0.0
        %1425 = vmatpush1.msra.mxu0 0.0
        %1426 = vmatprep.subr.mxu0 0.0
        %1427 = vmatpush1.msra.mxu0 0.0
        %1428 = vmatprep.subr.mxu0 0.0
        %1429 = vmatpush1.msra.mxu0 0.0
        %1430 = vmatprep.subr.mxu0 0.0
        %1431 = vmatpush1.msra.mxu0 0.0
        %1432 = vmatprep.subr.mxu0 0.0
        %1433 = vmatpush1.msra.mxu0 0.0
        %1434 = vmatprep.subr.mxu0 0.0
        %1435 = vmatpush1.msra.mxu0 0.0
        %1436 = vmatprep.subr.mxu0 0.0
        %1437 = vmatpush1.msra.mxu0 0.0
        %1438 = vmatprep.subr.mxu0 0.0
        %1439 = vmatpush1.msra.mxu0 0.0
        %1440 = vmatprep.subr.mxu0 0.0
        %1441 = vmatpush1.msra.mxu0 0.0
        %1442 = vmatprep.subr.mxu0 0.0
        %1443 = vmatpush1.msra.mxu0 0.0
        %1444 = vmatprep.subr.mxu0 0.0
        %1445 = vmatpush1.msra.mxu0 0.0
        %1446 = vmatprep.subr.mxu0 0.0
        %1447 = vmatpush1.msra.mxu0 0.0
        %1448 = vmatprep.subr.mxu0 0.0
        %1449 = vmatpush1.msra.mxu0 0.0
        %1450 = vmatprep.subr.mxu0 0.0
        %1451 = vmatpush1.msra.mxu0 0.0
        %1452 = vmatprep.subr.mxu0 0.0
        %1453 = vmatpush1.msra.mxu0 0.0
        %1454 = vmatprep.subr.mxu0 0.0
        %1455 = vmatpush1.msra.mxu0 0.0
        %1456 = vmatprep.subr.mxu0 0.0
        %1457 = vmatpush1.msra.mxu0 0.0
        %1458 = vmatprep.subr.mxu0 0.0
        %1459 = vmatpush1.msra.mxu0 0.0
        %1460 = vmatprep.subr.mxu0 0.0
        %1461 = vmatpush1.msra.mxu0 0.0
        %1462 = vmatprep.subr.mxu0 0.0
        %1463 = vmatpush1.msra.mxu0 0.0
        %1464 = vmatprep.subr.mxu0 0.0
        %1465 = vmatpush1.msra.mxu0 0.0
        %1466 = vmatprep.subr.mxu0 0.0
        %1467 = vmatpush1.msra.mxu0 0.0
        %1468 = vmatprep.subr.mxu0 0.0
        %1469 = vmatpush1.msra.mxu0 0.0
        %1470 = vmatprep.subr.mxu0 0.0
        %1471 = vmatpush1.msra.mxu0 0.0
        %1472 = vmatprep.subr.mxu0 0.0
        %1473 = vmatpush1.msra.mxu0 0.0
        %1474 = vmatprep.subr.mxu0 0.0
        %1475 = vmatpush1.msra.mxu0 0.0
        %1476 = vmatprep.subr.mxu0 0.0
        %1477 = vmatpush1.msra.mxu0 0.0
        %1478 = vmatprep.subr.mxu0 0.0
        %1479 = vmatpush1.msra.mxu0 0.0
        %1480 = vmatprep.subr.mxu0 0.0
        %1481 = vmatpush1.msra.mxu0 0.0
        %1482 = vmatprep.subr.mxu0 0.0
        %1483 = vmatpush1.msra.mxu0 0.0
        %1484 = vmatprep.subr.mxu0 0.0
        %1485 = vmatpush1.msra.mxu0 0.0
        %1486 = vmatprep.mubr.f32.mxu0 0.0
        %1487 = vmatmul.mubr.f32.gmra.mrb[0].mxu0 %v1000
        %v1488 = vpop.f32.mrb[0].mxu0
        %v1489 = vadd.f32 0.0, %v1488
        %v1490 = vpop.f32.mrb[0].mxu0
        %1491 = vmatprep.mubr.f32.mxu0 0.0
        %1492 = vmatmul.mubr.f32.gmra.mrb[0].mxu0 %v1003
        %v1493 = vpop.f32.mrb[0].mxu0
        %v1494 = vadd.f32 0.0, %v1493
        %v1495 = vpop.f32.mrb[0].mxu0
        %1496 = vmatprep.mubr.f32.mxu0 0.0
        %1497 = vmatmul.mubr.f32.gmra.mrb[0].mxu0 %v1006
        %v1498 = vpop.f32.mrb[0].mxu0
        %v1499 = vadd.f32 0.0, %v1498
        %v1500 = vpop.f32.mrb[0].mxu0
        %1501 = vmatprep.mubr.f32.mxu0 0.0
        %1502 = vmatmul.mubr.f32.gmra.mrb[0].mxu0 %v1009
        %v1503 = vpop.f32.mrb[0].mxu0
        %v1504 = vadd.f32 0.0, %v1503
        %v1505 = vpop.f32.mrb[0].mxu0
        %1506 = vmatprep.mubr.f32.mxu0 0.0
        %1507 = vmatmul.mubr.f32.gmra.mrb[0].mxu0 %v1012
        %v1508 = vpop.f32.mrb[0].mxu0
        %v1509 = vadd.f32 0.0, %v1508
        %v1510 = vpop.f32.mrb[0].mxu0
        %1511 = vmatprep.mubr.f32.mxu0 0.0
        %1512 = vmatmul.mubr.f32.gmra.mrb[0].mxu0 %v1015
        %v1513 = vpop.f32.mrb[0].mxu0
        %v1514 = vadd.f32 0.0, %v1513
        %v1515 = vpop.f32.mrb[0].mxu0
        %1516 = vmatprep.mubr.f32.mxu0 0.0
        %1517 = vmatmul.mubr.f32.gmra.mrb[0].mxu0 %v1018
        %v1518 = vpop.f32.mrb[0].mxu0
        %v1519 = vadd.f32 0.0, %v1518
        %v1520 = vpop.f32.mrb[0].mxu0
        %1521 = vmatprep.mubr.f32.mxu0 0.0
        %1522 = vmatmul.mubr.f32.gmra.mrb[0].mxu0 %v1021
        %v1523 = vpop.f32.mrb[0].mxu0
        %v1524 = vadd.f32 0.0, %v1523
        %v1525 = vpop.f32.mrb[0].mxu0
        %1526 = vmatprep.mubr.f32.mxu0 0.0
        %1527 = vmatmul.mubr.f32.gmra.mrb[0].mxu0 %v1024
        %v1528 = vpop.f32.mrb[0].mxu0
        %v1529 = vadd.f32 0.0, %v1528
        %v1530 = vpop.f32.mrb[0].mxu0
        %1531 = vmatprep.mubr.f32.mxu0 0.0
        %1532 = vmatmul.mubr.f32.gmra.mrb[0].mxu0 %v1027
        %v1533 = vpop.f32.mrb[0].mxu0
        %v1534 = vadd.f32 0.0, %v1533
        %v1535 = vpop.f32.mrb[0].mxu0
        %1536 = vmatprep.mubr.f32.mxu0 0.0
        %1537 = vmatmul.mubr.f32.gmra.mrb[0].mxu0 %v1030
        %v1538 = vpop.f32.mrb[0].mxu0
        %v1539 = vadd.f32 0.0, %v1538
        %v1540 = vpop.f32.mrb[0].mxu0
        %1541 = vmatprep.mubr.f32.mxu0 0.0
        %1542 = vmatmul.mubr.f32.gmra.mrb[0].mxu0 %v1033
        %v1543 = vpop.f32.mrb[0].mxu0
        %v1544 = vadd.f32 0.0, %v1543
        %v1545 = vpop.f32.mrb[0].mxu0
        %1546 = vmatprep.mubr.f32.mxu0 0.0
        %1547 = vmatmul.mubr.f32.gmra.mrb[0].mxu0 %v1036
        %v1548 = vpop.f32.mrb[0].mxu0
        %v1549 = vadd.f32 0.0, %v1548
        %v1550 = vpop.f32.mrb[0].mxu0
        %1551 = vmatprep.mubr.f32.mxu0 0.0
        %1552 = vmatmul.mubr.f32.gmra.mrb[0].mxu0 %v1039
        %v1553 = vpop.f32.mrb[0].mxu0
        %v1554 = vadd.f32 0.0, %v1553
        %v1555 = vpop.f32.mrb[0].mxu0
        %1556 = vmatprep.mubr.f32.mxu0 0.0
        %1557 = vmatmul.mubr.f32.gmra.mrb[0].mxu0 %v1042
        %v1558 = vpop.f32.mrb[0].mxu0
        %v1559 = vadd.f32 0.0, %v1558
        %v1560 = vpop.f32.mrb[0].mxu0
        %1561 = vmatprep.mubr.f32.mxu0 0.0
        %1562 = vmatmul.mubr.f32.gmra.mrb[0].mxu0 %v1045
        %v1563 = vpop.f32.mrb[0].mxu0
        %v1564 = vadd.f32 0.0, %v1563
        %v1565 = vpop.f32.mrb[0].mxu0
        %1566 = vdwg.mxu0
        %1583 = vrot.lane.b32.xlu0 %v759, 4
        %v1584 = vpop.permute.xlu0 %1583
        %1585 = vrot.lane.b32.xlu0 %v764, 4
        %v1586 = vpop.permute.xlu0 %1585
        %1587 = vrot.lane.b32.xlu0 %v769, 4
        %v1588 = vpop.permute.xlu0 %1587
        %1589 = vrot.lane.b32.xlu0 %v774, 4
        %v1590 = vpop.permute.xlu0 %1589
        %1591 = vrot.lane.b32.xlu0 %v779, 4
        %v1592 = vpop.permute.xlu0 %1591
        %1593 = vrot.lane.b32.xlu0 %v784, 4
        %v1594 = vpop.permute.xlu0 %1593
        %1595 = vrot.lane.b32.xlu0 %v789, 4
        %v1596 = vpop.permute.xlu0 %1595
        %1597 = vrot.lane.b32.xlu0 %v794, 4
        %v1598 = vpop.permute.xlu0 %1597
        %1599 = vrot.lane.b32.xlu0 %v799, 4
        %v1600 = vpop.permute.xlu0 %1599
        %1601 = vrot.lane.b32.xlu0 %v804, 4
        %v1602 = vpop.permute.xlu0 %1601
        %1603 = vrot.lane.b32.xlu0 %v809, 4
        %v1604 = vpop.permute.xlu0 %1603
        %1605 = vrot.lane.b32.xlu0 %v814, 4
        %v1606 = vpop.permute.xlu0 %1605
        %1607 = vrot.lane.b32.xlu0 %v819, 4
        %v1608 = vpop.permute.xlu0 %1607
        %1609 = vrot.lane.b32.xlu0 %v824, 4
        %v1610 = vpop.permute.xlu0 %1609
        %1611 = vrot.lane.b32.xlu0 %v829, 4
        %v1612 = vpop.permute.xlu0 %1611
        %1613 = vrot.lane.b32.xlu0 %v834, 4
        %v1614 = vpop.permute.xlu0 %1613
        %v1631 = vsel %vm415, %v1489, %v1584
        %v1632 = vsel %vm415, %v1494, %v1586
        %v1633 = vsel %vm415, %v1499, %v1588
        %v1634 = vsel %vm415, %v1504, %v1590
        %v1635 = vsel %vm415, %v1509, %v1592
        %v1636 = vsel %vm415, %v1514, %v1594
        %v1637 = vsel %vm415, %v1519, %v1596
        %v1638 = vsel %vm415, %v1524, %v1598
        %v1639 = vsel %vm415, %v1529, %v1600
        %v1640 = vsel %vm415, %v1534, %v1602
        %v1641 = vsel %vm415, %v1539, %v1604
        %v1642 = vsel %vm415, %v1544, %v1606
        %v1643 = vsel %vm415, %v1549, %v1608
        %v1644 = vsel %vm415, %v1554, %v1610
        %v1645 = vsel %vm415, %v1559, %v1612
        %v1646 = vsel %vm415, %v1564, %v1614
        %v1647 = vadd.f32 %v1631, %v1276
        %v1648 = vadd.f32 %v1632, %v1276
        %v1649 = vadd.f32 %v1633, %v1276
        %v1650 = vadd.f32 %v1634, %v1276
        %v1651 = vadd.f32 %v1635, %v1276
        %v1652 = vadd.f32 %v1636, %v1276
        %v1653 = vadd.f32 %v1637, %v1276
        %v1654 = vadd.f32 %v1638, %v1276
        %v1655 = vadd.f32 %v1639, %v1276
        %v1656 = vadd.f32 %v1640, %v1276
        %v1657 = vadd.f32 %v1641, %v1276
        %v1658 = vadd.f32 %v1642, %v1276
        %v1659 = vadd.f32 %v1643, %v1276
        %v1660 = vadd.f32 %v1644, %v1276
        %v1661 = vadd.f32 %v1645, %v1276
        %v1662 = vadd.f32 %v1646, %v1276
        %v1663 = vmax.f32 %v1647, 0.0
        %v1664 = vmax.f32 %v1648, 0.0
        %v1665 = vmax.f32 %v1649, 0.0
        %v1666 = vmax.f32 %v1650, 0.0
        %v1667 = vmax.f32 %v1651, 0.0
        %v1668 = vmax.f32 %v1652, 0.0
        %v1669 = vmax.f32 %v1653, 0.0
        %v1670 = vmax.f32 %v1654, 0.0
        %v1671 = vmax.f32 %v1655, 0.0
        %v1672 = vmax.f32 %v1656, 0.0
        %v1673 = vmax.f32 %v1657, 0.0
        %v1674 = vmax.f32 %v1658, 0.0
        %v1675 = vmax.f32 %v1659, 0.0
        %v1676 = vmax.f32 %v1660, 0.0
        %v1677 = vmax.f32 %v1661, 0.0
        %v1678 = vmax.f32 %v1662, 0.0
        %s1679 = sadd.s32 128, %s1310
        %s1680 = scalar_lea.vmem [#allocation2], %s1679
        %1681 = vst.msk [vmem:[%s1680] sm:$0xff] %vm998, %v1663
        %1682 = vst.msk [vmem:[%s1680 + $0x8] sm:$0xff] %vm998, %v1664
        %1683 = vst.msk [vmem:[%s1680 + $0x10] sm:$0xff] %vm998, %v1665
        %1684 = vst.msk [vmem:[%s1680 + $0x18] sm:$0xff] %vm998, %v1666
        %1685 = vst.msk [vmem:[%s1680 + $0x20] sm:$0xff] %vm998, %v1667
        %1686 = vst.msk [vmem:[%s1680 + $0x28] sm:$0xff] %vm998, %v1668
        %1687 = vst.msk [vmem:[%s1680 + $0x30] sm:$0xff] %vm998, %v1669
        %1688 = vst.msk [vmem:[%s1680 + $0x38] sm:$0xff] %vm998, %v1670
        %1689 = vst.msk [vmem:[%s1680 + $0x40] sm:$0xff] %vm998, %v1671
        %1690 = vst.msk [vmem:[%s1680 + $0x48] sm:$0xff] %vm998, %v1672
        %1691 = vst.msk [vmem:[%s1680 + $0x50] sm:$0xff] %vm998, %v1673
        %1692 = vst.msk [vmem:[%s1680 + $0x58] sm:$0xff] %vm998, %v1674
        %1693 = vst.msk [vmem:[%s1680 + $0x60] sm:$0xff] %vm998, %v1675
        %1694 = vst.msk [vmem:[%s1680 + $0x68] sm:$0xff] %vm998, %v1676
        %1695 = vst.msk [vmem:[%s1680 + $0x70] sm:$0xff] %vm998, %v1677
        %1696 = vst.msk [vmem:[%s1680 + $0x78] sm:$0xff] %vm998, %v1678
        %v1697 = vsel %vm998, %v1663, 0.0
        %v1698 = vsel %vm998, %v1664, 0.0
        %v1699 = vadd.f32 %v1697, %v1698
        %v1700 = vsel %vm998, %v1665, 0.0
        %v1701 = vadd.f32 %v1699, %v1700
        %v1702 = vsel %vm998, %v1666, 0.0
        %v1703 = vadd.f32 %v1701, %v1702
        %v1704 = vsel %vm998, %v1667, 0.0
        %v1705 = vadd.f32 %v1703, %v1704
        %v1706 = vsel %vm998, %v1668, 0.0
        %v1707 = vadd.f32 %v1705, %v1706
        %v1708 = vsel %vm998, %v1669, 0.0
        %v1709 = vadd.f32 %v1707, %v1708
        %v1710 = vsel %vm998, %v1670, 0.0
        %v1711 = vadd.f32 %v1709, %v1710
        %v1712 = vsel %vm998, %v1671, 0.0
        %v1713 = vadd.f32 %v1711, %v1712
        %v1714 = vsel %vm998, %v1672, 0.0
        %v1715 = vadd.f32 %v1713, %v1714
        %v1716 = vsel %vm998, %v1673, 0.0
        %v1717 = vadd.f32 %v1715, %v1716
        %v1718 = vsel %vm998, %v1674, 0.0
        %v1719 = vadd.f32 %v1717, %v1718
        %v1720 = vsel %vm998, %v1675, 0.0
        %v1721 = vadd.f32 %v1719, %v1720
        %v1722 = vsel %vm998, %v1676, 0.0
        %v1723 = vadd.f32 %v1721, %v1722
        %v1724 = vsel %vm998, %v1677, 0.0
        %v1725 = vadd.f32 %v1723, %v1724
        %v1726 = vsel %vm998, %v1678, 0.0
        %v1727 = vadd.f32 %v1725, %v1726
        %v1728 = vrot.slane %v1727, 4
        %v1729 = vadd.f32 %v1727, %v1728
        %v1730 = vrot.slane %v1729, 2
        %v1731 = vadd.f32 %v1729, %v1730
        %v1732 = vrot.slane %v1731, 1
        %v1733 = vadd.f32 %v1731, %v1732
        %v1734 = vadd.f32 %v1365, %v1733
        %v1735 = vmul.f32 %v1663, %v1663
        %v1736 = vmul.f32 %v1664, %v1664
        %v1737 = vmul.f32 %v1665, %v1665
        %v1738 = vmul.f32 %v1666, %v1666
        %v1739 = vmul.f32 %v1667, %v1667
        %v1740 = vmul.f32 %v1668, %v1668
        %v1741 = vmul.f32 %v1669, %v1669
        %v1742 = vmul.f32 %v1670, %v1670
        %v1743 = vmul.f32 %v1671, %v1671
        %v1744 = vmul.f32 %v1672, %v1672
        %v1745 = vmul.f32 %v1673, %v1673
        %v1746 = vmul.f32 %v1674, %v1674
        %v1747 = vmul.f32 %v1675, %v1675
        %v1748 = vmul.f32 %v1676, %v1676
        %v1749 = vmul.f32 %v1677, %v1677
        %v1750 = vmul.f32 %v1678, %v1678
        %v1751 = vsel %vm998, %v1735, 0.0
        %v1752 = vsel %vm998, %v1736, 0.0
        %v1753 = vadd.f32 %v1751, %v1752
        %v1754 = vsel %vm998, %v1737, 0.0
        %v1755 = vadd.f32 %v1753, %v1754
        %v1756 = vsel %vm998, %v1738, 0.0
        %v1757 = vadd.f32 %v1755, %v1756
        %v1758 = vsel %vm998, %v1739, 0.0
        %v1759 = vadd.f32 %v1757, %v1758
        %v1760 = vsel %vm998, %v1740, 0.0
        %v1761 = vadd.f32 %v1759, %v1760
        %v1762 = vsel %vm998, %v1741, 0.0
        %v1763 = vadd.f32 %v1761, %v1762
        %v1764 = vsel %vm998, %v1742, 0.0
        %v1765 = vadd.f32 %v1763, %v1764
        %v1766 = vsel %vm998, %v1743, 0.0
        %v1767 = vadd.f32 %v1765, %v1766
        %v1768 = vsel %vm998, %v1744, 0.0
        %v1769 = vadd.f32 %v1767, %v1768
        %v1770 = vsel %vm998, %v1745, 0.0
        %v1771 = vadd.f32 %v1769, %v1770
        %v1772 = vsel %vm998, %v1746, 0.0
        %v1773 = vadd.f32 %v1771, %v1772
        %v1774 = vsel %vm998, %v1747, 0.0
        %v1775 = vadd.f32 %v1773, %v1774
        %v1776 = vsel %vm998, %v1748, 0.0
        %v1777 = vadd.f32 %v1775, %v1776
        %v1778 = vsel %vm998, %v1749, 0.0
        %v1779 = vadd.f32 %v1777, %v1778
        %v1780 = vsel %vm998, %v1750, 0.0
        %v1781 = vadd.f32 %v1779, %v1780
        %v1782 = vrot.slane %v1781, 4
        %v1783 = vadd.f32 %v1781, %v1782
        %v1784 = vrot.slane %v1783, 2
        %v1785 = vadd.f32 %v1783, %v1784
        %v1786 = vrot.slane %v1785, 1
        %v1787 = vadd.f32 %v1785, %v1786
        %v1788 = vadd.f32 %v1419, %v1787
        %s1789 = scalar_lea.vmem %s2, 16
        %v1790 = vld [vmem:[%s1789] sm:$0xff]
        %1791 = vmatprep.subr.mxu0 0.0
        %1792 = vmatpush1.msra.mxu0 %v1790
        %1793 = vmatprep.subr.mxu0 0.0
        %1794 = vmatpush1.msra.mxu0 0.0
        %1795 = vmatprep.subr.mxu0 0.0
        %1796 = vmatpush1.msra.mxu0 0.0
        %1797 = vmatprep.subr.mxu0 0.0
        %1798 = vmatpush1.msra.mxu0 0.0
        %1799 = vmatprep.subr.mxu0 0.0
        %1800 = vmatpush1.msra.mxu0 0.0
        %1801 = vmatprep.subr.mxu0 0.0
        %1802 = vmatpush1.msra.mxu0 0.0
        %1803 = vmatprep.subr.mxu0 0.0
        %1804 = vmatpush1.msra.mxu0 0.0
        %1805 = vmatprep.subr.mxu0 0.0
        %1806 = vmatpush1.msra.mxu0 0.0
        %1807 = vmatprep.subr.mxu0 0.0
        %1808 = vmatpush1.msra.mxu0 0.0
        %1809 = vmatprep.subr.mxu0 0.0
        %1810 = vmatpush1.msra.mxu0 0.0
        %1811 = vmatprep.subr.mxu0 0.0
        %1812 = vmatpush1.msra.mxu0 0.0
        %1813 = vmatprep.subr.mxu0 0.0
        %1814 = vmatpush1.msra.mxu0 0.0
        %1815 = vmatprep.subr.mxu0 0.0
        %1816 = vmatpush1.msra.mxu0 0.0
        %1817 = vmatprep.subr.mxu0 0.0
        %1818 = vmatpush1.msra.mxu0 0.0
        %1819 = vmatprep.subr.mxu0 0.0
        %1820 = vmatpush1.msra.mxu0 0.0
        %1821 = vmatprep.subr.mxu0 0.0
        %1822 = vmatpush1.msra.mxu0 0.0
        %1823 = vmatprep.subr.mxu0 0.0
        %1824 = vmatpush1.msra.mxu0 0.0
        %1825 = vmatprep.subr.mxu0 0.0
        %1826 = vmatpush1.msra.mxu0 0.0
        %1827 = vmatprep.subr.mxu0 0.0
        %1828 = vmatpush1.msra.mxu0 0.0
        %1829 = vmatprep.subr.mxu0 0.0
        %1830 = vmatpush1.msra.mxu0 0.0
        %1831 = vmatprep.subr.mxu0 0.0
        %1832 = vmatpush1.msra.mxu0 0.0
        %1833 = vmatprep.subr.mxu0 0.0
        %1834 = vmatpush1.msra.mxu0 0.0
        %1835 = vmatprep.subr.mxu0 0.0
        %1836 = vmatpush1.msra.mxu0 0.0
        %1837 = vmatprep.subr.mxu0 0.0
        %1838 = vmatpush1.msra.mxu0 0.0
        %1839 = vmatprep.subr.mxu0 0.0
        %1840 = vmatpush1.msra.mxu0 0.0
        %1841 = vmatprep.subr.mxu0 0.0
        %1842 = vmatpush1.msra.mxu0 0.0
        %1843 = vmatprep.subr.mxu0 0.0
        %1844 = vmatpush1.msra.mxu0 0.0
        %1845 = vmatprep.subr.mxu0 0.0
        %1846 = vmatpush1.msra.mxu0 0.0
        %1847 = vmatprep.subr.mxu0 0.0
        %1848 = vmatpush1.msra.mxu0 0.0
        %1849 = vmatprep.subr.mxu0 0.0
        %1850 = vmatpush1.msra.mxu0 0.0
        %1851 = vmatprep.subr.mxu0 0.0
        %1852 = vmatpush1.msra.mxu0 0.0
        %1853 = vmatprep.subr.mxu0 0.0
        %1854 = vmatpush1.msra.mxu0 0.0
        %1855 = vmatprep.mubr.f32.mxu0 0.0
        %1856 = vmatmul.mubr.f32.gmra.mrb[0].mxu0 %v1000
        %v1857 = vpop.f32.mrb[0].mxu0
        %v1858 = vadd.f32 0.0, %v1857
        %v1859 = vpop.f32.mrb[0].mxu0
        %1860 = vmatprep.mubr.f32.mxu0 0.0
        %1861 = vmatmul.mubr.f32.gmra.mrb[0].mxu0 %v1003
        %v1862 = vpop.f32.mrb[0].mxu0
        %v1863 = vadd.f32 0.0, %v1862
        %v1864 = vpop.f32.mrb[0].mxu0
        %1865 = vmatprep.mubr.f32.mxu0 0.0
        %1866 = vmatmul.mubr.f32.gmra.mrb[0].mxu0 %v1006
        %v1867 = vpop.f32.mrb[0].mxu0
        %v1868 = vadd.f32 0.0, %v1867
        %v1869 = vpop.f32.mrb[0].mxu0
        %1870 = vmatprep.mubr.f32.mxu0 0.0
        %1871 = vmatmul.mubr.f32.gmra.mrb[0].mxu0 %v1009
        %v1872 = vpop.f32.mrb[0].mxu0
        %v1873 = vadd.f32 0.0, %v1872
        %v1874 = vpop.f32.mrb[0].mxu0
        %1875 = vmatprep.mubr.f32.mxu0 0.0
        %1876 = vmatmul.mubr.f32.gmra.mrb[0].mxu0 %v1012
        %v1877 = vpop.f32.mrb[0].mxu0
        %v1878 = vadd.f32 0.0, %v1877
        %v1879 = vpop.f32.mrb[0].mxu0
        %1880 = vmatprep.mubr.f32.mxu0 0.0
        %1881 = vmatmul.mubr.f32.gmra.mrb[0].mxu0 %v1015
        %v1882 = vpop.f32.mrb[0].mxu0
        %v1883 = vadd.f32 0.0, %v1882
        %v1884 = vpop.f32.mrb[0].mxu0
        %1885 = vmatprep.mubr.f32.mxu0 0.0
        %1886 = vmatmul.mubr.f32.gmra.mrb[0].mxu0 %v1018
        %v1887 = vpop.f32.mrb[0].mxu0
        %v1888 = vadd.f32 0.0, %v1887
        %v1889 = vpop.f32.mrb[0].mxu0
        %1890 = vmatprep.mubr.f32.mxu0 0.0
        %1891 = vmatmul.mubr.f32.gmra.mrb[0].mxu0 %v1021
        %v1892 = vpop.f32.mrb[0].mxu0
        %v1893 = vadd.f32 0.0, %v1892
        %v1894 = vpop.f32.mrb[0].mxu0
        %1895 = vmatprep.mubr.f32.mxu0 0.0
        %1896 = vmatmul.mubr.f32.gmra.mrb[0].mxu0 %v1024
        %v1897 = vpop.f32.mrb[0].mxu0
        %v1898 = vadd.f32 0.0, %v1897
        %v1899 = vpop.f32.mrb[0].mxu0
        %1900 = vmatprep.mubr.f32.mxu0 0.0
        %1901 = vmatmul.mubr.f32.gmra.mrb[0].mxu0 %v1027
        %v1902 = vpop.f32.mrb[0].mxu0
        %v1903 = vadd.f32 0.0, %v1902
        %v1904 = vpop.f32.mrb[0].mxu0
        %1905 = vmatprep.mubr.f32.mxu0 0.0
        %1906 = vmatmul.mubr.f32.gmra.mrb[0].mxu0 %v1030
        %v1907 = vpop.f32.mrb[0].mxu0
        %v1908 = vadd.f32 0.0, %v1907
        %v1909 = vpop.f32.mrb[0].mxu0
        %1910 = vmatprep.mubr.f32.mxu0 0.0
        %1911 = vmatmul.mubr.f32.gmra.mrb[0].mxu0 %v1033
        %v1912 = vpop.f32.mrb[0].mxu0
        %v1913 = vadd.f32 0.0, %v1912
        %v1914 = vpop.f32.mrb[0].mxu0
        %1915 = vmatprep.mubr.f32.mxu0 0.0
        %1916 = vmatmul.mubr.f32.gmra.mrb[0].mxu0 %v1036
        %v1917 = vpop.f32.mrb[0].mxu0
        %v1918 = vadd.f32 0.0, %v1917
        %v1919 = vpop.f32.mrb[0].mxu0
        %1920 = vmatprep.mubr.f32.mxu0 0.0
        %1921 = vmatmul.mubr.f32.gmra.mrb[0].mxu0 %v1039
        %v1922 = vpop.f32.mrb[0].mxu0
        %v1923 = vadd.f32 0.0, %v1922
        %v1924 = vpop.f32.mrb[0].mxu0
        %1925 = vmatprep.mubr.f32.mxu0 0.0
        %1926 = vmatmul.mubr.f32.gmra.mrb[0].mxu0 %v1042
        %v1927 = vpop.f32.mrb[0].mxu0
        %v1928 = vadd.f32 0.0, %v1927
        %v1929 = vpop.f32.mrb[0].mxu0
        %1930 = vmatprep.mubr.f32.mxu0 0.0
        %1931 = vmatmul.mubr.f32.gmra.mrb[0].mxu0 %v1045
        %v1932 = vpop.f32.mrb[0].mxu0
        %v1933 = vadd.f32 0.0, %v1932
        %v1934 = vpop.f32.mrb[0].mxu0
        %1935 = vdwg.mxu0
        %1952 = vrot.lane.b32.xlu0 %v839, 4
        %v1953 = vpop.permute.xlu0 %1952
        %1954 = vrot.lane.b32.xlu0 %v844, 4
        %v1955 = vpop.permute.xlu0 %1954
        %1956 = vrot.lane.b32.xlu0 %v849, 4
        %v1957 = vpop.permute.xlu0 %1956
        %1958 = vrot.lane.b32.xlu0 %v854, 4
        %v1959 = vpop.permute.xlu0 %1958
        %1960 = vrot.lane.b32.xlu0 %v859, 4
        %v1961 = vpop.permute.xlu0 %1960
        %1962 = vrot.lane.b32.xlu0 %v864, 4
        %v1963 = vpop.permute.xlu0 %1962
        %1964 = vrot.lane.b32.xlu0 %v869, 4
        %v1965 = vpop.permute.xlu0 %1964
        %1966 = vrot.lane.b32.xlu0 %v874, 4
        %v1967 = vpop.permute.xlu0 %1966
        %1968 = vrot.lane.b32.xlu0 %v879, 4
        %v1969 = vpop.permute.xlu0 %1968
        %1970 = vrot.lane.b32.xlu0 %v884, 4
        %v1971 = vpop.permute.xlu0 %1970
        %1972 = vrot.lane.b32.xlu0 %v889, 4
        %v1973 = vpop.permute.xlu0 %1972
        %1974 = vrot.lane.b32.xlu0 %v894, 4
        %v1975 = vpop.permute.xlu0 %1974
        %1976 = vrot.lane.b32.xlu0 %v899, 4
        %v1977 = vpop.permute.xlu0 %1976
        %1978 = vrot.lane.b32.xlu0 %v904, 4
        %v1979 = vpop.permute.xlu0 %1978
        %1980 = vrot.lane.b32.xlu0 %v909, 4
        %v1981 = vpop.permute.xlu0 %1980
        %1982 = vrot.lane.b32.xlu0 %v914, 4
        %v1983 = vpop.permute.xlu0 %1982
        %v2000 = vsel %vm415, %v1858, %v1953
        %v2001 = vsel %vm415, %v1863, %v1955
        %v2002 = vsel %vm415, %v1868, %v1957
        %v2003 = vsel %vm415, %v1873, %v1959
        %v2004 = vsel %vm415, %v1878, %v1961
        %v2005 = vsel %vm415, %v1883, %v1963
        %v2006 = vsel %vm415, %v1888, %v1965
        %v2007 = vsel %vm415, %v1893, %v1967
        %v2008 = vsel %vm415, %v1898, %v1969
        %v2009 = vsel %vm415, %v1903, %v1971
        %v2010 = vsel %vm415, %v1908, %v1973
        %v2011 = vsel %vm415, %v1913, %v1975
        %v2012 = vsel %vm415, %v1918, %v1977
        %v2013 = vsel %vm415, %v1923, %v1979
        %v2014 = vsel %vm415, %v1928, %v1981
        %v2015 = vsel %vm415, %v1933, %v1983
        %v2016 = vadd.f32 %v2000, %v1276
        %v2017 = vadd.f32 %v2001, %v1276
        %v2018 = vadd.f32 %v2002, %v1276
        %v2019 = vadd.f32 %v2003, %v1276
        %v2020 = vadd.f32 %v2004, %v1276
        %v2021 = vadd.f32 %v2005, %v1276
        %v2022 = vadd.f32 %v2006, %v1276
        %v2023 = vadd.f32 %v2007, %v1276
        %v2024 = vadd.f32 %v2008, %v1276
        %v2025 = vadd.f32 %v2009, %v1276
        %v2026 = vadd.f32 %v2010, %v1276
        %v2027 = vadd.f32 %v2011, %v1276
        %v2028 = vadd.f32 %v2012, %v1276
        %v2029 = vadd.f32 %v2013, %v1276
        %v2030 = vadd.f32 %v2014, %v1276
        %v2031 = vadd.f32 %v2015, %v1276
        %v2032 = vmax.f32 %v2016, 0.0
        %v2033 = vmax.f32 %v2017, 0.0
        %v2034 = vmax.f32 %v2018, 0.0
        %v2035 = vmax.f32 %v2019, 0.0
        %v2036 = vmax.f32 %v2020, 0.0
        %v2037 = vmax.f32 %v2021, 0.0
        %v2038 = vmax.f32 %v2022, 0.0
        %v2039 = vmax.f32 %v2023, 0.0
        %v2040 = vmax.f32 %v2024, 0.0
        %v2041 = vmax.f32 %v2025, 0.0
        %v2042 = vmax.f32 %v2026, 0.0
        %v2043 = vmax.f32 %v2027, 0.0
        %v2044 = vmax.f32 %v2028, 0.0
        %v2045 = vmax.f32 %v2029, 0.0
        %v2046 = vmax.f32 %v2030, 0.0
        %v2047 = vmax.f32 %v2031, 0.0
        %s2048 = sadd.s32 256, %s1310
        %s2049 = scalar_lea.vmem [#allocation2], %s2048
        %2050 = vst.msk [vmem:[%s2049] sm:$0xff] %vm998, %v2032
        %2051 = vst.msk [vmem:[%s2049 + $0x8] sm:$0xff] %vm998, %v2033
        %2052 = vst.msk [vmem:[%s2049 + $0x10] sm:$0xff] %vm998, %v2034
        %2053 = vst.msk [vmem:[%s2049 + $0x18] sm:$0xff] %vm998, %v2035
        %2054 = vst.msk [vmem:[%s2049 + $0x20] sm:$0xff] %vm998, %v2036
        %2055 = vst.msk [vmem:[%s2049 + $0x28] sm:$0xff] %vm998, %v2037
        %2056 = vst.msk [vmem:[%s2049 + $0x30] sm:$0xff] %vm998, %v2038
        %2057 = vst.msk [vmem:[%s2049 + $0x38] sm:$0xff] %vm998, %v2039
        %2058 = vst.msk [vmem:[%s2049 + $0x40] sm:$0xff] %vm998, %v2040
        %2059 = vst.msk [vmem:[%s2049 + $0x48] sm:$0xff] %vm998, %v2041
        %2060 = vst.msk [vmem:[%s2049 + $0x50] sm:$0xff] %vm998, %v2042
        %2061 = vst.msk [vmem:[%s2049 + $0x58] sm:$0xff] %vm998, %v2043
        %2062 = vst.msk [vmem:[%s2049 + $0x60] sm:$0xff] %vm998, %v2044
        %2063 = vst.msk [vmem:[%s2049 + $0x68] sm:$0xff] %vm998, %v2045
        %2064 = vst.msk [vmem:[%s2049 + $0x70] sm:$0xff] %vm998, %v2046
        %2065 = vst.msk [vmem:[%s2049 + $0x78] sm:$0xff] %vm998, %v2047
        %v2066 = vsel %vm998, %v2032, 0.0
        %v2067 = vsel %vm998, %v2033, 0.0
        %v2068 = vadd.f32 %v2066, %v2067
        %v2069 = vsel %vm998, %v2034, 0.0
        %v2070 = vadd.f32 %v2068, %v2069
        %v2071 = vsel %vm998, %v2035, 0.0
        %v2072 = vadd.f32 %v2070, %v2071
        %v2073 = vsel %vm998, %v2036, 0.0
        %v2074 = vadd.f32 %v2072, %v2073
        %v2075 = vsel %vm998, %v2037, 0.0
        %v2076 = vadd.f32 %v2074, %v2075
        %v2077 = vsel %vm998, %v2038, 0.0
        %v2078 = vadd.f32 %v2076, %v2077
        %v2079 = vsel %vm998, %v2039, 0.0
        %v2080 = vadd.f32 %v2078, %v2079
        %v2081 = vsel %vm998, %v2040, 0.0
        %v2082 = vadd.f32 %v2080, %v2081
        %v2083 = vsel %vm998, %v2041, 0.0
        %v2084 = vadd.f32 %v2082, %v2083
        %v2085 = vsel %vm998, %v2042, 0.0
        %v2086 = vadd.f32 %v2084, %v2085
        %v2087 = vsel %vm998, %v2043, 0.0
        %v2088 = vadd.f32 %v2086, %v2087
        %v2089 = vsel %vm998, %v2044, 0.0
        %v2090 = vadd.f32 %v2088, %v2089
        %v2091 = vsel %vm998, %v2045, 0.0
        %v2092 = vadd.f32 %v2090, %v2091
        %v2093 = vsel %vm998, %v2046, 0.0
        %v2094 = vadd.f32 %v2092, %v2093
        %v2095 = vsel %vm998, %v2047, 0.0
        %v2096 = vadd.f32 %v2094, %v2095
        %v2097 = vrot.slane %v2096, 4
        %v2098 = vadd.f32 %v2096, %v2097
        %v2099 = vrot.slane %v2098, 2
        %v2100 = vadd.f32 %v2098, %v2099
        %v2101 = vrot.slane %v2100, 1
        %v2102 = vadd.f32 %v2100, %v2101
        %v2103 = vadd.f32 %v1734, %v2102
        %v2104 = vmul.f32 %v2032, %v2032
        %v2105 = vmul.f32 %v2033, %v2033
        %v2106 = vmul.f32 %v2034, %v2034
        %v2107 = vmul.f32 %v2035, %v2035
        %v2108 = vmul.f32 %v2036, %v2036
        %v2109 = vmul.f32 %v2037, %v2037
        %v2110 = vmul.f32 %v2038, %v2038
        %v2111 = vmul.f32 %v2039, %v2039
        %v2112 = vmul.f32 %v2040, %v2040
        %v2113 = vmul.f32 %v2041, %v2041
        %v2114 = vmul.f32 %v2042, %v2042
        %v2115 = vmul.f32 %v2043, %v2043
        %v2116 = vmul.f32 %v2044, %v2044
        %v2117 = vmul.f32 %v2045, %v2045
        %v2118 = vmul.f32 %v2046, %v2046
        %v2119 = vmul.f32 %v2047, %v2047
        %v2120 = vsel %vm998, %v2104, 0.0
        %v2121 = vsel %vm998, %v2105, 0.0
        %v2122 = vadd.f32 %v2120, %v2121
        %v2123 = vsel %vm998, %v2106, 0.0
        %v2124 = vadd.f32 %v2122, %v2123
        %v2125 = vsel %vm998, %v2107, 0.0
        %v2126 = vadd.f32 %v2124, %v2125
        %v2127 = vsel %vm998, %v2108, 0.0
        %v2128 = vadd.f32 %v2126, %v2127
        %v2129 = vsel %vm998, %v2109, 0.0
        %v2130 = vadd.f32 %v2128, %v2129
        %v2131 = vsel %vm998, %v2110, 0.0
        %v2132 = vadd.f32 %v2130, %v2131
        %v2133 = vsel %vm998, %v2111, 0.0
        %v2134 = vadd.f32 %v2132, %v2133
        %v2135 = vsel %vm998, %v2112, 0.0
        %v2136 = vadd.f32 %v2134, %v2135
        %v2137 = vsel %vm998, %v2113, 0.0
        %v2138 = vadd.f32 %v2136, %v2137
        %v2139 = vsel %vm998, %v2114, 0.0
        %v2140 = vadd.f32 %v2138, %v2139
        %v2141 = vsel %vm998, %v2115, 0.0
        %v2142 = vadd.f32 %v2140, %v2141
        %v2143 = vsel %vm998, %v2116, 0.0
        %v2144 = vadd.f32 %v2142, %v2143
        %v2145 = vsel %vm998, %v2117, 0.0
        %v2146 = vadd.f32 %v2144, %v2145
        %v2147 = vsel %vm998, %v2118, 0.0
        %v2148 = vadd.f32 %v2146, %v2147
        %v2149 = vsel %vm998, %v2119, 0.0
        %v2150 = vadd.f32 %v2148, %v2149
        %v2151 = vrot.slane %v2150, 4
        %v2152 = vadd.f32 %v2150, %v2151
        %v2153 = vrot.slane %v2152, 2
        %v2154 = vadd.f32 %v2152, %v2153
        %v2155 = vrot.slane %v2154, 1
        %v2156 = vadd.f32 %v2154, %v2155
        %v2157 = vadd.f32 %v1788, %v2156
        %s2158 = scalar_lea.vmem %s2, 24
        %v2159 = vld [vmem:[%s2158] sm:$0xff]
        %2160 = vmatprep.subr.mxu0 0.0
        %2161 = vmatpush1.msra.mxu0 %v2159
        %2162 = vmatprep.subr.mxu0 0.0
        %2163 = vmatpush1.msra.mxu0 0.0
        %2164 = vmatprep.subr.mxu0 0.0
        %2165 = vmatpush1.msra.mxu0 0.0
        %2166 = vmatprep.subr.mxu0 0.0
        %2167 = vmatpush1.msra.mxu0 0.0
        %2168 = vmatprep.subr.mxu0 0.0
        %2169 = vmatpush1.msra.mxu0 0.0
        %2170 = vmatprep.subr.mxu0 0.0
        %2171 = vmatpush1.msra.mxu0 0.0
        %2172 = vmatprep.subr.mxu0 0.0
        %2173 = vmatpush1.msra.mxu0 0.0
        %2174 = vmatprep.subr.mxu0 0.0
        %2175 = vmatpush1.msra.mxu0 0.0
        %2176 = vmatprep.subr.mxu0 0.0
        %2177 = vmatpush1.msra.mxu0 0.0
        %2178 = vmatprep.subr.mxu0 0.0
        %2179 = vmatpush1.msra.mxu0 0.0
        %2180 = vmatprep.subr.mxu0 0.0
        %2181 = vmatpush1.msra.mxu0 0.0
        %2182 = vmatprep.subr.mxu0 0.0
        %2183 = vmatpush1.msra.mxu0 0.0
        %2184 = vmatprep.subr.mxu0 0.0
        %2185 = vmatpush1.msra.mxu0 0.0
        %2186 = vmatprep.subr.mxu0 0.0
        %2187 = vmatpush1.msra.mxu0 0.0
        %2188 = vmatprep.subr.mxu0 0.0
        %2189 = vmatpush1.msra.mxu0 0.0
        %2190 = vmatprep.subr.mxu0 0.0
        %2191 = vmatpush1.msra.mxu0 0.0
        %2192 = vmatprep.subr.mxu0 0.0
        %2193 = vmatpush1.msra.mxu0 0.0
        %2194 = vmatprep.subr.mxu0 0.0
        %2195 = vmatpush1.msra.mxu0 0.0
        %2196 = vmatprep.subr.mxu0 0.0
        %2197 = vmatpush1.msra.mxu0 0.0
        %2198 = vmatprep.subr.mxu0 0.0
        %2199 = vmatpush1.msra.mxu0 0.0
        %2200 = vmatprep.subr.mxu0 0.0
        %2201 = vmatpush1.msra.mxu0 0.0
        %2202 = vmatprep.subr.mxu0 0.0
        %2203 = vmatpush1.msra.mxu0 0.0
        %2204 = vmatprep.subr.mxu0 0.0
        %2205 = vmatpush1.msra.mxu0 0.0
        %2206 = vmatprep.subr.mxu0 0.0
        %2207 = vmatpush1.msra.mxu0 0.0
        %2208 = vmatprep.subr.mxu0 0.0
        %2209 = vmatpush1.msra.mxu0 0.0
        %2210 = vmatprep.subr.mxu0 0.0
        %2211 = vmatpush1.msra.mxu0 0.0
        %2212 = vmatprep.subr.mxu0 0.0
        %2213 = vmatpush1.msra.mxu0 0.0
        %2214 = vmatprep.subr.mxu0 0.0
        %2215 = vmatpush1.msra.mxu0 0.0
        %2216 = vmatprep.subr.mxu0 0.0
        %2217 = vmatpush1.msra.mxu0 0.0
        %2218 = vmatprep.subr.mxu0 0.0
        %2219 = vmatpush1.msra.mxu0 0.0
        %2220 = vmatprep.subr.mxu0 0.0
        %2221 = vmatpush1.msra.mxu0 0.0
        %2222 = vmatprep.subr.mxu0 0.0
        %2223 = vmatpush1.msra.mxu0 0.0
        %2224 = vmatprep.mubr.f32.mxu0 0.0
        %2225 = vmatmul.mubr.f32.gmra.mrb[0].mxu0 %v1000
        %v2226 = vpop.f32.mrb[0].mxu0
        %v2227 = vadd.f32 0.0, %v2226
        %v2228 = vpop.f32.mrb[0].mxu0
        %2229 = vmatprep.mubr.f32.mxu0 0.0
        %2230 = vmatmul.mubr.f32.gmra.mrb[0].mxu0 %v1003
        %v2231 = vpop.f32.mrb[0].mxu0
        %v2232 = vadd.f32 0.0, %v2231
        %v2233 = vpop.f32.mrb[0].mxu0
        %2234 = vmatprep.mubr.f32.mxu0 0.0
        %2235 = vmatmul.mubr.f32.gmra.mrb[0].mxu0 %v1006
        %v2236 = vpop.f32.mrb[0].mxu0
        %v2237 = vadd.f32 0.0, %v2236
        %v2238 = vpop.f32.mrb[0].mxu0
        %2239 = vmatprep.mubr.f32.mxu0 0.0
        %2240 = vmatmul.mubr.f32.gmra.mrb[0].mxu0 %v1009
        %v2241 = vpop.f32.mrb[0].mxu0
        %v2242 = vadd.f32 0.0, %v2241
        %v2243 = vpop.f32.mrb[0].mxu0
        %2244 = vmatprep.mubr.f32.mxu0 0.0
        %2245 = vmatmul.mubr.f32.gmra.mrb[0].mxu0 %v1012
        %v2246 = vpop.f32.mrb[0].mxu0
        %v2247 = vadd.f32 0.0, %v2246
        %v2248 = vpop.f32.mrb[0].mxu0
        %2249 = vmatprep.mubr.f32.mxu0 0.0
        %2250 = vmatmul.mubr.f32.gmra.mrb[0].mxu0 %v1015
        %v2251 = vpop.f32.mrb[0].mxu0
        %v2252 = vadd.f32 0.0, %v2251
        %v2253 = vpop.f32.mrb[0].mxu0
        %2254 = vmatprep.mubr.f32.mxu0 0.0
        %2255 = vmatmul.mubr.f32.gmra.mrb[0].mxu0 %v1018
        %v2256 = vpop.f32.mrb[0].mxu0
        %v2257 = vadd.f32 0.0, %v2256
        %v2258 = vpop.f32.mrb[0].mxu0
        %2259 = vmatprep.mubr.f32.mxu0 0.0
        %2260 = vmatmul.mubr.f32.gmra.mrb[0].mxu0 %v1021
        %v2261 = vpop.f32.mrb[0].mxu0
        %v2262 = vadd.f32 0.0, %v2261
        %v2263 = vpop.f32.mrb[0].mxu0
        %2264 = vmatprep.mubr.f32.mxu0 0.0
        %2265 = vmatmul.mubr.f32.gmra.mrb[0].mxu0 %v1024
        %v2266 = vpop.f32.mrb[0].mxu0
        %v2267 = vadd.f32 0.0, %v2266
        %v2268 = vpop.f32.mrb[0].mxu0
        %2269 = vmatprep.mubr.f32.mxu0 0.0
        %2270 = vmatmul.mubr.f32.gmra.mrb[0].mxu0 %v1027
        %v2271 = vpop.f32.mrb[0].mxu0
        %v2272 = vadd.f32 0.0, %v2271
        %v2273 = vpop.f32.mrb[0].mxu0
        %2274 = vmatprep.mubr.f32.mxu0 0.0
        %2275 = vmatmul.mubr.f32.gmra.mrb[0].mxu0 %v1030
        %v2276 = vpop.f32.mrb[0].mxu0
        %v2277 = vadd.f32 0.0, %v2276
        %v2278 = vpop.f32.mrb[0].mxu0
        %2279 = vmatprep.mubr.f32.mxu0 0.0
        %2280 = vmatmul.mubr.f32.gmra.mrb[0].mxu0 %v1033
        %v2281 = vpop.f32.mrb[0].mxu0
        %v2282 = vadd.f32 0.0, %v2281
        %v2283 = vpop.f32.mrb[0].mxu0
        %2284 = vmatprep.mubr.f32.mxu0 0.0
        %2285 = vmatmul.mubr.f32.gmra.mrb[0].mxu0 %v1036
        %v2286 = vpop.f32.mrb[0].mxu0
        %v2287 = vadd.f32 0.0, %v2286
        %v2288 = vpop.f32.mrb[0].mxu0
        %2289 = vmatprep.mubr.f32.mxu0 0.0
        %2290 = vmatmul.mubr.f32.gmra.mrb[0].mxu0 %v1039
        %v2291 = vpop.f32.mrb[0].mxu0
        %v2292 = vadd.f32 0.0, %v2291
        %v2293 = vpop.f32.mrb[0].mxu0
        %2294 = vmatprep.mubr.f32.mxu0 0.0
        %2295 = vmatmul.mubr.f32.gmra.mrb[0].mxu0 %v1042
        %v2296 = vpop.f32.mrb[0].mxu0
        %v2297 = vadd.f32 0.0, %v2296
        %v2298 = vpop.f32.mrb[0].mxu0
        %2299 = vmatprep.mubr.f32.mxu0 0.0
        %2300 = vmatmul.mubr.f32.gmra.mrb[0].mxu0 %v1045
        %v2301 = vpop.f32.mrb[0].mxu0
        %v2302 = vadd.f32 0.0, %v2301
        %v2303 = vpop.f32.mrb[0].mxu0
        %2304 = vdwg.mxu0
        %2321 = vrot.lane.b32.xlu0 %v919, 4
        %v2322 = vpop.permute.xlu0 %2321
        %2323 = vrot.lane.b32.xlu0 %v924, 4
        %v2324 = vpop.permute.xlu0 %2323
        %2325 = vrot.lane.b32.xlu0 %v929, 4
        %v2326 = vpop.permute.xlu0 %2325
        %2327 = vrot.lane.b32.xlu0 %v934, 4
        %v2328 = vpop.permute.xlu0 %2327
        %2329 = vrot.lane.b32.xlu0 %v939, 4
        %v2330 = vpop.permute.xlu0 %2329
        %2331 = vrot.lane.b32.xlu0 %v944, 4
        %v2332 = vpop.permute.xlu0 %2331
        %2333 = vrot.lane.b32.xlu0 %v949, 4
        %v2334 = vpop.permute.xlu0 %2333
        %2335 = vrot.lane.b32.xlu0 %v954, 4
        %v2336 = vpop.permute.xlu0 %2335
        %2337 = vrot.lane.b32.xlu0 %v959, 4
        %v2338 = vpop.permute.xlu0 %2337
        %2339 = vrot.lane.b32.xlu0 %v964, 4
        %v2340 = vpop.permute.xlu0 %2339
        %2341 = vrot.lane.b32.xlu0 %v969, 4
        %v2342 = vpop.permute.xlu0 %2341
        %2343 = vrot.lane.b32.xlu0 %v974, 4
        %v2344 = vpop.permute.xlu0 %2343
        %2345 = vrot.lane.b32.xlu0 %v979, 4
        %v2346 = vpop.permute.xlu0 %2345
        %2347 = vrot.lane.b32.xlu0 %v984, 4
        %v2348 = vpop.permute.xlu0 %2347
        %2349 = vrot.lane.b32.xlu0 %v989, 4
        %v2350 = vpop.permute.xlu0 %2349
        %2351 = vrot.lane.b32.xlu0 %v994, 4
        %v2352 = vpop.permute.xlu0 %2351
        %v2369 = vsel %vm415, %v2227, %v2322
        %v2370 = vsel %vm415, %v2232, %v2324
        %v2371 = vsel %vm415, %v2237, %v2326
        %v2372 = vsel %vm415, %v2242, %v2328
        %v2373 = vsel %vm415, %v2247, %v2330
        %v2374 = vsel %vm415, %v2252, %v2332
        %v2375 = vsel %vm415, %v2257, %v2334
        %v2376 = vsel %vm415, %v2262, %v2336
        %v2377 = vsel %vm415, %v2267, %v2338
        %v2378 = vsel %vm415, %v2272, %v2340
        %v2379 = vsel %vm415, %v2277, %v2342
        %v2380 = vsel %vm415, %v2282, %v2344
        %v2381 = vsel %vm415, %v2287, %v2346
        %v2382 = vsel %vm415, %v2292, %v2348
        %v2383 = vsel %vm415, %v2297, %v2350
        %v2384 = vsel %vm415, %v2302, %v2352
        %v2385 = vadd.f32 %v2369, %v1276
        %v2386 = vadd.f32 %v2370, %v1276
        %v2387 = vadd.f32 %v2371, %v1276
        %v2388 = vadd.f32 %v2372, %v1276
        %v2389 = vadd.f32 %v2373, %v1276
        %v2390 = vadd.f32 %v2374, %v1276
        %v2391 = vadd.f32 %v2375, %v1276
        %v2392 = vadd.f32 %v2376, %v1276
        %v2393 = vadd.f32 %v2377, %v1276
        %v2394 = vadd.f32 %v2378, %v1276
        %v2395 = vadd.f32 %v2379, %v1276
        %v2396 = vadd.f32 %v2380, %v1276
        %v2397 = vadd.f32 %v2381, %v1276
        %v2398 = vadd.f32 %v2382, %v1276
        %v2399 = vadd.f32 %v2383, %v1276
        %v2400 = vadd.f32 %v2384, %v1276
        %v2401 = vmax.f32 %v2385, 0.0
        %v2402 = vmax.f32 %v2386, 0.0
        %v2403 = vmax.f32 %v2387, 0.0
        %v2404 = vmax.f32 %v2388, 0.0
        %v2405 = vmax.f32 %v2389, 0.0
        %v2406 = vmax.f32 %v2390, 0.0
        %v2407 = vmax.f32 %v2391, 0.0
        %v2408 = vmax.f32 %v2392, 0.0
        %v2409 = vmax.f32 %v2393, 0.0
        %v2410 = vmax.f32 %v2394, 0.0
        %v2411 = vmax.f32 %v2395, 0.0
        %v2412 = vmax.f32 %v2396, 0.0
        %v2413 = vmax.f32 %v2397, 0.0
        %v2414 = vmax.f32 %v2398, 0.0
        %v2415 = vmax.f32 %v2399, 0.0
        %v2416 = vmax.f32 %v2400, 0.0
        %s2417 = sadd.s32 384, %s1310
        %s2418 = scalar_lea.vmem [#allocation2], %s2417
        %2419 = vst.msk [vmem:[%s2418] sm:$0xff] %vm998, %v2401
        %2420 = vst.msk [vmem:[%s2418 + $0x8] sm:$0xff] %vm998, %v2402
        %2421 = vst.msk [vmem:[%s2418 + $0x10] sm:$0xff] %vm998, %v2403
        %2422 = vst.msk [vmem:[%s2418 + $0x18] sm:$0xff] %vm998, %v2404
        %2423 = vst.msk [vmem:[%s2418 + $0x20] sm:$0xff] %vm998, %v2405
        %2424 = vst.msk [vmem:[%s2418 + $0x28] sm:$0xff] %vm998, %v2406
        %2425 = vst.msk [vmem:[%s2418 + $0x30] sm:$0xff] %vm998, %v2407
        %2426 = vst.msk [vmem:[%s2418 + $0x38] sm:$0xff] %vm998, %v2408
        %2427 = vst.msk [vmem:[%s2418 + $0x40] sm:$0xff] %vm998, %v2409
        %2428 = vst.msk [vmem:[%s2418 + $0x48] sm:$0xff] %vm998, %v2410
        %2429 = vst.msk [vmem:[%s2418 + $0x50] sm:$0xff] %vm998, %v2411
        %2430 = vst.msk [vmem:[%s2418 + $0x58] sm:$0xff] %vm998, %v2412
        %2431 = vst.msk [vmem:[%s2418 + $0x60] sm:$0xff] %vm998, %v2413
        %2432 = vst.msk [vmem:[%s2418 + $0x68] sm:$0xff] %vm998, %v2414
        %2433 = vst.msk [vmem:[%s2418 + $0x70] sm:$0xff] %vm998, %v2415
        %2434 = vst.msk [vmem:[%s2418 + $0x78] sm:$0xff] %vm998, %v2416
        %v2435 = vsel %vm998, %v2401, 0.0
        %v2436 = vsel %vm998, %v2402, 0.0
        %v2437 = vadd.f32 %v2435, %v2436
        %v2438 = vsel %vm998, %v2403, 0.0
        %v2439 = vadd.f32 %v2437, %v2438
        %v2440 = vsel %vm998, %v2404, 0.0
        %v2441 = vadd.f32 %v2439, %v2440
        %v2442 = vsel %vm998, %v2405, 0.0
        %v2443 = vadd.f32 %v2441, %v2442
        %v2444 = vsel %vm998, %v2406, 0.0
        %v2445 = vadd.f32 %v2443, %v2444
        %v2446 = vsel %vm998, %v2407, 0.0
        %v2447 = vadd.f32 %v2445, %v2446
        %v2448 = vsel %vm998, %v2408, 0.0
        %v2449 = vadd.f32 %v2447, %v2448
        %v2450 = vsel %vm998, %v2409, 0.0
        %v2451 = vadd.f32 %v2449, %v2450
        %v2452 = vsel %vm998, %v2410, 0.0
        %v2453 = vadd.f32 %v2451, %v2452
        %v2454 = vsel %vm998, %v2411, 0.0
        %v2455 = vadd.f32 %v2453, %v2454
        %v2456 = vsel %vm998, %v2412, 0.0
        %v2457 = vadd.f32 %v2455, %v2456
        %v2458 = vsel %vm998, %v2413, 0.0
        %v2459 = vadd.f32 %v2457, %v2458
        %v2460 = vsel %vm998, %v2414, 0.0
        %v2461 = vadd.f32 %v2459, %v2460
        %v2462 = vsel %vm998, %v2415, 0.0
        %v2463 = vadd.f32 %v2461, %v2462
        %v2464 = vsel %vm998, %v2416, 0.0
        %v2465 = vadd.f32 %v2463, %v2464
        %v2466 = vrot.slane %v2465, 4
        %v2467 = vadd.f32 %v2465, %v2466
        %v2468 = vrot.slane %v2467, 2
        %v2469 = vadd.f32 %v2467, %v2468
        %v2470 = vrot.slane %v2469, 1
        %v2471 = vadd.f32 %v2469, %v2470
        %v2472 = vadd.f32 %v2103, %v2471
        %v2473 = vmul.f32 %v2401, %v2401
        %v2474 = vmul.f32 %v2402, %v2402
        %v2475 = vmul.f32 %v2403, %v2403
        %v2476 = vmul.f32 %v2404, %v2404
        %v2477 = vmul.f32 %v2405, %v2405
        %v2478 = vmul.f32 %v2406, %v2406
        %v2479 = vmul.f32 %v2407, %v2407
        %v2480 = vmul.f32 %v2408, %v2408
        %v2481 = vmul.f32 %v2409, %v2409
        %v2482 = vmul.f32 %v2410, %v2410
        %v2483 = vmul.f32 %v2411, %v2411
        %v2484 = vmul.f32 %v2412, %v2412
        %v2485 = vmul.f32 %v2413, %v2413
        %v2486 = vmul.f32 %v2414, %v2414
        %v2487 = vmul.f32 %v2415, %v2415
        %v2488 = vmul.f32 %v2416, %v2416
        %v2489 = vsel %vm998, %v2473, 0.0
        %v2490 = vsel %vm998, %v2474, 0.0
        %v2491 = vadd.f32 %v2489, %v2490
        %v2492 = vsel %vm998, %v2475, 0.0
        %v2493 = vadd.f32 %v2491, %v2492
        %v2494 = vsel %vm998, %v2476, 0.0
        %v2495 = vadd.f32 %v2493, %v2494
        %v2496 = vsel %vm998, %v2477, 0.0
        %v2497 = vadd.f32 %v2495, %v2496
        %v2498 = vsel %vm998, %v2478, 0.0
        %v2499 = vadd.f32 %v2497, %v2498
        %v2500 = vsel %vm998, %v2479, 0.0
        %v2501 = vadd.f32 %v2499, %v2500
        %v2502 = vsel %vm998, %v2480, 0.0
        %v2503 = vadd.f32 %v2501, %v2502
        %v2504 = vsel %vm998, %v2481, 0.0
        %v2505 = vadd.f32 %v2503, %v2504
        %v2506 = vsel %vm998, %v2482, 0.0
        %v2507 = vadd.f32 %v2505, %v2506
        %v2508 = vsel %vm998, %v2483, 0.0
        %v2509 = vadd.f32 %v2507, %v2508
        %v2510 = vsel %vm998, %v2484, 0.0
        %v2511 = vadd.f32 %v2509, %v2510
        %v2512 = vsel %vm998, %v2485, 0.0
        %v2513 = vadd.f32 %v2511, %v2512
        %v2514 = vsel %vm998, %v2486, 0.0
        %v2515 = vadd.f32 %v2513, %v2514
        %v2516 = vsel %vm998, %v2487, 0.0
        %v2517 = vadd.f32 %v2515, %v2516
        %v2518 = vsel %vm998, %v2488, 0.0
        %v2519 = vadd.f32 %v2517, %v2518
        %v2520 = vrot.slane %v2519, 4
        %v2521 = vadd.f32 %v2519, %v2520
        %v2522 = vrot.slane %v2521, 2
        %v2523 = vadd.f32 %v2521, %v2522
        %v2524 = vrot.slane %v2523, 1
        %v2525 = vadd.f32 %v2523, %v2524
        %v2526 = vadd.f32 %v2157, %v2525
        %v2527 = vld [vmem:[#allocation3] sm:$0x1]
        %v2528 = vadd.f32 %v2527, %v2472
        %vm2529 = vcmask 57344
        %2530 = vst.msk [vmem:[#allocation3] sm:$0x1] %vm2529, %v2528
        %v2531 = vld [vmem:[#allocation4] sm:$0x1]
        %v2532 = vadd.f32 %v2531, %v2526
        %2533 = vst.msk [vmem:[#allocation4] sm:$0x1] %vm2529, %v2532
        // Predicated region
        $region53: #{tpu_custom_call.1} parent=47 // pred_check
          %p2534 = pneg %p326
        $region54: #{tpu_custom_call.1} parent=47 // pred_check_branch
          %2536 = sbr.rel (%p2534) target = $region56
        $region55: #{tpu_custom_call.1} parent=47 // pred_region
          %v2537 = vld [vmem:[#allocation3] sm:$0x1]
          %v2538 = vmul.f32 %v2537, 0.001953125
          %v2539 = vld [vmem:[#allocation4] sm:$0x1]
          %v2540 = vmul.f32 %v2539, 0.001953125
          %v2541 = vmul.f32 %v2538, %v2538
          %v2542 = vsub.f32 %v2540, %v2541
          %v2543 = vadd.f32 %v2542, 1e-05
          %v2544 = vrsqrt.pop %v2543
          %v2545 = vld [vmem:[%s5] sm:$0x1]
          %v2546 = vmul.f32 %v2545, %v2544
          %2547 = vst.msk [vmem:[#allocation5] sm:$0x1] %vm2529, %v2546
          %v2548 = vld [vmem:[%s5 + $0x1] sm:$0x1]
          %v2549 = vld [vmem:[#allocation5] sm:$0x1]
          %v2550 = vmul.f32 %v2538, %v2549
          %v2551 = vsub.f32 %v2548, %v2550
          %2552 = vst.msk [vmem:[#allocation6] sm:$0x1] %vm2529, %v2551
        $region56: #{tpu_custom_call.1} parent=47 // pred_fallthru
          _
      $region48: #{tpu_custom_call.1} parent=43 // pred_fallthru
        _
      %p2553 = scmp.eq.s32.totalorder %s21, 1
      // Predicated region
      $region57: #{tpu_custom_call.1} parent=43 // pred_check
        %p2554 = pneg %p2553
      $region58: #{tpu_custom_call.1} parent=43 // pred_check_branch
        %2556 = sbr.rel (%p2554) target = $region60
      $region59: #{tpu_custom_call.1} parent=43 // pred_region
        %v2557 = vld [vmem:[#allocation5] sm:$0x1]
        %v2558 = vld [vmem:[#allocation6] sm:$0x1]
        %s2559 = smul.u32 %s22, 512
        %s2560 = scalar_lea.vmem [#allocation2], %s2559
        %v2561 = vld [vmem:[%s2560] sm:$0xff]
        %v2562 = vld [vmem:[%s2560 + $0x8] sm:$0xff]
        %v2563 = vld [vmem:[%s2560 + $0x10] sm:$0xff]
        %v2564 = vld [vmem:[%s2560 + $0x18] sm:$0xff]
        %v2565 = vld [vmem:[%s2560 + $0x20] sm:$0xff]
        %v2566 = vld [vmem:[%s2560 + $0x28] sm:$0xff]
        %v2567 = vld [vmem:[%s2560 + $0x30] sm:$0xff]
        %v2568 = vld [vmem:[%s2560 + $0x38] sm:$0xff]
        %v2569 = vld [vmem:[%s2560 + $0x40] sm:$0xff]
        %v2570 = vld [vmem:[%s2560 + $0x48] sm:$0xff]
        %v2571 = vld [vmem:[%s2560 + $0x50] sm:$0xff]
        %v2572 = vld [vmem:[%s2560 + $0x58] sm:$0xff]
        %v2573 = vld [vmem:[%s2560 + $0x60] sm:$0xff]
        %v2574 = vld [vmem:[%s2560 + $0x68] sm:$0xff]
        %v2575 = vld [vmem:[%s2560 + $0x70] sm:$0xff]
        %v2576 = vld [vmem:[%s2560 + $0x78] sm:$0xff]
        %v2577 = vld [vmem:[%s2560 + $0x80] sm:$0xff]
        %v2578 = vld [vmem:[%s2560 + $0x88] sm:$0xff]
        %v2579 = vld [vmem:[%s2560 + $0x90] sm:$0xff]
        %v2580 = vld [vmem:[%s2560 + $0x98] sm:$0xff]
        %v2581 = vld [vmem:[%s2560 + $0xa0] sm:$0xff]
        %v2582 = vld [vmem:[%s2560 + $0xa8] sm:$0xff]
        %v2583 = vld [vmem:[%s2560 + $0xb0] sm:$0xff]
        %v2584 = vld [vmem:[%s2560 + $0xb8] sm:$0xff]
        %v2585 = vld [vmem:[%s2560 + $0xc0] sm:$0xff]
        %v2586 = vld [vmem:[%s2560 + $0xc8] sm:$0xff]
        %v2587 = vld [vmem:[%s2560 + $0xd0] sm:$0xff]
        %v2588 = vld [vmem:[%s2560 + $0xd8] sm:$0xff]
        %v2589 = vld [vmem:[%s2560 + $0xe0] sm:$0xff]
        %v2590 = vld [vmem:[%s2560 + $0xe8] sm:$0xff]
        %v2591 = vld [vmem:[%s2560 + $0xf0] sm:$0xff]
        %v2592 = vld [vmem:[%s2560 + $0xf8] sm:$0xff]
        %v2593 = vld [vmem:[%s2560 + $0x100] sm:$0xff]
        %v2594 = vld [vmem:[%s2560 + $0x108] sm:$0xff]
        %v2595 = vld [vmem:[%s2560 + $0x110] sm:$0xff]
        %v2596 = vld [vmem:[%s2560 + $0x118] sm:$0xff]
        %v2597 = vld [vmem:[%s2560 + $0x120] sm:$0xff]
        %v2598 = vld [vmem:[%s2560 + $0x128] sm:$0xff]
        %v2599 = vld [vmem:[%s2560 + $0x130] sm:$0xff]
        %v2600 = vld [vmem:[%s2560 + $0x138] sm:$0xff]
        %v2601 = vld [vmem:[%s2560 + $0x140] sm:$0xff]
        %v2602 = vld [vmem:[%s2560 + $0x148] sm:$0xff]
        %v2603 = vld [vmem:[%s2560 + $0x150] sm:$0xff]
        %v2604 = vld [vmem:[%s2560 + $0x158] sm:$0xff]
        %v2605 = vld [vmem:[%s2560 + $0x160] sm:$0xff]
        %v2606 = vld [vmem:[%s2560 + $0x168] sm:$0xff]
        %v2607 = vld [vmem:[%s2560 + $0x170] sm:$0xff]
        %v2608 = vld [vmem:[%s2560 + $0x178] sm:$0xff]
        %v2609 = vld [vmem:[%s2560 + $0x180] sm:$0xff]
        %v2610 = vld [vmem:[%s2560 + $0x188] sm:$0xff]
        %v2611 = vld [vmem:[%s2560 + $0x190] sm:$0xff]
        %v2612 = vld [vmem:[%s2560 + $0x198] sm:$0xff]
        %v2613 = vld [vmem:[%s2560 + $0x1a0] sm:$0xff]
        %v2614 = vld [vmem:[%s2560 + $0x1a8] sm:$0xff]
        %v2615 = vld [vmem:[%s2560 + $0x1b0] sm:$0xff]
        %v2616 = vld [vmem:[%s2560 + $0x1b8] sm:$0xff]
        %v2617 = vld [vmem:[%s2560 + $0x1c0] sm:$0xff]
        %v2618 = vld [vmem:[%s2560 + $0x1c8] sm:$0xff]
        %v2619 = vld [vmem:[%s2560 + $0x1d0] sm:$0xff]
        %v2620 = vld [vmem:[%s2560 + $0x1d8] sm:$0xff]
        %v2621 = vld [vmem:[%s2560 + $0x1e0] sm:$0xff]
        %v2622 = vld [vmem:[%s2560 + $0x1e8] sm:$0xff]
        %v2623 = vld [vmem:[%s2560 + $0x1f0] sm:$0xff]
        %v2624 = vld [vmem:[%s2560 + $0x1f8] sm:$0xff]
        %v2626 = vlaneseq
        %v2627 = vshrl.u32 %v2626, 7
        %v2628 = vsub.s32 0, %v2627
        %v2629 = vrot.slane %v2557, %v2628
        %v2631 = vmul.f32 %v2561, %v2629
        %v2632 = vmul.f32 %v2562, %v2629
        %v2633 = vmul.f32 %v2563, %v2629
        %v2634 = vmul.f32 %v2564, %v2629
        %v2635 = vmul.f32 %v2565, %v2629
        %v2636 = vmul.f32 %v2566, %v2629
        %v2637 = vmul.f32 %v2567, %v2629
        %v2638 = vmul.f32 %v2568, %v2629
        %v2639 = vmul.f32 %v2569, %v2629
        %v2640 = vmul.f32 %v2570, %v2629
        %v2641 = vmul.f32 %v2571, %v2629
        %v2642 = vmul.f32 %v2572, %v2629
        %v2643 = vmul.f32 %v2573, %v2629
        %v2644 = vmul.f32 %v2574, %v2629
        %v2645 = vmul.f32 %v2575, %v2629
        %v2646 = vmul.f32 %v2576, %v2629
        %v2647 = vmul.f32 %v2577, %v2629
        %v2648 = vmul.f32 %v2578, %v2629
        %v2649 = vmul.f32 %v2579, %v2629
        %v2650 = vmul.f32 %v2580, %v2629
        %v2651 = vmul.f32 %v2581, %v2629
        %v2652 = vmul.f32 %v2582, %v2629
        %v2653 = vmul.f32 %v2583, %v2629
        %v2654 = vmul.f32 %v2584, %v2629
        %v2655 = vmul.f32 %v2585, %v2629
        %v2656 = vmul.f32 %v2586, %v2629
        %v2657 = vmul.f32 %v2587, %v2629
        %v2658 = vmul.f32 %v2588, %v2629
        %v2659 = vmul.f32 %v2589, %v2629
        %v2660 = vmul.f32 %v2590, %v2629
        %v2661 = vmul.f32 %v2591, %v2629
        %v2662 = vmul.f32 %v2592, %v2629
        %v2663 = vmul.f32 %v2593, %v2629
        %v2664 = vmul.f32 %v2594, %v2629
        %v2665 = vmul.f32 %v2595, %v2629
        %v2666 = vmul.f32 %v2596, %v2629
        %v2667 = vmul.f32 %v2597, %v2629
        %v2668 = vmul.f32 %v2598, %v2629
        %v2669 = vmul.f32 %v2599, %v2629
        %v2670 = vmul.f32 %v2600, %v2629
        %v2671 = vmul.f32 %v2601, %v2629
        %v2672 = vmul.f32 %v2602, %v2629
        %v2673 = vmul.f32 %v2603, %v2629
        %v2674 = vmul.f32 %v2604, %v2629
        %v2675 = vmul.f32 %v2605, %v2629
        %v2676 = vmul.f32 %v2606, %v2629
        %v2677 = vmul.f32 %v2607, %v2629
        %v2678 = vmul.f32 %v2608, %v2629
        %v2679 = vmul.f32 %v2609, %v2629
        %v2680 = vmul.f32 %v2610, %v2629
        %v2681 = vmul.f32 %v2611, %v2629
        %v2682 = vmul.f32 %v2612, %v2629
        %v2683 = vmul.f32 %v2613, %v2629
        %v2684 = vmul.f32 %v2614, %v2629
        %v2685 = vmul.f32 %v2615, %v2629
        %v2686 = vmul.f32 %v2616, %v2629
        %v2687 = vmul.f32 %v2617, %v2629
        %v2688 = vmul.f32 %v2618, %v2629
        %v2689 = vmul.f32 %v2619, %v2629
        %v2690 = vmul.f32 %v2620, %v2629
        %v2691 = vmul.f32 %v2621, %v2629
        %v2692 = vmul.f32 %v2622, %v2629
        %v2693 = vmul.f32 %v2623, %v2629
        %v2694 = vmul.f32 %v2624, %v2629
        %v2696 = vlaneseq
        %v2697 = vshrl.u32 %v2696, 7
        %v2698 = vsub.s32 0, %v2697
        %v2699 = vrot.slane %v2558, %v2698
        %v2701 = vadd.f32 %v2631, %v2699
        %v2702 = vadd.f32 %v2632, %v2699
        %v2703 = vadd.f32 %v2633, %v2699
        %v2704 = vadd.f32 %v2634, %v2699
        %v2705 = vadd.f32 %v2635, %v2699
        %v2706 = vadd.f32 %v2636, %v2699
        %v2707 = vadd.f32 %v2637, %v2699
        %v2708 = vadd.f32 %v2638, %v2699
        %v2709 = vadd.f32 %v2639, %v2699
        %v2710 = vadd.f32 %v2640, %v2699
        %v2711 = vadd.f32 %v2641, %v2699
        %v2712 = vadd.f32 %v2642, %v2699
        %v2713 = vadd.f32 %v2643, %v2699
        %v2714 = vadd.f32 %v2644, %v2699
        %v2715 = vadd.f32 %v2645, %v2699
        %v2716 = vadd.f32 %v2646, %v2699
        %v2717 = vadd.f32 %v2647, %v2699
        %v2718 = vadd.f32 %v2648, %v2699
        %v2719 = vadd.f32 %v2649, %v2699
        %v2720 = vadd.f32 %v2650, %v2699
        %v2721 = vadd.f32 %v2651, %v2699
        %v2722 = vadd.f32 %v2652, %v2699
        %v2723 = vadd.f32 %v2653, %v2699
        %v2724 = vadd.f32 %v2654, %v2699
        %v2725 = vadd.f32 %v2655, %v2699
        %v2726 = vadd.f32 %v2656, %v2699
        %v2727 = vadd.f32 %v2657, %v2699
        %v2728 = vadd.f32 %v2658, %v2699
        %v2729 = vadd.f32 %v2659, %v2699
        %v2730 = vadd.f32 %v2660, %v2699
        %v2731 = vadd.f32 %v2661, %v2699
        %v2732 = vadd.f32 %v2662, %v2699
        %v2733 = vadd.f32 %v2663, %v2699
        %v2734 = vadd.f32 %v2664, %v2699
        %v2735 = vadd.f32 %v2665, %v2699
        %v2736 = vadd.f32 %v2666, %v2699
        %v2737 = vadd.f32 %v2667, %v2699
        %v2738 = vadd.f32 %v2668, %v2699
        %v2739 = vadd.f32 %v2669, %v2699
        %v2740 = vadd.f32 %v2670, %v2699
        %v2741 = vadd.f32 %v2671, %v2699
        %v2742 = vadd.f32 %v2672, %v2699
        %v2743 = vadd.f32 %v2673, %v2699
        %v2744 = vadd.f32 %v2674, %v2699
        %v2745 = vadd.f32 %v2675, %v2699
        %v2746 = vadd.f32 %v2676, %v2699
        %v2747 = vadd.f32 %v2677, %v2699
        %v2748 = vadd.f32 %v2678, %v2699
        %v2749 = vadd.f32 %v2679, %v2699
        %v2750 = vadd.f32 %v2680, %v2699
        %v2751 = vadd.f32 %v2681, %v2699
        %v2752 = vadd.f32 %v2682, %v2699
        %v2753 = vadd.f32 %v2683, %v2699
        %v2754 = vadd.f32 %v2684, %v2699
        %v2755 = vadd.f32 %v2685, %v2699
        %v2756 = vadd.f32 %v2686, %v2699
        %v2757 = vadd.f32 %v2687, %v2699
        %v2758 = vadd.f32 %v2688, %v2699
        %v2759 = vadd.f32 %v2689, %v2699
        %v2760 = vadd.f32 %v2690, %v2699
        %v2761 = vadd.f32 %v2691, %v2699
        %v2762 = vadd.f32 %v2692, %v2699
        %v2763 = vadd.f32 %v2693, %v2699
        %v2764 = vadd.f32 %v2694, %v2699
        %vm2765 = vcmask 64512
        %2766 = vst.msk [vmem:[%s319] sm:$0xff] %vm2765, %v2701
        %2767 = vst.msk [vmem:[%s319 + $0x8] sm:$0xff] %vm2765, %v2702
        %2768 = vst.msk [vmem:[%s319 + $0x10] sm:$0xff] %vm2765, %v2703
        %2769 = vst.msk [vmem:[%s319 + $0x18] sm:$0xff] %vm2765, %v2704
        %2770 = vst.msk [vmem:[%s319 + $0x20] sm:$0xff] %vm2765, %v2705
        %2771 = vst.msk [vmem:[%s319 + $0x28] sm:$0xff] %vm2765, %v2706
        %2772 = vst.msk [vmem:[%s319 + $0x30] sm:$0xff] %vm2765, %v2707
        %2773 = vst.msk [vmem:[%s319 + $0x38] sm:$0xff] %vm2765, %v2708
        %2774 = vst.msk [vmem:[%s319 + $0x40] sm:$0xff] %vm2765, %v2709
        %2775 = vst.msk [vmem:[%s319 + $0x48] sm:$0xff] %vm2765, %v2710
        %2776 = vst.msk [vmem:[%s319 + $0x50] sm:$0xff] %vm2765, %v2711
        %2777 = vst.msk [vmem:[%s319 + $0x58] sm:$0xff] %vm2765, %v2712
        %2778 = vst.msk [vmem:[%s319 + $0x60] sm:$0xff] %vm2765, %v2713
        %2779 = vst.msk [vmem:[%s319 + $0x68] sm:$0xff] %vm2765, %v2714
        %2780 = vst.msk [vmem:[%s319 + $0x70] sm:$0xff] %vm2765, %v2715
        %2781 = vst.msk [vmem:[%s319 + $0x78] sm:$0xff] %vm2765, %v2716
        %2782 = vst.msk [vmem:[%s319 + $0x80] sm:$0xff] %vm2765, %v2717
        %2783 = vst.msk [vmem:[%s319 + $0x88] sm:$0xff] %vm2765, %v2718
        %2784 = vst.msk [vmem:[%s319 + $0x90] sm:$0xff] %vm2765, %v2719
        %2785 = vst.msk [vmem:[%s319 + $0x98] sm:$0xff] %vm2765, %v2720
        %2786 = vst.msk [vmem:[%s319 + $0xa0] sm:$0xff] %vm2765, %v2721
        %2787 = vst.msk [vmem:[%s319 + $0xa8] sm:$0xff] %vm2765, %v2722
        %2788 = vst.msk [vmem:[%s319 + $0xb0] sm:$0xff] %vm2765, %v2723
        %2789 = vst.msk [vmem:[%s319 + $0xb8] sm:$0xff] %vm2765, %v2724
        %2790 = vst.msk [vmem:[%s319 + $0xc0] sm:$0xff] %vm2765, %v2725
        %2791 = vst.msk [vmem:[%s319 + $0xc8] sm:$0xff] %vm2765, %v2726
        %2792 = vst.msk [vmem:[%s319 + $0xd0] sm:$0xff] %vm2765, %v2727
        %2793 = vst.msk [vmem:[%s319 + $0xd8] sm:$0xff] %vm2765, %v2728
        %2794 = vst.msk [vmem:[%s319 + $0xe0] sm:$0xff] %vm2765, %v2729
        %2795 = vst.msk [vmem:[%s319 + $0xe8] sm:$0xff] %vm2765, %v2730
        %2796 = vst.msk [vmem:[%s319 + $0xf0] sm:$0xff] %vm2765, %v2731
        %2797 = vst.msk [vmem:[%s319 + $0xf8] sm:$0xff] %vm2765, %v2732
        %2798 = vst.msk [vmem:[%s319 + $0x100] sm:$0xff] %vm2765, %v2733
        %2799 = vst.msk [vmem:[%s319 + $0x108] sm:$0xff] %vm2765, %v2734
        %2800 = vst.msk [vmem:[%s319 + $0x110] sm:$0xff] %vm2765, %v2735
        %2801 = vst.msk [vmem:[%s319 + $0x118] sm:$0xff] %vm2765, %v2736
        %2802 = vst.msk [vmem:[%s319 + $0x120] sm:$0xff] %vm2765, %v2737
        %2803 = vst.msk [vmem:[%s319 + $0x128] sm:$0xff] %vm2765, %v2738
        %2804 = vst.msk [vmem:[%s319 + $0x130] sm:$0xff] %vm2765, %v2739
        %2805 = vst.msk [vmem:[%s319 + $0x138] sm:$0xff] %vm2765, %v2740
        %2806 = vst.msk [vmem:[%s319 + $0x140] sm:$0xff] %vm2765, %v2741
        %2807 = vst.msk [vmem:[%s319 + $0x148] sm:$0xff] %vm2765, %v2742
        %2808 = vst.msk [vmem:[%s319 + $0x150] sm:$0xff] %vm2765, %v2743
        %2809 = vst.msk [vmem:[%s319 + $0x158] sm:$0xff] %vm2765, %v2744
        %2810 = vst.msk [vmem:[%s319 + $0x160] sm:$0xff] %vm2765, %v2745
        %2811 = vst.msk [vmem:[%s319 + $0x168] sm:$0xff] %vm2765, %v2746
        %2812 = vst.msk [vmem:[%s319 + $0x170] sm:$0xff] %vm2765, %v2747
        %2813 = vst.msk [vmem:[%s319 + $0x178] sm:$0xff] %vm2765, %v2748
        %2814 = vst.msk [vmem:[%s319 + $0x180] sm:$0xff] %vm2765, %v2749
        %2815 = vst.msk [vmem:[%s319 + $0x188] sm:$0xff] %vm2765, %v2750
        %2816 = vst.msk [vmem:[%s319 + $0x190] sm:$0xff] %vm2765, %v2751
        %2817 = vst.msk [vmem:[%s319 + $0x198] sm:$0xff] %vm2765, %v2752
        %2818 = vst.msk [vmem:[%s319 + $0x1a0] sm:$0xff] %vm2765, %v2753
        %2819 = vst.msk [vmem:[%s319 + $0x1a8] sm:$0xff] %vm2765, %v2754
        %2820 = vst.msk [vmem:[%s319 + $0x1b0] sm:$0xff] %vm2765, %v2755
        %2821 = vst.msk [vmem:[%s319 + $0x1b8] sm:$0xff] %vm2765, %v2756
        %2822 = vst.msk [vmem:[%s319 + $0x1c0] sm:$0xff] %vm2765, %v2757
        %2823 = vst.msk [vmem:[%s319 + $0x1c8] sm:$0xff] %vm2765, %v2758
        %2824 = vst.msk [vmem:[%s319 + $0x1d0] sm:$0xff] %vm2765, %v2759
        %2825 = vst.msk [vmem:[%s319 + $0x1d8] sm:$0xff] %vm2765, %v2760
        %2826 = vst.msk [vmem:[%s319 + $0x1e0] sm:$0xff] %vm2765, %v2761
        %2827 = vst.msk [vmem:[%s319 + $0x1e8] sm:$0xff] %vm2765, %v2762
        %2828 = vst.msk [vmem:[%s319 + $0x1f0] sm:$0xff] %vm2765, %v2763
        %2829 = vst.msk [vmem:[%s319 + $0x1f8] sm:$0xff] %vm2765, %v2764
      $region60: #{tpu_custom_call.1} parent=43 // pred_fallthru
        _
      %s2830 = smul.u32 %s22, %s21
      %s2831 = smul.u32 16, %s2830
      %p2832 = scmp.lt.s32.totalorder %s2831, 15
      %s2833 = scalar_select %p2832, %s2831, 15
      %s2834 = smul.addr %s2833, 8
      %s2835 = scalar_lea.vmem %s6, %s2834
      // Predicated region
      $region61: #{tpu_custom_call.1} parent=43 // pred_check
        %p2836 = pneg %p193
      $region62: #{tpu_custom_call.1} parent=43 // pred_check_branch
        %2838 = sbr.rel (%p2836) target = $region64
      $region63: #{tpu_custom_call.1} parent=43 // pred_region
        %s2839 = smul.u32 %s22, %s21
        %s2840 = smul.u32 16, %s2839
      $region64: #{tpu_custom_call.1} parent=43 // pred_fallthru
        _
    $region44: #{tpu_custom_call.1} parent=5 // pred_fallthru
      _
    %p2841 = scmp.le.s32.totalorder 2, %s12
    // Predicated region
    $region65: #{tpu_custom_call.1} parent=5 // pred_check
      %p2842 = pneg %p2841
    $region66: #{tpu_custom_call.1} parent=5 // pred_check_branch
      %2844 = sbr.rel (%p2842) target = $region68
    $region67: #{tpu_custom_call.1} parent=5 // pred_region
      %s2845 = ssub.s32 %s12, 2
      // Predicated region
      $region69: #{tpu_custom_call.1} parent=67 // pred_check
        %p2846 = pneg %p199
      $region70: #{tpu_custom_call.1} parent=67 // pred_check_branch
        %2848 = sbr.rel (%p2846) target = $region72
      $region71: #{tpu_custom_call.1} parent=67 // pred_region
        %s2849 = smul.u32 %s24, %s23
        %s2850 = smul.u32 16, %s2849
        %p2851 = scmp.lt.s32.totalorder %s2850, 15
        %s2852 = scalar_select %p2851, %s2850, 15
        %s2853 = smul.addr %s2852, 8
        %s2854 = scalar_lea.vmem %s6, %s2853
      $region72: #{tpu_custom_call.1} parent=67 // pred_fallthru
        _
    $region68: #{tpu_custom_call.1} parent=5 // pred_fallthru
      _
  $region6: #{tpu_custom_call.1} parent=0 // loop_footer
    %s16 = sadd.s32 1, %s12
  $region7: #{tpu_custom_call.1} parent=0 // loop_footer_branch
    %11 = sbr.rel target = $region3
  $region8: #{tpu_custom_call.1} parent=0 // loop_exit
    _

</llo_original>
